<compile_context>
chip_gen: v7x
topology: tpu7x:2x2x1
jax: 0.10.0
libtpu: 0.0.40
codegen_flags: <defaults>
</compile_context>

<pallas_src>
import jax
import jax.numpy as jnp
import numpy as np
from jax import lax
from jax.experimental import pallas as pl
from jax.experimental.pallas import tpu as pltpu

HIDDEN_SIZE = 32   # hidden_size (== embedding dim)
OUTPUT_SIZE = 64   # target vocab size
MAX_LENGTH = 10    # max source length (attention span)

H, V, L = HIDDEN_SIZE, OUTPUT_SIZE, MAX_LENGTH
LANES = 128        # lane padding for attention span and vocab
ENC_ROWS = 16      # sublane-aligned encoder rows (>= L)
ATTN_LANE = 96     # lane offset where attention columns live in packed RHS blocks
NEG_INF = -1e30

# ---- packed parameter buffer row layout (f32, 128 lanes wide) ----
R_EMB = 0                    # (V, :H)   embedding table
R_EPK = R_EMB + V            # (H, 128)  [0:H)=W_combine_emb, [96:96+L)=W_attn_emb
R_HPK = R_EPK + H            # (H, 128)  [0:3H)=W_hh (r|z|n), [96:96+L)=W_attn_hidden
R_CMBA = R_HPK + H           # (H, :H)   W_combine_applied
R_WIH = R_CMBA + H           # (H, :3H)  W_ih (r|z|n)
R_OUTW = R_WIH + H           # (H, :V)   output head
R_ATT_B = R_OUTW + H         # (1, 128)  attn bias at [96:96+L), pad = -1e30
R_CMB_B = R_ATT_B + 1        # (1, :H)
R_BIH = R_CMB_B + 1          # (1, :3H)
R_BHH = R_BIH + 1            # (1, :3H)
R_OUT_B = R_BHH + 1          # (1, 128)  out bias at [0:V), pad = -1e30
N_ROWS = ((R_OUT_B + 1 + 7) // 8) * 8   # 232 rows, sublane-aligned


def attn_decoder_kernel(tok_ref, h0_ref, enc_ref, p_ref, logp_ref, attn_ref, hout_ref):
    """tok_ref: SMEM (T,) i32; h0_ref: (1,H); enc_ref: (ENC_ROWS,H) zero-padded;
    p_ref: (N_ROWS,128) packed params; outputs: logp (T,128), attn (T,128), hout (1,H)."""
    f32, bf16 = jnp.float32, jnp.bfloat16
    num_steps = tok_ref.shape[0]

    # Loop-invariant weights: load once, cast to bf16 -> single native MXU pass per dot.
    epk = p_ref[R_EPK:R_EPK + H, :].astype(bf16)               # (H, 128)
    hpk = p_ref[R_HPK:R_HPK + H, :].astype(bf16)               # (H, 128)
    wih = p_ref[R_WIH:R_WIH + H, 0:3 * H].astype(bf16)         # (H, 3H)
    outw = p_ref[R_OUTW:R_OUTW + H, :].astype(bf16)            # (H, 128)
    att_b = p_ref[R_ATT_B:R_ATT_B + 1, :]                      # (1, 128), pad -1e30
    cmb_b = p_ref[R_CMB_B:R_CMB_B + 1, 0:H]                    # (1, H)
    b_ih = p_ref[R_BIH:R_BIH + 1, 0:3 * H]                     # (1, 3H)
    b_hh = p_ref[R_BHH:R_BHH + 1, 0:3 * H]                     # (1, 3H)
    out_b = p_ref[R_OUT_B:R_OUT_B + 1, :]                      # (1, 128), pad -1e30

    # Fold encoder_outputs @ W_combine_applied once per call (loop-invariant):
    #   attn_applied @ Wc_a == attn_w @ (enc @ Wc_a)
    cmba = p_ref[R_CMBA:R_CMBA + H, 0:H].astype(bf16)          # (H, H)
    m_enc = jnp.dot(enc_ref[...].astype(bf16), cmba,
                    preferred_element_type=f32).astype(bf16)   # (ENC_ROWS, H)

    def step(t, h):
        # Embedding lookup (nn.Dropout is identity in eval mode).  Token ids are
        # clamped: PyTorch would raise on out-of-range ids, here they read a valid row.
        idx = jnp.clip(tok_ref[t], 0, V - 1)
        emb = p_ref[pl.ds(R_EMB + idx, 1), :][:, 0:H].astype(bf16)   # (1, H)
        h_b = h.astype(bf16)

        # Two packed dots produce: combine-emb half (lanes [0,H)), attn-emb half
        # (lanes [96,96+L)), GRU hh gates (lanes [0,3H)), attn-hidden half (lanes [96,96+L)).
        ge = jnp.dot(emb, epk, preferred_element_type=f32)      # (1, 128)
        gh = jnp.dot(h_b, hpk, preferred_element_type=f32)      # (1, 128)

        # attn_weights = softmax(attn(cat(embedded, hidden))): real logits sit at lanes
        # [ATTN_LANE, ATTN_LANE+L); every other lane is driven to -1e30 by the bias pad,
        # so exp() is exactly 0 there and the 128-lane softmax is exact.
        a_logits = ge + gh + att_b
        m1 = jnp.max(a_logits, axis=-1, keepdims=True)
        e = jnp.exp(a_logits - m1)
        attn_w = e * pl.reciprocal(jnp.sum(e, axis=-1, keepdims=True), approx=False)

        # output = relu(attn_combine(cat(embedded, attn_applied)))
        capp = jnp.dot(attn_w[:, ATTN_LANE:ATTN_LANE + ENC_ROWS].astype(bf16),
                       m_enc, preferred_element_type=f32)       # (1, H)
        x = jnp.maximum(ge[:, 0:H] + capp + cmb_b, 0.0)         # (1, H)

        # One GRU step (PyTorch gate order r | z | n).
        gi = jnp.dot(x.astype(bf16), wih, preferred_element_type=f32) + b_ih
        ghh = gh[:, 0:3 * H] + b_hh
        r = jax.nn.sigmoid(gi[:, 0:H] + ghh[:, 0:H])
        z = jax.nn.sigmoid(gi[:, H:2 * H] + ghh[:, H:2 * H])
        n = jnp.tanh(gi[:, 2 * H:3 * H] + r * ghh[:, 2 * H:3 * H])
        h_new = (1.0 - z) * n + z * h                            # (1, H) f32

        # output = log_softmax(out(h_new)); vocab lane-padded to 128 (pad bias -1e30).
        logits = jnp.dot(h_new.astype(bf16), outw, preferred_element_type=f32) + out_b
        m2 = jnp.max(logits, axis=-1, keepdims=True)
        sh = logits - m2
        logp = sh - jnp.log(jnp.sum(jnp.exp(sh), axis=-1, keepdims=True))

        # Lane-dense row stores (no concatenates).
        logp_ref[pl.ds(t, 1), :] = logp
        attn_ref[pl.ds(t, 1), :] = attn_w
        return h_new

    h_fin = lax.fori_loop(0, num_steps, step, h0_ref[...], unroll=min(num_steps, 8))
    hout_ref[...] = h_fin


def attn_decoder_decode(packed_params, tokens, hidden, encoder_outputs):
    """Teacher-forced T-step decode (each step == the PyTorch module forward).
    tokens: [T] int; hidden: [1,1,H]; encoder_outputs: [L,H].
    Returns (log_probs [T,V], final hidden [1,1,H], attn_weights [T,L])."""
    tok = jnp.reshape(tokens, (-1,)).astype(jnp.int32)
    T = int(tok.shape[0])
    h2d = jnp.reshape(hidden, (1, H)).astype(jnp.float32)
    enc_pad = jnp.zeros((ENC_ROWS, H), jnp.float32).at[:L, :].set(
        encoder_outputs.astype(jnp.float32))

    flops = int(T * 2 * (2 * H * LANES + ENC_ROWS * H + 3 * H * H + H * LANES)
                + 2 * ENC_ROWS * H * H)
    logp_pad, attn_pad, h_out = pl.pallas_call(
        attn_decoder_kernel,
        out_shape=(
            jax.ShapeDtypeStruct((T, LANES), jnp.float32),
            jax.ShapeDtypeStruct((T, LANES), jnp.float32),
            jax.ShapeDtypeStruct((1, H), jnp.float32),
        ),
        in_specs=[
            pl.BlockSpec(memory_space=pltpu.MemorySpace.SMEM),   # token ids
            pl.BlockSpec(memory_space=pltpu.MemorySpace.VMEM),   # initial hidden
            pl.BlockSpec(memory_space=pltpu.MemorySpace.VMEM),   # encoder outputs (padded)
            pl.BlockSpec(memory_space=pltpu.MemorySpace.VMEM),   # packed params (one DMA)
        ],
        out_specs=(
            pl.BlockSpec(memory_space=pltpu.MemorySpace.VMEM),
            pl.BlockSpec(memory_space=pltpu.MemorySpace.VMEM),
            pl.BlockSpec(memory_space=pltpu.MemorySpace.VMEM),
        ),
        cost_estimate=pl.CostEstimate(
            flops=flops,
            transcendentals=int(T * 400),
            bytes_accessed=int(N_ROWS * LANES * 4 + ENC_ROWS * H * 4
                               + T * (2 * LANES * 4 + 4) + 2 * H * 4),
        ),
    )(tok, h2d, enc_pad, packed_params)

    logp = logp_pad[:, 0:V]
    attn_w = attn_pad[:, ATTN_LANE:ATTN_LANE + L]
    return logp, h_out.reshape(1, 1, H), attn_w


def attn_decoder_forward(packed_params, input_idx, hidden, encoder_outputs):
    """Single decode step with the module's exact signature/shapes."""
    tok = jnp.reshape(input_idx, (-1,)).astype(jnp.int32)[:1]
    return attn_decoder_decode(packed_params, tok, hidden, encoder_outputs)


def make_params(key):
    """Deterministic synthetic parameters in PyTorch layouts, packed into one buffer."""
    ks = jax.random.split(key, 11)
    s = 0.1
    emb = s * jax.random.normal(ks[0], (V, H), jnp.float32)
    attn_wt = s * jax.random.normal(ks[1], (L, 2 * H), jnp.float32)   # torch [out, in]
    attn_b = s * jax.random.normal(ks[2], (L,), jnp.float32)
    comb_wt = s * jax.random.normal(ks[3], (H, 2 * H), jnp.float32)
    comb_b = s * jax.random.normal(ks[4], (H,), jnp.float32)
    w_ih_t = s * jax.random.normal(ks[5], (3 * H, H), jnp.float32)    # weight_ih_l0 (r|z|n)
    b_ih_t = s * jax.random.normal(ks[6], (3 * H,), jnp.float32)
    w_hh_t = s * jax.random.normal(ks[7], (3 * H, H), jnp.float32)
    b_hh_t = s * jax.random.normal(ks[8], (3 * H,), jnp.float32)
    out_wt = s * jax.random.normal(ks[9], (V, H), jnp.float32)
    out_b = s * jax.random.normal(ks[10], (V,), jnp.float32)

    # x @ W layouts (torch computes x @ W.T), float64 for the reference.
    attn_w = np.asarray(attn_wt, np.float64).T    # (2H, L)
    comb_w = np.asarray(comb_wt, np.float64).T    # (2H, H)
    w_ih = np.asarray(w_ih_t, np.float64).T       # (H, 3H), columns [r | z | n]
    w_hh = np.asarray(w_hh_t, np.float64).T       # (H, 3H)
    out_w = np.asarray(out_wt, np.float64).T      # (H, V)

    P = np.zeros((N_ROWS, LANES), np.float32)
    P[R_EMB:R_EMB + V, 0:H] = np.asarray(emb)
    P[R_EPK:R_EPK + H, 0:H] = comb_w[0:H]                            # combine, emb half
    P[R_EPK:R_EPK + H, ATTN_LANE:ATTN_LANE + L] = attn_w[0:H]        # attn, emb half
    P[R_HPK:R_HPK + H, 0:3 * H] = w_hh
    P[R_HPK:R_HPK + H, ATTN_LANE:ATTN_LANE + L] = attn_w[H:2 * H]    # attn, hidden half
    P[R_CMBA:R_CMBA + H, 0:H] = comb_w[H:2 * H]                      # combine, applied half
    P[R_WIH:R_WIH + H, 0:3 * H] = w_ih
    P[R_OUTW:R_OUTW + H, 0:V] = out_w
    P[R_ATT_B, :] = NEG_INF
    P[R_ATT_B, ATTN_LANE:ATTN_LANE + L] = np.asarray(attn_b)
    P[R_CMB_B, 0:H] = np.asarray(comb_b)
    P[R_BIH, 0:3 * H] = np.asarray(b_ih_t)
    P[R_BHH, 0:3 * H] = np.asarray(b_hh_t)
    P[R_OUT_B, :] = NEG_INF
    P[R_OUT_B, 0:V] = np.asarray(out_b)

    ref = {
        "embedding": np.asarray(emb, np.float64),
        "attn_w": attn_w, "attn_b": np.asarray(attn_b, np.float64).reshape(1, L),
        "comb_w": comb_w, "comb_b": np.asarray(comb_b, np.float64).reshape(1, H),
        "w_ih": w_ih, "b_ih": np.asarray(b_ih_t, np.float64).reshape(1, 3 * H),
        "w_hh": w_hh, "b_hh": np.asarray(b_hh_t, np.float64).reshape(1, 3 * H),
        "out_w": out_w, "out_b": np.asarray(out_b, np.float64).reshape(1, V),
    }
    return jnp.asarray(P), ref


def _sigmoid(x):
    return 1.0 / (1.0 + np.exp(-x))


def reference_decode(ref, tokens, hidden, encoder_outputs):
    """Pure numpy float64 reference mirroring the PyTorch forward, one step per token."""
    h = np.asarray(hidden, np.float64).reshape(1, H)
    enc = np.asarray(encoder_outputs, np.float64)
    logps, attns = [], []
    for t in np.asarray(tokens).reshape(-1):
        emb = ref["embedding"][int(t)].reshape(1, H)
        a_logits = np.concatenate([emb, h], axis=1) @ ref["attn_w"] + ref["attn_b"]
        a = np.exp(a_logits - a_logits.max())
        attn_w = a / a.sum()
        attn_applied = attn_w @ enc
        comb = np.concatenate([emb, attn_applied], axis=1) @ ref["comb_w"] + ref["comb_b"]
        x = np.maximum(comb, 0.0)
        gi = x @ ref["w_ih"] + ref["b_ih"]
        gh = h @ ref["w_hh"] + ref["b_hh"]
        r = _sigmoid(gi[:, 0:H] + gh[:, 0:H])
        z = _sigmoid(gi[:, H:2 * H] + gh[:, H:2 * H])
        n = np.tanh(gi[:, 2 * H:] + r * gh[:, 2 * H:])
        h = (1.0 - z) * n + z * h
        logits = h @ ref["out_w"] + ref["out_b"]
        m = logits.max()
        logp = (logits - m) - np.log(np.exp(logits - m).sum())
        logps.append(logp)
        attns.append(attn_w)
    return np.concatenate(logps, 0), h.reshape(1, 1, H), np.concatenate(attns, 0)


if __name__ == "__main__":
    key = jax.random.PRNGKey(0)
    pkey, ekey, hkey, tkey = jax.random.split(key, 4)
    packed_params, ref_params = make_params(pkey)

    T = 8
    tokens = jax.random.randint(tkey, (T,), 0, V, dtype=jnp.int32)
    hidden0 = 0.1 * jax.random.normal(hkey, (1, 1, H), jnp.float32)        # [1, 1, H]
    encoder_outputs = 0.1 * jax.random.normal(ekey, (L, H), jnp.float32)   # [L, H]

    # Multi-step decode: one pallas_call, weights resident, hidden carried in-kernel.
    logp, h_fin, attn_w = attn_decoder_decode(packed_params, tokens, hidden0,
                                              encoder_outputs)
    jax.block_until_ready((logp, h_fin, attn_w))

    ref_logp, ref_h, ref_attn = reference_decode(ref_params, tokens, hidden0,
                                                 encoder_outputs)

    assert logp.shape == (T, V) and h_fin.shape == (1, 1, H) and attn_w.shape == (T, L)
    # Tolerances reflect single-pass bf16 MXU math (per perf feedback) vs a float64 ref.
    assert np.allclose(np.asarray(logp), ref_logp, atol=1e-2), "log_softmax mismatch"
    assert np.allclose(np.asarray(h_fin), ref_h, atol=1e-2), "hidden mismatch"
    assert np.allclose(np.asarray(attn_w), ref_attn, atol=5e-3), "attn mismatch"
    # Exact (non-approx) softmax normalization -> rows sum to 1 at f32 accuracy.
    assert np.allclose(np.asarray(attn_w).sum(axis=1), 1.0, atol=1e-4)

    # Single-step call with the module's exact signature ([1,1] input, [1,1,H] hidden).
    input_idx = jnp.array([[5]], dtype=jnp.int32)
    logp1, h1, attn1 = attn_decoder_forward(packed_params, input_idx, hidden0,
                                            encoder_outputs)
    jax.block_until_ready((logp1, h1, attn1))
    r_logp1, r_h1, r_attn1 = reference_decode(ref_params, np.array([5]), hidden0,
                                              encoder_outputs)
    assert logp1.shape == (1, V) and h1.shape == (1, 1, H) and attn1.shape == (1, L)
    assert np.allclose(np.asarray(logp1), r_logp1, atol=1e-2)
    assert np.allclose(np.asarray(h1), r_h1, atol=1e-2)
    assert np.allclose(np.asarray(attn1), r_attn1, atol=5e-3)

    print("KERNEL_OK")
</pallas_src>

<mosaic_0001>
module attributes {stable_mosaic.version = 11 : i64} {
  func.func @attn_decoder_kernel(%arg0: memref<8xi32, #tpu.memory_space<smem>>, %arg1: memref<1x32xf32, #tpu.memory_space<vmem>>, %arg2: memref<16x32xf32, #tpu.memory_space<vmem>>, %arg3: memref<232x128xf32, #tpu.memory_space<vmem>>, %arg4: memref<8x128xf32, #tpu.memory_space<vmem>>, %arg5: memref<8x128xf32, #tpu.memory_space<vmem>>, %arg6: memref<1x32xf32, #tpu.memory_space<vmem>>) attributes {dimension_semantics = [], scalar_prefetch = 0 : i64, scratch_operands = 0 : i64, tpu.core_type = #tpu.core_type<tc>} {
    %c64 = arith.constant 64 : index
    %c0 = arith.constant 0 : index
    %0 = vector.load %arg3[%c64, %c0] : memref<232x128xf32, #tpu.memory_space<vmem>>, vector<32x128xf32>
    %1 = arith.truncf %0 : vector<32x128xf32> to vector<32x128xbf16>
    %c96 = arith.constant 96 : index
    %c0_0 = arith.constant 0 : index
    %2 = vector.load %arg3[%c96, %c0_0] : memref<232x128xf32, #tpu.memory_space<vmem>>, vector<32x128xf32>
    %3 = arith.truncf %2 : vector<32x128xf32> to vector<32x128xbf16>
    %c160 = arith.constant 160 : index
    %c0_1 = arith.constant 0 : index
    %4 = vector.load %arg3[%c160, %c0_1] : memref<232x128xf32, #tpu.memory_space<vmem>>, vector<32x96xf32>
    %5 = arith.truncf %4 : vector<32x96xf32> to vector<32x96xbf16>
    %c192 = arith.constant 192 : index
    %c0_2 = arith.constant 0 : index
    %6 = vector.load %arg3[%c192, %c0_2] : memref<232x128xf32, #tpu.memory_space<vmem>>, vector<32x128xf32>
    %7 = arith.truncf %6 : vector<32x128xf32> to vector<32x128xbf16>
    %c224 = arith.constant 224 : index
    %c0_3 = arith.constant 0 : index
    %8 = vector.load %arg3[%c224, %c0_3] : memref<232x128xf32, #tpu.memory_space<vmem>>, vector<1x128xf32>
    %c225 = arith.constant 225 : index
    %c0_4 = arith.constant 0 : index
    %9 = vector.load %arg3[%c225, %c0_4] : memref<232x128xf32, #tpu.memory_space<vmem>>, vector<1x32xf32>
    %c226 = arith.constant 226 : index
    %c0_5 = arith.constant 0 : index
    %10 = vector.load %arg3[%c226, %c0_5] : memref<232x128xf32, #tpu.memory_space<vmem>>, vector<1x96xf32>
    %c227 = arith.constant 227 : index
    %c0_6 = arith.constant 0 : index
    %11 = vector.load %arg3[%c227, %c0_6] : memref<232x128xf32, #tpu.memory_space<vmem>>, vector<1x96xf32>
    %c228 = arith.constant 228 : index
    %c0_7 = arith.constant 0 : index
    %12 = vector.load %arg3[%c228, %c0_7] : memref<232x128xf32, #tpu.memory_space<vmem>>, vector<1x128xf32>
    %c128 = arith.constant 128 : index
    %c0_8 = arith.constant 0 : index
    %13 = vector.load %arg3[%c128, %c0_8] : memref<232x128xf32, #tpu.memory_space<vmem>>, vector<32x32xf32>
    %14 = arith.truncf %13 : vector<32x32xf32> to vector<32x32xbf16>
    %c0_9 = arith.constant 0 : index
    %c0_10 = arith.constant 0 : index
    %15 = vector.load %arg2[%c0_9, %c0_10] : memref<16x32xf32, #tpu.memory_space<vmem>>, vector<16x32xf32>
    %16 = arith.truncf %15 : vector<16x32xf32> to vector<16x32xbf16>
    %cst = arith.constant dense<0.000000e+00> : vector<16x32xf32>
    %17 = tpu.matmul %16, %14, %cst {dimension_numbers = #tpu.dot_dimension_numbers<[1], [0], [0], [1], [0, 0, 1, 1], [], []>} : vector<16x32xbf16>, vector<32x32xbf16>, vector<16x32xf32> -> vector<16x32xf32>
    %18 = arith.truncf %17 : vector<16x32xf32> to vector<16x32xbf16>
    %c0_11 = arith.constant 0 : index
    %c0_12 = arith.constant 0 : index
    %19 = vector.load %arg1[%c0_11, %c0_12] : memref<1x32xf32, #tpu.memory_space<vmem>>, vector<1x32xf32>
    %c0_i32 = arith.constant 0 : i32
    %20 = arith.index_cast %c0_i32 : i32 to index
    %21 = memref.load %arg0[%20] : memref<8xi32, #tpu.memory_space<smem>>
    %c0_i32_13 = arith.constant 0 : i32
    %c63_i32 = arith.constant 63 : i32
    %22 = arith.maxsi %c0_i32_13, %21 : i32
    %23 = arith.minsi %c63_i32, %22 : i32
    %c0_i32_14 = arith.constant 0 : i32
    %24 = arith.addi %c0_i32_14, %23 : i32
    %25 = arith.index_cast %24 : i32 to index
    %c0_15 = arith.constant 0 : index
    %26 = vector.load %arg3[%25, %c0_15] : memref<232x128xf32, #tpu.memory_space<vmem>>, vector<1x128xf32>
    %27 = vector.extract_strided_slice %26 {offsets = [0, 0], sizes = [1, 32], strides = [1, 1]} : vector<1x128xf32> to vector<1x32xf32>
    %28 = arith.truncf %27 : vector<1x32xf32> to vector<1x32xbf16>
    %29 = arith.truncf %19 : vector<1x32xf32> to vector<1x32xbf16>
    %cst_16 = arith.constant dense<0.000000e+00> : vector<1x128xf32>
    %30 = tpu.matmul %28, %1, %cst_16 {dimension_numbers = #tpu.dot_dimension_numbers<[1], [0], [0], [1], [0, 0, 1, 1], [], []>} : vector<1x32xbf16>, vector<32x128xbf16>, vector<1x128xf32> -> vector<1x128xf32>
    %cst_17 = arith.constant dense<0.000000e+00> : vector<1x128xf32>
    %31 = tpu.matmul %29, %3, %cst_17 {dimension_numbers = #tpu.dot_dimension_numbers<[1], [0], [0], [1], [0, 0, 1, 1], [], []>} : vector<1x32xbf16>, vector<32x128xbf16>, vector<1x128xf32> -> vector<1x128xf32>
    %32 = arith.addf %30, %31 : vector<1x128xf32>
    %33 = arith.addf %32, %8 : vector<1x128xf32>
    %cst_18 = arith.constant dense<0xFF800000> : vector<1xf32>
    %34 = vector.multi_reduction <maximumf>, %33, %cst_18 [1] : vector<1x128xf32> to vector<1xf32>
    %35 = vector.shape_cast %34 : vector<1xf32> to vector<1x1xf32>
    %36 = vector.broadcast %35 : vector<1x1xf32> to vector<1x128xf32>
    %37 = arith.subf %33, %36 : vector<1x128xf32>
    %38 = math.exp %37 : vector<1x128xf32>
    %cst_19 = arith.constant dense<0.000000e+00> : vector<1xf32>
    %39 = vector.multi_reduction <add>, %38, %cst_19 [1] : vector<1x128xf32> to vector<1xf32>
    %40 = vector.shape_cast %39 : vector<1xf32> to vector<1x1xf32>
    %41 = tpu.reciprocal %40 : vector<1x1xf32> -> vector<1x1xf32>
    %42 = vector.broadcast %41 : vector<1x1xf32> to vector<1x128xf32>
    %43 = arith.mulf %38, %42 : vector<1x128xf32>
    %44 = vector.extract_strided_slice %43 {offsets = [0, 96], sizes = [1, 16], strides = [1, 1]} : vector<1x128xf32> to vector<1x16xf32>
    %45 = arith.truncf %44 : vector<1x16xf32> to vector<1x16xbf16>
    %cst_20 = arith.constant dense<0.000000e+00> : vector<1x32xf32>
    %46 = tpu.matmul %45, %18, %cst_20 {dimension_numbers = #tpu.dot_dimension_numbers<[1], [0], [0], [1], [0, 0, 1, 1], [], []>} : vector<1x16xbf16>, vector<16x32xbf16>, vector<1x32xf32> -> vector<1x32xf32>
    %47 = vector.extract_strided_slice %30 {offsets = [0, 0], sizes = [1, 32], strides = [1, 1]} : vector<1x128xf32> to vector<1x32xf32>
    %48 = arith.addf %47, %46 : vector<1x32xf32>
    %49 = arith.addf %48, %9 : vector<1x32xf32>
    %cst_21 = arith.constant 0.000000e+00 : f32
    %50 = vector.broadcast %cst_21 : f32 to vector<1x32xf32>
    %51 = arith.maximumf %49, %50 : vector<1x32xf32>
    %52 = arith.truncf %51 : vector<1x32xf32> to vector<1x32xbf16>
    %cst_22 = arith.constant dense<0.000000e+00> : vector<1x96xf32>
    %53 = tpu.matmul %52, %5, %cst_22 {dimension_numbers = #tpu.dot_dimension_numbers<[1], [0], [0], [1], [0, 0, 1, 1], [], []>} : vector<1x32xbf16>, vector<32x96xbf16>, vector<1x96xf32> -> vector<1x96xf32>
    %54 = arith.addf %53, %10 : vector<1x96xf32>
    %55 = vector.extract_strided_slice %31 {offsets = [0, 0], sizes = [1, 96], strides = [1, 1]} : vector<1x128xf32> to vector<1x96xf32>
    %56 = arith.addf %55, %11 : vector<1x96xf32>
    %57 = vector.extract_strided_slice %54 {offsets = [0, 0], sizes = [1, 32], strides = [1, 1]} : vector<1x96xf32> to vector<1x32xf32>
    %58 = vector.extract_strided_slice %56 {offsets = [0, 0], sizes = [1, 32], strides = [1, 1]} : vector<1x96xf32> to vector<1x32xf32>
    %59 = arith.addf %57, %58 : vector<1x32xf32>
    %60 = arith.negf %59 : vector<1x32xf32>
    %61 = math.exp %60 : vector<1x32xf32>
    %cst_23 = arith.constant 1.000000e+00 : f32
    %62 = vector.broadcast %cst_23 : f32 to vector<1x32xf32>
    %63 = arith.addf %62, %61 : vector<1x32xf32>
    %64 = arith.divf %62, %63 : vector<1x32xf32>
    %65 = vector.extract_strided_slice %54 {offsets = [0, 32], sizes = [1, 32], strides = [1, 1]} : vector<1x96xf32> to vector<1x32xf32>
    %66 = vector.extract_strided_slice %56 {offsets = [0, 32], sizes = [1, 32], strides = [1, 1]} : vector<1x96xf32> to vector<1x32xf32>
    %67 = arith.addf %65, %66 : vector<1x32xf32>
    %68 = arith.negf %67 : vector<1x32xf32>
    %69 = math.exp %68 : vector<1x32xf32>
    %cst_24 = arith.constant 1.000000e+00 : f32
    %70 = vector.broadcast %cst_24 : f32 to vector<1x32xf32>
    %71 = arith.addf %70, %69 : vector<1x32xf32>
    %72 = arith.divf %70, %71 : vector<1x32xf32>
    %73 = vector.extract_strided_slice %54 {offsets = [0, 64], sizes = [1, 32], strides = [1, 1]} : vector<1x96xf32> to vector<1x32xf32>
    %74 = vector.extract_strided_slice %56 {offsets = [0, 64], sizes = [1, 32], strides = [1, 1]} : vector<1x96xf32> to vector<1x32xf32>
    %75 = arith.mulf %64, %74 : vector<1x32xf32>
    %76 = arith.addf %73, %75 : vector<1x32xf32>
    %77 = math.tanh %76 : vector<1x32xf32>
    %cst_25 = arith.constant 1.000000e+00 : f32
    %78 = vector.broadcast %cst_25 : f32 to vector<1x32xf32>
    %79 = arith.subf %78, %72 : vector<1x32xf32>
    %80 = arith.mulf %79, %77 : vector<1x32xf32>
    %81 = arith.mulf %72, %19 : vector<1x32xf32>
    %82 = arith.addf %80, %81 : vector<1x32xf32>
    %83 = arith.truncf %82 : vector<1x32xf32> to vector<1x32xbf16>
    %cst_26 = arith.constant dense<0.000000e+00> : vector<1x128xf32>
    %84 = tpu.matmul %83, %7, %cst_26 {dimension_numbers = #tpu.dot_dimension_numbers<[1], [0], [0], [1], [0, 0, 1, 1], [], []>} : vector<1x32xbf16>, vector<32x128xbf16>, vector<1x128xf32> -> vector<1x128xf32>
    %85 = arith.addf %84, %12 : vector<1x128xf32>
    %cst_27 = arith.constant dense<0xFF800000> : vector<1xf32>
    %86 = vector.multi_reduction <maximumf>, %85, %cst_27 [1] : vector<1x128xf32> to vector<1xf32>
    %87 = vector.shape_cast %86 : vector<1xf32> to vector<1x1xf32>
    %88 = vector.broadcast %87 : vector<1x1xf32> to vector<1x128xf32>
    %89 = arith.subf %85, %88 : vector<1x128xf32>
    %90 = math.exp %89 : vector<1x128xf32>
    %cst_28 = arith.constant dense<0.000000e+00> : vector<1xf32>
    %91 = vector.multi_reduction <add>, %90, %cst_28 [1] : vector<1x128xf32> to vector<1xf32>
    %92 = vector.shape_cast %91 : vector<1xf32> to vector<1x1xf32>
    %93 = math.log %92 : vector<1x1xf32>
    %94 = vector.broadcast %93 : vector<1x1xf32> to vector<1x128xf32>
    %95 = arith.subf %89, %94 : vector<1x128xf32>
    %96 = arith.index_cast %c0_i32 : i32 to index
    %c0_29 = arith.constant 0 : index
    %97 = vector.load %arg4[%96, %c0_29] : memref<8x128xf32, #tpu.memory_space<vmem>>, vector<1x128xf32>
    tpu.vector_store %arg4[%96, %c0_29], %95 {strides = array<i32>} : memref<8x128xf32, #tpu.memory_space<vmem>>, vector<1x128xf32>,
    %98 = arith.index_cast %c0_i32 : i32 to index
    %c0_30 = arith.constant 0 : index
    %99 = vector.load %arg5[%98, %c0_30] : memref<8x128xf32, #tpu.memory_space<vmem>>, vector<1x128xf32>
    tpu.vector_store %arg5[%98, %c0_30], %43 {strides = array<i32>} : memref<8x128xf32, #tpu.memory_space<vmem>>, vector<1x128xf32>,
    %c1_i32 = arith.constant 1 : i32
    %100 = arith.index_cast %c1_i32 : i32 to index
    %101 = memref.load %arg0[%100] : memref<8xi32, #tpu.memory_space<smem>>
    %c0_i32_31 = arith.constant 0 : i32
    %c63_i32_32 = arith.constant 63 : i32
    %102 = arith.maxsi %c0_i32_31, %101 : i32
    %103 = arith.minsi %c63_i32_32, %102 : i32
    %c0_i32_33 = arith.constant 0 : i32
    %104 = arith.addi %c0_i32_33, %103 : i32
    %105 = arith.index_cast %104 : i32 to index
    %c0_34 = arith.constant 0 : index
    %106 = vector.load %arg3[%105, %c0_34] : memref<232x128xf32, #tpu.memory_space<vmem>>, vector<1x128xf32>
    %107 = vector.extract_strided_slice %106 {offsets = [0, 0], sizes = [1, 32], strides = [1, 1]} : vector<1x128xf32> to vector<1x32xf32>
    %108 = arith.truncf %107 : vector<1x32xf32> to vector<1x32xbf16>
    %109 = arith.truncf %82 : vector<1x32xf32> to vector<1x32xbf16>
    %cst_35 = arith.constant dense<0.000000e+00> : vector<1x128xf32>
    %110 = tpu.matmul %108, %1, %cst_35 {dimension_numbers = #tpu.dot_dimension_numbers<[1], [0], [0], [1], [0, 0, 1, 1], [], []>} : vector<1x32xbf16>, vector<32x128xbf16>, vector<1x128xf32> -> vector<1x128xf32>
    %cst_36 = arith.constant dense<0.000000e+00> : vector<1x128xf32>
    %111 = tpu.matmul %109, %3, %cst_36 {dimension_numbers = #tpu.dot_dimension_numbers<[1], [0], [0], [1], [0, 0, 1, 1], [], []>} : vector<1x32xbf16>, vector<32x128xbf16>, vector<1x128xf32> -> vector<1x128xf32>
    %112 = arith.addf %110, %111 : vector<1x128xf32>
    %113 = arith.addf %112, %8 : vector<1x128xf32>
    %cst_37 = arith.constant dense<0xFF800000> : vector<1xf32>
    %114 = vector.multi_reduction <maximumf>, %113, %cst_37 [1] : vector<1x128xf32> to vector<1xf32>
    %115 = vector.shape_cast %114 : vector<1xf32> to vector<1x1xf32>
    %116 = vector.broadcast %115 : vector<1x1xf32> to vector<1x128xf32>
    %117 = arith.subf %113, %116 : vector<1x128xf32>
    %118 = math.exp %117 : vector<1x128xf32>
    %cst_38 = arith.constant dense<0.000000e+00> : vector<1xf32>
    %119 = vector.multi_reduction <add>, %118, %cst_38 [1] : vector<1x128xf32> to vector<1xf32>
    %120 = vector.shape_cast %119 : vector<1xf32> to vector<1x1xf32>
    %121 = tpu.reciprocal %120 : vector<1x1xf32> -> vector<1x1xf32>
    %122 = vector.broadcast %121 : vector<1x1xf32> to vector<1x128xf32>
    %123 = arith.mulf %118, %122 : vector<1x128xf32>
    %124 = vector.extract_strided_slice %123 {offsets = [0, 96], sizes = [1, 16], strides = [1, 1]} : vector<1x128xf32> to vector<1x16xf32>
    %125 = arith.truncf %124 : vector<1x16xf32> to vector<1x16xbf16>
    %cst_39 = arith.constant dense<0.000000e+00> : vector<1x32xf32>
    %126 = tpu.matmul %125, %18, %cst_39 {dimension_numbers = #tpu.dot_dimension_numbers<[1], [0], [0], [1], [0, 0, 1, 1], [], []>} : vector<1x16xbf16>, vector<16x32xbf16>, vector<1x32xf32> -> vector<1x32xf32>
    %127 = vector.extract_strided_slice %110 {offsets = [0, 0], sizes = [1, 32], strides = [1, 1]} : vector<1x128xf32> to vector<1x32xf32>
    %128 = arith.addf %127, %126 : vector<1x32xf32>
    %129 = arith.addf %128, %9 : vector<1x32xf32>
    %cst_40 = arith.constant 0.000000e+00 : f32
    %130 = vector.broadcast %cst_40 : f32 to vector<1x32xf32>
    %131 = arith.maximumf %129, %130 : vector<1x32xf32>
    %132 = arith.truncf %131 : vector<1x32xf32> to vector<1x32xbf16>
    %cst_41 = arith.constant dense<0.000000e+00> : vector<1x96xf32>
    %133 = tpu.matmul %132, %5, %cst_41 {dimension_numbers = #tpu.dot_dimension_numbers<[1], [0], [0], [1], [0, 0, 1, 1], [], []>} : vector<1x32xbf16>, vector<32x96xbf16>, vector<1x96xf32> -> vector<1x96xf32>
    %134 = arith.addf %133, %10 : vector<1x96xf32>
    %135 = vector.extract_strided_slice %111 {offsets = [0, 0], sizes = [1, 96], strides = [1, 1]} : vector<1x128xf32> to vector<1x96xf32>
    %136 = arith.addf %135, %11 : vector<1x96xf32>
    %137 = vector.extract_strided_slice %134 {offsets = [0, 0], sizes = [1, 32], strides = [1, 1]} : vector<1x96xf32> to vector<1x32xf32>
    %138 = vector.extract_strided_slice %136 {offsets = [0, 0], sizes = [1, 32], strides = [1, 1]} : vector<1x96xf32> to vector<1x32xf32>
    %139 = arith.addf %137, %138 : vector<1x32xf32>
    %140 = arith.negf %139 : vector<1x32xf32>
    %141 = math.exp %140 : vector<1x32xf32>
    %cst_42 = arith.constant 1.000000e+00 : f32
    %142 = vector.broadcast %cst_42 : f32 to vector<1x32xf32>
    %143 = arith.addf %142, %141 : vector<1x32xf32>
    %144 = arith.divf %142, %143 : vector<1x32xf32>
    %145 = vector.extract_strided_slice %134 {offsets = [0, 32], sizes = [1, 32], strides = [1, 1]} : vector<1x96xf32> to vector<1x32xf32>
    %146 = vector.extract_strided_slice %136 {offsets = [0, 32], sizes = [1, 32], strides = [1, 1]} : vector<1x96xf32> to vector<1x32xf32>
    %147 = arith.addf %145, %146 : vector<1x32xf32>
    %148 = arith.negf %147 : vector<1x32xf32>
    %149 = math.exp %148 : vector<1x32xf32>
    %cst_43 = arith.constant 1.000000e+00 : f32
    %150 = vector.broadcast %cst_43 : f32 to vector<1x32xf32>
    %151 = arith.addf %150, %149 : vector<1x32xf32>
    %152 = arith.divf %150, %151 : vector<1x32xf32>
    %153 = vector.extract_strided_slice %134 {offsets = [0, 64], sizes = [1, 32], strides = [1, 1]} : vector<1x96xf32> to vector<1x32xf32>
    %154 = vector.extract_strided_slice %136 {offsets = [0, 64], sizes = [1, 32], strides = [1, 1]} : vector<1x96xf32> to vector<1x32xf32>
    %155 = arith.mulf %144, %154 : vector<1x32xf32>
    %156 = arith.addf %153, %155 : vector<1x32xf32>
    %157 = math.tanh %156 : vector<1x32xf32>
    %cst_44 = arith.constant 1.000000e+00 : f32
    %158 = vector.broadcast %cst_44 : f32 to vector<1x32xf32>
    %159 = arith.subf %158, %152 : vector<1x32xf32>
    %160 = arith.mulf %159, %157 : vector<1x32xf32>
    %161 = arith.mulf %152, %82 : vector<1x32xf32>
    %162 = arith.addf %160, %161 : vector<1x32xf32>
    %163 = arith.truncf %162 : vector<1x32xf32> to vector<1x32xbf16>
    %cst_45 = arith.constant dense<0.000000e+00> : vector<1x128xf32>
    %164 = tpu.matmul %163, %7, %cst_45 {dimension_numbers = #tpu.dot_dimension_numbers<[1], [0], [0], [1], [0, 0, 1, 1], [], []>} : vector<1x32xbf16>, vector<32x128xbf16>, vector<1x128xf32> -> vector<1x128xf32>
    %165 = arith.addf %164, %12 : vector<1x128xf32>
    %cst_46 = arith.constant dense<0xFF800000> : vector<1xf32>
    %166 = vector.multi_reduction <maximumf>, %165, %cst_46 [1] : vector<1x128xf32> to vector<1xf32>
    %167 = vector.shape_cast %166 : vector<1xf32> to vector<1x1xf32>
    %168 = vector.broadcast %167 : vector<1x1xf32> to vector<1x128xf32>
    %169 = arith.subf %165, %168 : vector<1x128xf32>
    %170 = math.exp %169 : vector<1x128xf32>
    %cst_47 = arith.constant dense<0.000000e+00> : vector<1xf32>
    %171 = vector.multi_reduction <add>, %170, %cst_47 [1] : vector<1x128xf32> to vector<1xf32>
    %172 = vector.shape_cast %171 : vector<1xf32> to vector<1x1xf32>
    %173 = math.log %172 : vector<1x1xf32>
    %174 = vector.broadcast %173 : vector<1x1xf32> to vector<1x128xf32>
    %175 = arith.subf %169, %174 : vector<1x128xf32>
    %176 = arith.index_cast %c1_i32 : i32 to index
    %c0_48 = arith.constant 0 : index
    %177 = vector.load %arg4[%176, %c0_48] : memref<8x128xf32, #tpu.memory_space<vmem>>, vector<1x128xf32>
    tpu.vector_store %arg4[%176, %c0_48], %175 {strides = array<i32>} : memref<8x128xf32, #tpu.memory_space<vmem>>, vector<1x128xf32>,
    %178 = arith.index_cast %c1_i32 : i32 to index
    %c0_49 = arith.constant 0 : index
    %179 = vector.load %arg5[%178, %c0_49] : memref<8x128xf32, #tpu.memory_space<vmem>>, vector<1x128xf32>
    tpu.vector_store %arg5[%178, %c0_49], %123 {strides = array<i32>} : memref<8x128xf32, #tpu.memory_space<vmem>>, vector<1x128xf32>,
    %c2_i32 = arith.constant 2 : i32
    %180 = arith.index_cast %c2_i32 : i32 to index
    %181 = memref.load %arg0[%180] : memref<8xi32, #tpu.memory_space<smem>>
    %c0_i32_50 = arith.constant 0 : i32
    %c63_i32_51 = arith.constant 63 : i32
    %182 = arith.maxsi %c0_i32_50, %181 : i32
    %183 = arith.minsi %c63_i32_51, %182 : i32
    %c0_i32_52 = arith.constant 0 : i32
    %184 = arith.addi %c0_i32_52, %183 : i32
    %185 = arith.index_cast %184 : i32 to index
    %c0_53 = arith.constant 0 : index
    %186 = vector.load %arg3[%185, %c0_53] : memref<232x128xf32, #tpu.memory_space<vmem>>, vector<1x128xf32>
    %187 = vector.extract_strided_slice %186 {offsets = [0, 0], sizes = [1, 32], strides = [1, 1]} : vector<1x128xf32> to vector<1x32xf32>
    %188 = arith.truncf %187 : vector<1x32xf32> to vector<1x32xbf16>
    %189 = arith.truncf %162 : vector<1x32xf32> to vector<1x32xbf16>
    %cst_54 = arith.constant dense<0.000000e+00> : vector<1x128xf32>
    %190 = tpu.matmul %188, %1, %cst_54 {dimension_numbers = #tpu.dot_dimension_numbers<[1], [0], [0], [1], [0, 0, 1, 1], [], []>} : vector<1x32xbf16>, vector<32x128xbf16>, vector<1x128xf32> -> vector<1x128xf32>
    %cst_55 = arith.constant dense<0.000000e+00> : vector<1x128xf32>
    %191 = tpu.matmul %189, %3, %cst_55 {dimension_numbers = #tpu.dot_dimension_numbers<[1], [0], [0], [1], [0, 0, 1, 1], [], []>} : vector<1x32xbf16>, vector<32x128xbf16>, vector<1x128xf32> -> vector<1x128xf32>
    %192 = arith.addf %190, %191 : vector<1x128xf32>
    %193 = arith.addf %192, %8 : vector<1x128xf32>
    %cst_56 = arith.constant dense<0xFF800000> : vector<1xf32>
    %194 = vector.multi_reduction <maximumf>, %193, %cst_56 [1] : vector<1x128xf32> to vector<1xf32>
    %195 = vector.shape_cast %194 : vector<1xf32> to vector<1x1xf32>
    %196 = vector.broadcast %195 : vector<1x1xf32> to vector<1x128xf32>
    %197 = arith.subf %193, %196 : vector<1x128xf32>
    %198 = math.exp %197 : vector<1x128xf32>
    %cst_57 = arith.constant dense<0.000000e+00> : vector<1xf32>
    %199 = vector.multi_reduction <add>, %198, %cst_57 [1] : vector<1x128xf32> to vector<1xf32>
    %200 = vector.shape_cast %199 : vector<1xf32> to vector<1x1xf32>
    %201 = tpu.reciprocal %200 : vector<1x1xf32> -> vector<1x1xf32>
    %202 = vector.broadcast %201 : vector<1x1xf32> to vector<1x128xf32>
    %203 = arith.mulf %198, %202 : vector<1x128xf32>
    %204 = vector.extract_strided_slice %203 {offsets = [0, 96], sizes = [1, 16], strides = [1, 1]} : vector<1x128xf32> to vector<1x16xf32>
    %205 = arith.truncf %204 : vector<1x16xf32> to vector<1x16xbf16>
    %cst_58 = arith.constant dense<0.000000e+00> : vector<1x32xf32>
    %206 = tpu.matmul %205, %18, %cst_58 {dimension_numbers = #tpu.dot_dimension_numbers<[1], [0], [0], [1], [0, 0, 1, 1], [], []>} : vector<1x16xbf16>, vector<16x32xbf16>, vector<1x32xf32> -> vector<1x32xf32>
    %207 = vector.extract_strided_slice %190 {offsets = [0, 0], sizes = [1, 32], strides = [1, 1]} : vector<1x128xf32> to vector<1x32xf32>
    %208 = arith.addf %207, %206 : vector<1x32xf32>
    %209 = arith.addf %208, %9 : vector<1x32xf32>
    %cst_59 = arith.constant 0.000000e+00 : f32
    %210 = vector.broadcast %cst_59 : f32 to vector<1x32xf32>
    %211 = arith.maximumf %209, %210 : vector<1x32xf32>
    %212 = arith.truncf %211 : vector<1x32xf32> to vector<1x32xbf16>
    %cst_60 = arith.constant dense<0.000000e+00> : vector<1x96xf32>
    %213 = tpu.matmul %212, %5, %cst_60 {dimension_numbers = #tpu.dot_dimension_numbers<[1], [0], [0], [1], [0, 0, 1, 1], [], []>} : vector<1x32xbf16>, vector<32x96xbf16>, vector<1x96xf32> -> vector<1x96xf32>
    %214 = arith.addf %213, %10 : vector<1x96xf32>
    %215 = vector.extract_strided_slice %191 {offsets = [0, 0], sizes = [1, 96], strides = [1, 1]} : vector<1x128xf32> to vector<1x96xf32>
    %216 = arith.addf %215, %11 : vector<1x96xf32>
    %217 = vector.extract_strided_slice %214 {offsets = [0, 0], sizes = [1, 32], strides = [1, 1]} : vector<1x96xf32> to vector<1x32xf32>
    %218 = vector.extract_strided_slice %216 {offsets = [0, 0], sizes = [1, 32], strides = [1, 1]} : vector<1x96xf32> to vector<1x32xf32>
    %219 = arith.addf %217, %218 : vector<1x32xf32>
    %220 = arith.negf %219 : vector<1x32xf32>
    %221 = math.exp %220 : vector<1x32xf32>
    %cst_61 = arith.constant 1.000000e+00 : f32
    %222 = vector.broadcast %cst_61 : f32 to vector<1x32xf32>
    %223 = arith.addf %222, %221 : vector<1x32xf32>
    %224 = arith.divf %222, %223 : vector<1x32xf32>
    %225 = vector.extract_strided_slice %214 {offsets = [0, 32], sizes = [1, 32], strides = [1, 1]} : vector<1x96xf32> to vector<1x32xf32>
    %226 = vector.extract_strided_slice %216 {offsets = [0, 32], sizes = [1, 32], strides = [1, 1]} : vector<1x96xf32> to vector<1x32xf32>
    %227 = arith.addf %225, %226 : vector<1x32xf32>
    %228 = arith.negf %227 : vector<1x32xf32>
    %229 = math.exp %228 : vector<1x32xf32>
    %cst_62 = arith.constant 1.000000e+00 : f32
    %230 = vector.broadcast %cst_62 : f32 to vector<1x32xf32>
    %231 = arith.addf %230, %229 : vector<1x32xf32>
    %232 = arith.divf %230, %231 : vector<1x32xf32>
    %233 = vector.extract_strided_slice %214 {offsets = [0, 64], sizes = [1, 32], strides = [1, 1]} : vector<1x96xf32> to vector<1x32xf32>
    %234 = vector.extract_strided_slice %216 {offsets = [0, 64], sizes = [1, 32], strides = [1, 1]} : vector<1x96xf32> to vector<1x32xf32>
    %235 = arith.mulf %224, %234 : vector<1x32xf32>
    %236 = arith.addf %233, %235 : vector<1x32xf32>
    %237 = math.tanh %236 : vector<1x32xf32>
    %cst_63 = arith.constant 1.000000e+00 : f32
    %238 = vector.broadcast %cst_63 : f32 to vector<1x32xf32>
    %239 = arith.subf %238, %232 : vector<1x32xf32>
    %240 = arith.mulf %239, %237 : vector<1x32xf32>
    %241 = arith.mulf %232, %162 : vector<1x32xf32>
    %242 = arith.addf %240, %241 : vector<1x32xf32>
    %243 = arith.truncf %242 : vector<1x32xf32> to vector<1x32xbf16>
    %cst_64 = arith.constant dense<0.000000e+00> : vector<1x128xf32>
    %244 = tpu.matmul %243, %7, %cst_64 {dimension_numbers = #tpu.dot_dimension_numbers<[1], [0], [0], [1], [0, 0, 1, 1], [], []>} : vector<1x32xbf16>, vector<32x128xbf16>, vector<1x128xf32> -> vector<1x128xf32>
    %245 = arith.addf %244, %12 : vector<1x128xf32>
    %cst_65 = arith.constant dense<0xFF800000> : vector<1xf32>
    %246 = vector.multi_reduction <maximumf>, %245, %cst_65 [1] : vector<1x128xf32> to vector<1xf32>
    %247 = vector.shape_cast %246 : vector<1xf32> to vector<1x1xf32>
    %248 = vector.broadcast %247 : vector<1x1xf32> to vector<1x128xf32>
    %249 = arith.subf %245, %248 : vector<1x128xf32>
    %250 = math.exp %249 : vector<1x128xf32>
    %cst_66 = arith.constant dense<0.000000e+00> : vector<1xf32>
    %251 = vector.multi_reduction <add>, %250, %cst_66 [1] : vector<1x128xf32> to vector<1xf32>
    %252 = vector.shape_cast %251 : vector<1xf32> to vector<1x1xf32>
    %253 = math.log %252 : vector<1x1xf32>
    %254 = vector.broadcast %253 : vector<1x1xf32> to vector<1x128xf32>
    %255 = arith.subf %249, %254 : vector<1x128xf32>
    %256 = arith.index_cast %c2_i32 : i32 to index
    %c0_67 = arith.constant 0 : index
    %257 = vector.load %arg4[%256, %c0_67] : memref<8x128xf32, #tpu.memory_space<vmem>>, vector<1x128xf32>
    tpu.vector_store %arg4[%256, %c0_67], %255 {strides = array<i32>} : memref<8x128xf32, #tpu.memory_space<vmem>>, vector<1x128xf32>,
    %258 = arith.index_cast %c2_i32 : i32 to index
    %c0_68 = arith.constant 0 : index
    %259 = vector.load %arg5[%258, %c0_68] : memref<8x128xf32, #tpu.memory_space<vmem>>, vector<1x128xf32>
    tpu.vector_store %arg5[%258, %c0_68], %203 {strides = array<i32>} : memref<8x128xf32, #tpu.memory_space<vmem>>, vector<1x128xf32>,
    %c3_i32 = arith.constant 3 : i32
    %260 = arith.index_cast %c3_i32 : i32 to index
    %261 = memref.load %arg0[%260] : memref<8xi32, #tpu.memory_space<smem>>
    %c0_i32_69 = arith.constant 0 : i32
    %c63_i32_70 = arith.constant 63 : i32
    %262 = arith.maxsi %c0_i32_69, %261 : i32
    %263 = arith.minsi %c63_i32_70, %262 : i32
    %c0_i32_71 = arith.constant 0 : i32
    %264 = arith.addi %c0_i32_71, %263 : i32
    %265 = arith.index_cast %264 : i32 to index
    %c0_72 = arith.constant 0 : index
    %266 = vector.load %arg3[%265, %c0_72] : memref<232x128xf32, #tpu.memory_space<vmem>>, vector<1x128xf32>
    %267 = vector.extract_strided_slice %266 {offsets = [0, 0], sizes = [1, 32], strides = [1, 1]} : vector<1x128xf32> to vector<1x32xf32>
    %268 = arith.truncf %267 : vector<1x32xf32> to vector<1x32xbf16>
    %269 = arith.truncf %242 : vector<1x32xf32> to vector<1x32xbf16>
    %cst_73 = arith.constant dense<0.000000e+00> : vector<1x128xf32>
    %270 = tpu.matmul %268, %1, %cst_73 {dimension_numbers = #tpu.dot_dimension_numbers<[1], [0], [0], [1], [0, 0, 1, 1], [], []>} : vector<1x32xbf16>, vector<32x128xbf16>, vector<1x128xf32> -> vector<1x128xf32>
    %cst_74 = arith.constant dense<0.000000e+00> : vector<1x128xf32>
    %271 = tpu.matmul %269, %3, %cst_74 {dimension_numbers = #tpu.dot_dimension_numbers<[1], [0], [0], [1], [0, 0, 1, 1], [], []>} : vector<1x32xbf16>, vector<32x128xbf16>, vector<1x128xf32> -> vector<1x128xf32>
    %272 = arith.addf %270, %271 : vector<1x128xf32>
    %273 = arith.addf %272, %8 : vector<1x128xf32>
    %cst_75 = arith.constant dense<0xFF800000> : vector<1xf32>
    %274 = vector.multi_reduction <maximumf>, %273, %cst_75 [1] : vector<1x128xf32> to vector<1xf32>
    %275 = vector.shape_cast %274 : vector<1xf32> to vector<1x1xf32>
    %276 = vector.broadcast %275 : vector<1x1xf32> to vector<1x128xf32>
    %277 = arith.subf %273, %276 : vector<1x128xf32>
    %278 = math.exp %277 : vector<1x128xf32>
    %cst_76 = arith.constant dense<0.000000e+00> : vector<1xf32>
    %279 = vector.multi_reduction <add>, %278, %cst_76 [1] : vector<1x128xf32> to vector<1xf32>
    %280 = vector.shape_cast %279 : vector<1xf32> to vector<1x1xf32>
    %281 = tpu.reciprocal %280 : vector<1x1xf32> -> vector<1x1xf32>
    %282 = vector.broadcast %281 : vector<1x1xf32> to vector<1x128xf32>
    %283 = arith.mulf %278, %282 : vector<1x128xf32>
    %284 = vector.extract_strided_slice %283 {offsets = [0, 96], sizes = [1, 16], strides = [1, 1]} : vector<1x128xf32> to vector<1x16xf32>
    %285 = arith.truncf %284 : vector<1x16xf32> to vector<1x16xbf16>
    %cst_77 = arith.constant dense<0.000000e+00> : vector<1x32xf32>
    %286 = tpu.matmul %285, %18, %cst_77 {dimension_numbers = #tpu.dot_dimension_numbers<[1], [0], [0], [1], [0, 0, 1, 1], [], []>} : vector<1x16xbf16>, vector<16x32xbf16>, vector<1x32xf32> -> vector<1x32xf32>
    %287 = vector.extract_strided_slice %270 {offsets = [0, 0], sizes = [1, 32], strides = [1, 1]} : vector<1x128xf32> to vector<1x32xf32>
    %288 = arith.addf %287, %286 : vector<1x32xf32>
    %289 = arith.addf %288, %9 : vector<1x32xf32>
    %cst_78 = arith.constant 0.000000e+00 : f32
    %290 = vector.broadcast %cst_78 : f32 to vector<1x32xf32>
    %291 = arith.maximumf %289, %290 : vector<1x32xf32>
    %292 = arith.truncf %291 : vector<1x32xf32> to vector<1x32xbf16>
    %cst_79 = arith.constant dense<0.000000e+00> : vector<1x96xf32>
    %293 = tpu.matmul %292, %5, %cst_79 {dimension_numbers = #tpu.dot_dimension_numbers<[1], [0], [0], [1], [0, 0, 1, 1], [], []>} : vector<1x32xbf16>, vector<32x96xbf16>, vector<1x96xf32> -> vector<1x96xf32>
    %294 = arith.addf %293, %10 : vector<1x96xf32>
    %295 = vector.extract_strided_slice %271 {offsets = [0, 0], sizes = [1, 96], strides = [1, 1]} : vector<1x128xf32> to vector<1x96xf32>
    %296 = arith.addf %295, %11 : vector<1x96xf32>
    %297 = vector.extract_strided_slice %294 {offsets = [0, 0], sizes = [1, 32], strides = [1, 1]} : vector<1x96xf32> to vector<1x32xf32>
    %298 = vector.extract_strided_slice %296 {offsets = [0, 0], sizes = [1, 32], strides = [1, 1]} : vector<1x96xf32> to vector<1x32xf32>
    %299 = arith.addf %297, %298 : vector<1x32xf32>
    %300 = arith.negf %299 : vector<1x32xf32>
    %301 = math.exp %300 : vector<1x32xf32>
    %cst_80 = arith.constant 1.000000e+00 : f32
    %302 = vector.broadcast %cst_80 : f32 to vector<1x32xf32>
    %303 = arith.addf %302, %301 : vector<1x32xf32>
    %304 = arith.divf %302, %303 : vector<1x32xf32>
    %305 = vector.extract_strided_slice %294 {offsets = [0, 32], sizes = [1, 32], strides = [1, 1]} : vector<1x96xf32> to vector<1x32xf32>
    %306 = vector.extract_strided_slice %296 {offsets = [0, 32], sizes = [1, 32], strides = [1, 1]} : vector<1x96xf32> to vector<1x32xf32>
    %307 = arith.addf %305, %306 : vector<1x32xf32>
    %308 = arith.negf %307 : vector<1x32xf32>
    %309 = math.exp %308 : vector<1x32xf32>
    %cst_81 = arith.constant 1.000000e+00 : f32
    %310 = vector.broadcast %cst_81 : f32 to vector<1x32xf32>
    %311 = arith.addf %310, %309 : vector<1x32xf32>
    %312 = arith.divf %310, %311 : vector<1x32xf32>
    %313 = vector.extract_strided_slice %294 {offsets = [0, 64], sizes = [1, 32], strides = [1, 1]} : vector<1x96xf32> to vector<1x32xf32>
    %314 = vector.extract_strided_slice %296 {offsets = [0, 64], sizes = [1, 32], strides = [1, 1]} : vector<1x96xf32> to vector<1x32xf32>
    %315 = arith.mulf %304, %314 : vector<1x32xf32>
    %316 = arith.addf %313, %315 : vector<1x32xf32>
    %317 = math.tanh %316 : vector<1x32xf32>
    %cst_82 = arith.constant 1.000000e+00 : f32
    %318 = vector.broadcast %cst_82 : f32 to vector<1x32xf32>
    %319 = arith.subf %318, %312 : vector<1x32xf32>
    %320 = arith.mulf %319, %317 : vector<1x32xf32>
    %321 = arith.mulf %312, %242 : vector<1x32xf32>
    %322 = arith.addf %320, %321 : vector<1x32xf32>
    %323 = arith.truncf %322 : vector<1x32xf32> to vector<1x32xbf16>
    %cst_83 = arith.constant dense<0.000000e+00> : vector<1x128xf32>
    %324 = tpu.matmul %323, %7, %cst_83 {dimension_numbers = #tpu.dot_dimension_numbers<[1], [0], [0], [1], [0, 0, 1, 1], [], []>} : vector<1x32xbf16>, vector<32x128xbf16>, vector<1x128xf32> -> vector<1x128xf32>
    %325 = arith.addf %324, %12 : vector<1x128xf32>
    %cst_84 = arith.constant dense<0xFF800000> : vector<1xf32>
    %326 = vector.multi_reduction <maximumf>, %325, %cst_84 [1] : vector<1x128xf32> to vector<1xf32>
    %327 = vector.shape_cast %326 : vector<1xf32> to vector<1x1xf32>
    %328 = vector.broadcast %327 : vector<1x1xf32> to vector<1x128xf32>
    %329 = arith.subf %325, %328 : vector<1x128xf32>
    %330 = math.exp %329 : vector<1x128xf32>
    %cst_85 = arith.constant dense<0.000000e+00> : vector<1xf32>
    %331 = vector.multi_reduction <add>, %330, %cst_85 [1] : vector<1x128xf32> to vector<1xf32>
    %332 = vector.shape_cast %331 : vector<1xf32> to vector<1x1xf32>
    %333 = math.log %332 : vector<1x1xf32>
    %334 = vector.broadcast %333 : vector<1x1xf32> to vector<1x128xf32>
    %335 = arith.subf %329, %334 : vector<1x128xf32>
    %336 = arith.index_cast %c3_i32 : i32 to index
    %c0_86 = arith.constant 0 : index
    %337 = vector.load %arg4[%336, %c0_86] : memref<8x128xf32, #tpu.memory_space<vmem>>, vector<1x128xf32>
    tpu.vector_store %arg4[%336, %c0_86], %335 {strides = array<i32>} : memref<8x128xf32, #tpu.memory_space<vmem>>, vector<1x128xf32>,
    %338 = arith.index_cast %c3_i32 : i32 to index
    %c0_87 = arith.constant 0 : index
    %339 = vector.load %arg5[%338, %c0_87] : memref<8x128xf32, #tpu.memory_space<vmem>>, vector<1x128xf32>
    tpu.vector_store %arg5[%338, %c0_87], %283 {strides = array<i32>} : memref<8x128xf32, #tpu.memory_space<vmem>>, vector<1x128xf32>,
    %c4_i32 = arith.constant 4 : i32
    %340 = arith.index_cast %c4_i32 : i32 to index
    %341 = memref.load %arg0[%340] : memref<8xi32, #tpu.memory_space<smem>>
    %c0_i32_88 = arith.constant 0 : i32
    %c63_i32_89 = arith.constant 63 : i32
    %342 = arith.maxsi %c0_i32_88, %341 : i32
    %343 = arith.minsi %c63_i32_89, %342 : i32
    %c0_i32_90 = arith.constant 0 : i32
    %344 = arith.addi %c0_i32_90, %343 : i32
    %345 = arith.index_cast %344 : i32 to index
    %c0_91 = arith.constant 0 : index
    %346 = vector.load %arg3[%345, %c0_91] : memref<232x128xf32, #tpu.memory_space<vmem>>, vector<1x128xf32>
    %347 = vector.extract_strided_slice %346 {offsets = [0, 0], sizes = [1, 32], strides = [1, 1]} : vector<1x128xf32> to vector<1x32xf32>
    %348 = arith.truncf %347 : vector<1x32xf32> to vector<1x32xbf16>
    %349 = arith.truncf %322 : vector<1x32xf32> to vector<1x32xbf16>
    %cst_92 = arith.constant dense<0.000000e+00> : vector<1x128xf32>
    %350 = tpu.matmul %348, %1, %cst_92 {dimension_numbers = #tpu.dot_dimension_numbers<[1], [0], [0], [1], [0, 0, 1, 1], [], []>} : vector<1x32xbf16>, vector<32x128xbf16>, vector<1x128xf32> -> vector<1x128xf32>
    %cst_93 = arith.constant dense<0.000000e+00> : vector<1x128xf32>
    %351 = tpu.matmul %349, %3, %cst_93 {dimension_numbers = #tpu.dot_dimension_numbers<[1], [0], [0], [1], [0, 0, 1, 1], [], []>} : vector<1x32xbf16>, vector<32x128xbf16>, vector<1x128xf32> -> vector<1x128xf32>
    %352 = arith.addf %350, %351 : vector<1x128xf32>
    %353 = arith.addf %352, %8 : vector<1x128xf32>
    %cst_94 = arith.constant dense<0xFF800000> : vector<1xf32>
    %354 = vector.multi_reduction <maximumf>, %353, %cst_94 [1] : vector<1x128xf32> to vector<1xf32>
    %355 = vector.shape_cast %354 : vector<1xf32> to vector<1x1xf32>
    %356 = vector.broadcast %355 : vector<1x1xf32> to vector<1x128xf32>
    %357 = arith.subf %353, %356 : vector<1x128xf32>
    %358 = math.exp %357 : vector<1x128xf32>
    %cst_95 = arith.constant dense<0.000000e+00> : vector<1xf32>
    %359 = vector.multi_reduction <add>, %358, %cst_95 [1] : vector<1x128xf32> to vector<1xf32>
    %360 = vector.shape_cast %359 : vector<1xf32> to vector<1x1xf32>
    %361 = tpu.reciprocal %360 : vector<1x1xf32> -> vector<1x1xf32>
    %362 = vector.broadcast %361 : vector<1x1xf32> to vector<1x128xf32>
    %363 = arith.mulf %358, %362 : vector<1x128xf32>
    %364 = vector.extract_strided_slice %363 {offsets = [0, 96], sizes = [1, 16], strides = [1, 1]} : vector<1x128xf32> to vector<1x16xf32>
    %365 = arith.truncf %364 : vector<1x16xf32> to vector<1x16xbf16>
    %cst_96 = arith.constant dense<0.000000e+00> : vector<1x32xf32>
    %366 = tpu.matmul %365, %18, %cst_96 {dimension_numbers = #tpu.dot_dimension_numbers<[1], [0], [0], [1], [0, 0, 1, 1], [], []>} : vector<1x16xbf16>, vector<16x32xbf16>, vector<1x32xf32> -> vector<1x32xf32>
    %367 = vector.extract_strided_slice %350 {offsets = [0, 0], sizes = [1, 32], strides = [1, 1]} : vector<1x128xf32> to vector<1x32xf32>
    %368 = arith.addf %367, %366 : vector<1x32xf32>
    %369 = arith.addf %368, %9 : vector<1x32xf32>
    %cst_97 = arith.constant 0.000000e+00 : f32
    %370 = vector.broadcast %cst_97 : f32 to vector<1x32xf32>
    %371 = arith.maximumf %369, %370 : vector<1x32xf32>
    %372 = arith.truncf %371 : vector<1x32xf32> to vector<1x32xbf16>
    %cst_98 = arith.constant dense<0.000000e+00> : vector<1x96xf32>
    %373 = tpu.matmul %372, %5, %cst_98 {dimension_numbers = #tpu.dot_dimension_numbers<[1], [0], [0], [1], [0, 0, 1, 1], [], []>} : vector<1x32xbf16>, vector<32x96xbf16>, vector<1x96xf32> -> vector<1x96xf32>
    %374 = arith.addf %373, %10 : vector<1x96xf32>
    %375 = vector.extract_strided_slice %351 {offsets = [0, 0], sizes = [1, 96], strides = [1, 1]} : vector<1x128xf32> to vector<1x96xf32>
    %376 = arith.addf %375, %11 : vector<1x96xf32>
    %377 = vector.extract_strided_slice %374 {offsets = [0, 0], sizes = [1, 32], strides = [1, 1]} : vector<1x96xf32> to vector<1x32xf32>
    %378 = vector.extract_strided_slice %376 {offsets = [0, 0], sizes = [1, 32], strides = [1, 1]} : vector<1x96xf32> to vector<1x32xf32>
    %379 = arith.addf %377, %378 : vector<1x32xf32>
    %380 = arith.negf %379 : vector<1x32xf32>
    %381 = math.exp %380 : vector<1x32xf32>
    %cst_99 = arith.constant 1.000000e+00 : f32
    %382 = vector.broadcast %cst_99 : f32 to vector<1x32xf32>
    %383 = arith.addf %382, %381 : vector<1x32xf32>
    %384 = arith.divf %382, %383 : vector<1x32xf32>
    %385 = vector.extract_strided_slice %374 {offsets = [0, 32], sizes = [1, 32], strides = [1, 1]} : vector<1x96xf32> to vector<1x32xf32>
    %386 = vector.extract_strided_slice %376 {offsets = [0, 32], sizes = [1, 32], strides = [1, 1]} : vector<1x96xf32> to vector<1x32xf32>
    %387 = arith.addf %385, %386 : vector<1x32xf32>
    %388 = arith.negf %387 : vector<1x32xf32>
    %389 = math.exp %388 : vector<1x32xf32>
    %cst_100 = arith.constant 1.000000e+00 : f32
    %390 = vector.broadcast %cst_100 : f32 to vector<1x32xf32>
    %391 = arith.addf %390, %389 : vector<1x32xf32>
    %392 = arith.divf %390, %391 : vector<1x32xf32>
    %393 = vector.extract_strided_slice %374 {offsets = [0, 64], sizes = [1, 32], strides = [1, 1]} : vector<1x96xf32> to vector<1x32xf32>
    %394 = vector.extract_strided_slice %376 {offsets = [0, 64], sizes = [1, 32], strides = [1, 1]} : vector<1x96xf32> to vector<1x32xf32>
    %395 = arith.mulf %384, %394 : vector<1x32xf32>
    %396 = arith.addf %393, %395 : vector<1x32xf32>
    %397 = math.tanh %396 : vector<1x32xf32>
    %cst_101 = arith.constant 1.000000e+00 : f32
    %398 = vector.broadcast %cst_101 : f32 to vector<1x32xf32>
    %399 = arith.subf %398, %392 : vector<1x32xf32>
    %400 = arith.mulf %399, %397 : vector<1x32xf32>
    %401 = arith.mulf %392, %322 : vector<1x32xf32>
    %402 = arith.addf %400, %401 : vector<1x32xf32>
    %403 = arith.truncf %402 : vector<1x32xf32> to vector<1x32xbf16>
    %cst_102 = arith.constant dense<0.000000e+00> : vector<1x128xf32>
    %404 = tpu.matmul %403, %7, %cst_102 {dimension_numbers = #tpu.dot_dimension_numbers<[1], [0], [0], [1], [0, 0, 1, 1], [], []>} : vector<1x32xbf16>, vector<32x128xbf16>, vector<1x128xf32> -> vector<1x128xf32>
    %405 = arith.addf %404, %12 : vector<1x128xf32>
    %cst_103 = arith.constant dense<0xFF800000> : vector<1xf32>
    %406 = vector.multi_reduction <maximumf>, %405, %cst_103 [1] : vector<1x128xf32> to vector<1xf32>
    %407 = vector.shape_cast %406 : vector<1xf32> to vector<1x1xf32>
    %408 = vector.broadcast %407 : vector<1x1xf32> to vector<1x128xf32>
    %409 = arith.subf %405, %408 : vector<1x128xf32>
    %410 = math.exp %409 : vector<1x128xf32>
    %cst_104 = arith.constant dense<0.000000e+00> : vector<1xf32>
    %411 = vector.multi_reduction <add>, %410, %cst_104 [1] : vector<1x128xf32> to vector<1xf32>
    %412 = vector.shape_cast %411 : vector<1xf32> to vector<1x1xf32>
    %413 = math.log %412 : vector<1x1xf32>
    %414 = vector.broadcast %413 : vector<1x1xf32> to vector<1x128xf32>
    %415 = arith.subf %409, %414 : vector<1x128xf32>
    %416 = arith.index_cast %c4_i32 : i32 to index
    %c0_105 = arith.constant 0 : index
    %417 = vector.load %arg4[%416, %c0_105] : memref<8x128xf32, #tpu.memory_space<vmem>>, vector<1x128xf32>
    tpu.vector_store %arg4[%416, %c0_105], %415 {strides = array<i32>} : memref<8x128xf32, #tpu.memory_space<vmem>>, vector<1x128xf32>,
    %418 = arith.index_cast %c4_i32 : i32 to index
    %c0_106 = arith.constant 0 : index
    %419 = vector.load %arg5[%418, %c0_106] : memref<8x128xf32, #tpu.memory_space<vmem>>, vector<1x128xf32>
    tpu.vector_store %arg5[%418, %c0_106], %363 {strides = array<i32>} : memref<8x128xf32, #tpu.memory_space<vmem>>, vector<1x128xf32>,
    %c5_i32 = arith.constant 5 : i32
    %420 = arith.index_cast %c5_i32 : i32 to index
    %421 = memref.load %arg0[%420] : memref<8xi32, #tpu.memory_space<smem>>
    %c0_i32_107 = arith.constant 0 : i32
    %c63_i32_108 = arith.constant 63 : i32
    %422 = arith.maxsi %c0_i32_107, %421 : i32
    %423 = arith.minsi %c63_i32_108, %422 : i32
    %c0_i32_109 = arith.constant 0 : i32
    %424 = arith.addi %c0_i32_109, %423 : i32
    %425 = arith.index_cast %424 : i32 to index
    %c0_110 = arith.constant 0 : index
    %426 = vector.load %arg3[%425, %c0_110] : memref<232x128xf32, #tpu.memory_space<vmem>>, vector<1x128xf32>
    %427 = vector.extract_strided_slice %426 {offsets = [0, 0], sizes = [1, 32], strides = [1, 1]} : vector<1x128xf32> to vector<1x32xf32>
    %428 = arith.truncf %427 : vector<1x32xf32> to vector<1x32xbf16>
    %429 = arith.truncf %402 : vector<1x32xf32> to vector<1x32xbf16>
    %cst_111 = arith.constant dense<0.000000e+00> : vector<1x128xf32>
    %430 = tpu.matmul %428, %1, %cst_111 {dimension_numbers = #tpu.dot_dimension_numbers<[1], [0], [0], [1], [0, 0, 1, 1], [], []>} : vector<1x32xbf16>, vector<32x128xbf16>, vector<1x128xf32> -> vector<1x128xf32>
    %cst_112 = arith.constant dense<0.000000e+00> : vector<1x128xf32>
    %431 = tpu.matmul %429, %3, %cst_112 {dimension_numbers = #tpu.dot_dimension_numbers<[1], [0], [0], [1], [0, 0, 1, 1], [], []>} : vector<1x32xbf16>, vector<32x128xbf16>, vector<1x128xf32> -> vector<1x128xf32>
    %432 = arith.addf %430, %431 : vector<1x128xf32>
    %433 = arith.addf %432, %8 : vector<1x128xf32>
    %cst_113 = arith.constant dense<0xFF800000> : vector<1xf32>
    %434 = vector.multi_reduction <maximumf>, %433, %cst_113 [1] : vector<1x128xf32> to vector<1xf32>
    %435 = vector.shape_cast %434 : vector<1xf32> to vector<1x1xf32>
    %436 = vector.broadcast %435 : vector<1x1xf32> to vector<1x128xf32>
    %437 = arith.subf %433, %436 : vector<1x128xf32>
    %438 = math.exp %437 : vector<1x128xf32>
    %cst_114 = arith.constant dense<0.000000e+00> : vector<1xf32>
    %439 = vector.multi_reduction <add>, %438, %cst_114 [1] : vector<1x128xf32> to vector<1xf32>
    %440 = vector.shape_cast %439 : vector<1xf32> to vector<1x1xf32>
    %441 = tpu.reciprocal %440 : vector<1x1xf32> -> vector<1x1xf32>
    %442 = vector.broadcast %441 : vector<1x1xf32> to vector<1x128xf32>
    %443 = arith.mulf %438, %442 : vector<1x128xf32>
    %444 = vector.extract_strided_slice %443 {offsets = [0, 96], sizes = [1, 16], strides = [1, 1]} : vector<1x128xf32> to vector<1x16xf32>
    %445 = arith.truncf %444 : vector<1x16xf32> to vector<1x16xbf16>
    %cst_115 = arith.constant dense<0.000000e+00> : vector<1x32xf32>
    %446 = tpu.matmul %445, %18, %cst_115 {dimension_numbers = #tpu.dot_dimension_numbers<[1], [0], [0], [1], [0, 0, 1, 1], [], []>} : vector<1x16xbf16>, vector<16x32xbf16>, vector<1x32xf32> -> vector<1x32xf32>
    %447 = vector.extract_strided_slice %430 {offsets = [0, 0], sizes = [1, 32], strides = [1, 1]} : vector<1x128xf32> to vector<1x32xf32>
    %448 = arith.addf %447, %446 : vector<1x32xf32>
    %449 = arith.addf %448, %9 : vector<1x32xf32>
    %cst_116 = arith.constant 0.000000e+00 : f32
    %450 = vector.broadcast %cst_116 : f32 to vector<1x32xf32>
    %451 = arith.maximumf %449, %450 : vector<1x32xf32>
    %452 = arith.truncf %451 : vector<1x32xf32> to vector<1x32xbf16>
    %cst_117 = arith.constant dense<0.000000e+00> : vector<1x96xf32>
    %453 = tpu.matmul %452, %5, %cst_117 {dimension_numbers = #tpu.dot_dimension_numbers<[1], [0], [0], [1], [0, 0, 1, 1], [], []>} : vector<1x32xbf16>, vector<32x96xbf16>, vector<1x96xf32> -> vector<1x96xf32>
    %454 = arith.addf %453, %10 : vector<1x96xf32>
    %455 = vector.extract_strided_slice %431 {offsets = [0, 0], sizes = [1, 96], strides = [1, 1]} : vector<1x128xf32> to vector<1x96xf32>
    %456 = arith.addf %455, %11 : vector<1x96xf32>
    %457 = vector.extract_strided_slice %454 {offsets = [0, 0], sizes = [1, 32], strides = [1, 1]} : vector<1x96xf32> to vector<1x32xf32>
    %458 = vector.extract_strided_slice %456 {offsets = [0, 0], sizes = [1, 32], strides = [1, 1]} : vector<1x96xf32> to vector<1x32xf32>
    %459 = arith.addf %457, %458 : vector<1x32xf32>
    %460 = arith.negf %459 : vector<1x32xf32>
    %461 = math.exp %460 : vector<1x32xf32>
    %cst_118 = arith.constant 1.000000e+00 : f32
    %462 = vector.broadcast %cst_118 : f32 to vector<1x32xf32>
    %463 = arith.addf %462, %461 : vector<1x32xf32>
    %464 = arith.divf %462, %463 : vector<1x32xf32>
    %465 = vector.extract_strided_slice %454 {offsets = [0, 32], sizes = [1, 32], strides = [1, 1]} : vector<1x96xf32> to vector<1x32xf32>
    %466 = vector.extract_strided_slice %456 {offsets = [0, 32], sizes = [1, 32], strides = [1, 1]} : vector<1x96xf32> to vector<1x32xf32>
    %467 = arith.addf %465, %466 : vector<1x32xf32>
    %468 = arith.negf %467 : vector<1x32xf32>
    %469 = math.exp %468 : vector<1x32xf32>
    %cst_119 = arith.constant 1.000000e+00 : f32
    %470 = vector.broadcast %cst_119 : f32 to vector<1x32xf32>
    %471 = arith.addf %470, %469 : vector<1x32xf32>
    %472 = arith.divf %470, %471 : vector<1x32xf32>
    %473 = vector.extract_strided_slice %454 {offsets = [0, 64], sizes = [1, 32], strides = [1, 1]} : vector<1x96xf32> to vector<1x32xf32>
    %474 = vector.extract_strided_slice %456 {offsets = [0, 64], sizes = [1, 32], strides = [1, 1]} : vector<1x96xf32> to vector<1x32xf32>
    %475 = arith.mulf %464, %474 : vector<1x32xf32>
    %476 = arith.addf %473, %475 : vector<1x32xf32>
    %477 = math.tanh %476 : vector<1x32xf32>
    %cst_120 = arith.constant 1.000000e+00 : f32
    %478 = vector.broadcast %cst_120 : f32 to vector<1x32xf32>
    %479 = arith.subf %478, %472 : vector<1x32xf32>
    %480 = arith.mulf %479, %477 : vector<1x32xf32>
    %481 = arith.mulf %472, %402 : vector<1x32xf32>
    %482 = arith.addf %480, %481 : vector<1x32xf32>
    %483 = arith.truncf %482 : vector<1x32xf32> to vector<1x32xbf16>
    %cst_121 = arith.constant dense<0.000000e+00> : vector<1x128xf32>
    %484 = tpu.matmul %483, %7, %cst_121 {dimension_numbers = #tpu.dot_dimension_numbers<[1], [0], [0], [1], [0, 0, 1, 1], [], []>} : vector<1x32xbf16>, vector<32x128xbf16>, vector<1x128xf32> -> vector<1x128xf32>
    %485 = arith.addf %484, %12 : vector<1x128xf32>
    %cst_122 = arith.constant dense<0xFF800000> : vector<1xf32>
    %486 = vector.multi_reduction <maximumf>, %485, %cst_122 [1] : vector<1x128xf32> to vector<1xf32>
    %487 = vector.shape_cast %486 : vector<1xf32> to vector<1x1xf32>
    %488 = vector.broadcast %487 : vector<1x1xf32> to vector<1x128xf32>
    %489 = arith.subf %485, %488 : vector<1x128xf32>
    %490 = math.exp %489 : vector<1x128xf32>
    %cst_123 = arith.constant dense<0.000000e+00> : vector<1xf32>
    %491 = vector.multi_reduction <add>, %490, %cst_123 [1] : vector<1x128xf32> to vector<1xf32>
    %492 = vector.shape_cast %491 : vector<1xf32> to vector<1x1xf32>
    %493 = math.log %492 : vector<1x1xf32>
    %494 = vector.broadcast %493 : vector<1x1xf32> to vector<1x128xf32>
    %495 = arith.subf %489, %494 : vector<1x128xf32>
    %496 = arith.index_cast %c5_i32 : i32 to index
    %c0_124 = arith.constant 0 : index
    %497 = vector.load %arg4[%496, %c0_124] : memref<8x128xf32, #tpu.memory_space<vmem>>, vector<1x128xf32>
    tpu.vector_store %arg4[%496, %c0_124], %495 {strides = array<i32>} : memref<8x128xf32, #tpu.memory_space<vmem>>, vector<1x128xf32>,
    %498 = arith.index_cast %c5_i32 : i32 to index
    %c0_125 = arith.constant 0 : index
    %499 = vector.load %arg5[%498, %c0_125] : memref<8x128xf32, #tpu.memory_space<vmem>>, vector<1x128xf32>
    tpu.vector_store %arg5[%498, %c0_125], %443 {strides = array<i32>} : memref<8x128xf32, #tpu.memory_space<vmem>>, vector<1x128xf32>,
    %c6_i32 = arith.constant 6 : i32
    %500 = arith.index_cast %c6_i32 : i32 to index
    %501 = memref.load %arg0[%500] : memref<8xi32, #tpu.memory_space<smem>>
    %c0_i32_126 = arith.constant 0 : i32
    %c63_i32_127 = arith.constant 63 : i32
    %502 = arith.maxsi %c0_i32_126, %501 : i32
    %503 = arith.minsi %c63_i32_127, %502 : i32
    %c0_i32_128 = arith.constant 0 : i32
    %504 = arith.addi %c0_i32_128, %503 : i32
    %505 = arith.index_cast %504 : i32 to index
    %c0_129 = arith.constant 0 : index
    %506 = vector.load %arg3[%505, %c0_129] : memref<232x128xf32, #tpu.memory_space<vmem>>, vector<1x128xf32>
    %507 = vector.extract_strided_slice %506 {offsets = [0, 0], sizes = [1, 32], strides = [1, 1]} : vector<1x128xf32> to vector<1x32xf32>
    %508 = arith.truncf %507 : vector<1x32xf32> to vector<1x32xbf16>
    %509 = arith.truncf %482 : vector<1x32xf32> to vector<1x32xbf16>
    %cst_130 = arith.constant dense<0.000000e+00> : vector<1x128xf32>
    %510 = tpu.matmul %508, %1, %cst_130 {dimension_numbers = #tpu.dot_dimension_numbers<[1], [0], [0], [1], [0, 0, 1, 1], [], []>} : vector<1x32xbf16>, vector<32x128xbf16>, vector<1x128xf32> -> vector<1x128xf32>
    %cst_131 = arith.constant dense<0.000000e+00> : vector<1x128xf32>
    %511 = tpu.matmul %509, %3, %cst_131 {dimension_numbers = #tpu.dot_dimension_numbers<[1], [0], [0], [1], [0, 0, 1, 1], [], []>} : vector<1x32xbf16>, vector<32x128xbf16>, vector<1x128xf32> -> vector<1x128xf32>
    %512 = arith.addf %510, %511 : vector<1x128xf32>
    %513 = arith.addf %512, %8 : vector<1x128xf32>
    %cst_132 = arith.constant dense<0xFF800000> : vector<1xf32>
    %514 = vector.multi_reduction <maximumf>, %513, %cst_132 [1] : vector<1x128xf32> to vector<1xf32>
    %515 = vector.shape_cast %514 : vector<1xf32> to vector<1x1xf32>
    %516 = vector.broadcast %515 : vector<1x1xf32> to vector<1x128xf32>
    %517 = arith.subf %513, %516 : vector<1x128xf32>
    %518 = math.exp %517 : vector<1x128xf32>
    %cst_133 = arith.constant dense<0.000000e+00> : vector<1xf32>
    %519 = vector.multi_reduction <add>, %518, %cst_133 [1] : vector<1x128xf32> to vector<1xf32>
    %520 = vector.shape_cast %519 : vector<1xf32> to vector<1x1xf32>
    %521 = tpu.reciprocal %520 : vector<1x1xf32> -> vector<1x1xf32>
    %522 = vector.broadcast %521 : vector<1x1xf32> to vector<1x128xf32>
    %523 = arith.mulf %518, %522 : vector<1x128xf32>
    %524 = vector.extract_strided_slice %523 {offsets = [0, 96], sizes = [1, 16], strides = [1, 1]} : vector<1x128xf32> to vector<1x16xf32>
    %525 = arith.truncf %524 : vector<1x16xf32> to vector<1x16xbf16>
    %cst_134 = arith.constant dense<0.000000e+00> : vector<1x32xf32>
    %526 = tpu.matmul %525, %18, %cst_134 {dimension_numbers = #tpu.dot_dimension_numbers<[1], [0], [0], [1], [0, 0, 1, 1], [], []>} : vector<1x16xbf16>, vector<16x32xbf16>, vector<1x32xf32> -> vector<1x32xf32>
    %527 = vector.extract_strided_slice %510 {offsets = [0, 0], sizes = [1, 32], strides = [1, 1]} : vector<1x128xf32> to vector<1x32xf32>
    %528 = arith.addf %527, %526 : vector<1x32xf32>
    %529 = arith.addf %528, %9 : vector<1x32xf32>
    %cst_135 = arith.constant 0.000000e+00 : f32
    %530 = vector.broadcast %cst_135 : f32 to vector<1x32xf32>
    %531 = arith.maximumf %529, %530 : vector<1x32xf32>
    %532 = arith.truncf %531 : vector<1x32xf32> to vector<1x32xbf16>
    %cst_136 = arith.constant dense<0.000000e+00> : vector<1x96xf32>
    %533 = tpu.matmul %532, %5, %cst_136 {dimension_numbers = #tpu.dot_dimension_numbers<[1], [0], [0], [1], [0, 0, 1, 1], [], []>} : vector<1x32xbf16>, vector<32x96xbf16>, vector<1x96xf32> -> vector<1x96xf32>
    %534 = arith.addf %533, %10 : vector<1x96xf32>
    %535 = vector.extract_strided_slice %511 {offsets = [0, 0], sizes = [1, 96], strides = [1, 1]} : vector<1x128xf32> to vector<1x96xf32>
    %536 = arith.addf %535, %11 : vector<1x96xf32>
    %537 = vector.extract_strided_slice %534 {offsets = [0, 0], sizes = [1, 32], strides = [1, 1]} : vector<1x96xf32> to vector<1x32xf32>
    %538 = vector.extract_strided_slice %536 {offsets = [0, 0], sizes = [1, 32], strides = [1, 1]} : vector<1x96xf32> to vector<1x32xf32>
    %539 = arith.addf %537, %538 : vector<1x32xf32>
    %540 = arith.negf %539 : vector<1x32xf32>
    %541 = math.exp %540 : vector<1x32xf32>
    %cst_137 = arith.constant 1.000000e+00 : f32
    %542 = vector.broadcast %cst_137 : f32 to vector<1x32xf32>
    %543 = arith.addf %542, %541 : vector<1x32xf32>
    %544 = arith.divf %542, %543 : vector<1x32xf32>
    %545 = vector.extract_strided_slice %534 {offsets = [0, 32], sizes = [1, 32], strides = [1, 1]} : vector<1x96xf32> to vector<1x32xf32>
    %546 = vector.extract_strided_slice %536 {offsets = [0, 32], sizes = [1, 32], strides = [1, 1]} : vector<1x96xf32> to vector<1x32xf32>
    %547 = arith.addf %545, %546 : vector<1x32xf32>
    %548 = arith.negf %547 : vector<1x32xf32>
    %549 = math.exp %548 : vector<1x32xf32>
    %cst_138 = arith.constant 1.000000e+00 : f32
    %550 = vector.broadcast %cst_138 : f32 to vector<1x32xf32>
    %551 = arith.addf %550, %549 : vector<1x32xf32>
    %552 = arith.divf %550, %551 : vector<1x32xf32>
    %553 = vector.extract_strided_slice %534 {offsets = [0, 64], sizes = [1, 32], strides = [1, 1]} : vector<1x96xf32> to vector<1x32xf32>
    %554 = vector.extract_strided_slice %536 {offsets = [0, 64], sizes = [1, 32], strides = [1, 1]} : vector<1x96xf32> to vector<1x32xf32>
    %555 = arith.mulf %544, %554 : vector<1x32xf32>
    %556 = arith.addf %553, %555 : vector<1x32xf32>
    %557 = math.tanh %556 : vector<1x32xf32>
    %cst_139 = arith.constant 1.000000e+00 : f32
    %558 = vector.broadcast %cst_139 : f32 to vector<1x32xf32>
    %559 = arith.subf %558, %552 : vector<1x32xf32>
    %560 = arith.mulf %559, %557 : vector<1x32xf32>
    %561 = arith.mulf %552, %482 : vector<1x32xf32>
    %562 = arith.addf %560, %561 : vector<1x32xf32>
    %563 = arith.truncf %562 : vector<1x32xf32> to vector<1x32xbf16>
    %cst_140 = arith.constant dense<0.000000e+00> : vector<1x128xf32>
    %564 = tpu.matmul %563, %7, %cst_140 {dimension_numbers = #tpu.dot_dimension_numbers<[1], [0], [0], [1], [0, 0, 1, 1], [], []>} : vector<1x32xbf16>, vector<32x128xbf16>, vector<1x128xf32> -> vector<1x128xf32>
    %565 = arith.addf %564, %12 : vector<1x128xf32>
    %cst_141 = arith.constant dense<0xFF800000> : vector<1xf32>
    %566 = vector.multi_reduction <maximumf>, %565, %cst_141 [1] : vector<1x128xf32> to vector<1xf32>
    %567 = vector.shape_cast %566 : vector<1xf32> to vector<1x1xf32>
    %568 = vector.broadcast %567 : vector<1x1xf32> to vector<1x128xf32>
    %569 = arith.subf %565, %568 : vector<1x128xf32>
    %570 = math.exp %569 : vector<1x128xf32>
    %cst_142 = arith.constant dense<0.000000e+00> : vector<1xf32>
    %571 = vector.multi_reduction <add>, %570, %cst_142 [1] : vector<1x128xf32> to vector<1xf32>
    %572 = vector.shape_cast %571 : vector<1xf32> to vector<1x1xf32>
    %573 = math.log %572 : vector<1x1xf32>
    %574 = vector.broadcast %573 : vector<1x1xf32> to vector<1x128xf32>
    %575 = arith.subf %569, %574 : vector<1x128xf32>
    %576 = arith.index_cast %c6_i32 : i32 to index
    %c0_143 = arith.constant 0 : index
    %577 = vector.load %arg4[%576, %c0_143] : memref<8x128xf32, #tpu.memory_space<vmem>>, vector<1x128xf32>
    tpu.vector_store %arg4[%576, %c0_143], %575 {strides = array<i32>} : memref<8x128xf32, #tpu.memory_space<vmem>>, vector<1x128xf32>,
    %578 = arith.index_cast %c6_i32 : i32 to index
    %c0_144 = arith.constant 0 : index
    %579 = vector.load %arg5[%578, %c0_144] : memref<8x128xf32, #tpu.memory_space<vmem>>, vector<1x128xf32>
    tpu.vector_store %arg5[%578, %c0_144], %523 {strides = array<i32>} : memref<8x128xf32, #tpu.memory_space<vmem>>, vector<1x128xf32>,
    %c7_i32 = arith.constant 7 : i32
    %580 = arith.index_cast %c7_i32 : i32 to index
    %581 = memref.load %arg0[%580] : memref<8xi32, #tpu.memory_space<smem>>
    %c0_i32_145 = arith.constant 0 : i32
    %c63_i32_146 = arith.constant 63 : i32
    %582 = arith.maxsi %c0_i32_145, %581 : i32
    %583 = arith.minsi %c63_i32_146, %582 : i32
    %c0_i32_147 = arith.constant 0 : i32
    %584 = arith.addi %c0_i32_147, %583 : i32
    %585 = arith.index_cast %584 : i32 to index
    %c0_148 = arith.constant 0 : index
    %586 = vector.load %arg3[%585, %c0_148] : memref<232x128xf32, #tpu.memory_space<vmem>>, vector<1x128xf32>
    %587 = vector.extract_strided_slice %586 {offsets = [0, 0], sizes = [1, 32], strides = [1, 1]} : vector<1x128xf32> to vector<1x32xf32>
    %588 = arith.truncf %587 : vector<1x32xf32> to vector<1x32xbf16>
    %589 = arith.truncf %562 : vector<1x32xf32> to vector<1x32xbf16>
    %cst_149 = arith.constant dense<0.000000e+00> : vector<1x128xf32>
    %590 = tpu.matmul %588, %1, %cst_149 {dimension_numbers = #tpu.dot_dimension_numbers<[1], [0], [0], [1], [0, 0, 1, 1], [], []>} : vector<1x32xbf16>, vector<32x128xbf16>, vector<1x128xf32> -> vector<1x128xf32>
    %cst_150 = arith.constant dense<0.000000e+00> : vector<1x128xf32>
    %591 = tpu.matmul %589, %3, %cst_150 {dimension_numbers = #tpu.dot_dimension_numbers<[1], [0], [0], [1], [0, 0, 1, 1], [], []>} : vector<1x32xbf16>, vector<32x128xbf16>, vector<1x128xf32> -> vector<1x128xf32>
    %592 = arith.addf %590, %591 : vector<1x128xf32>
    %593 = arith.addf %592, %8 : vector<1x128xf32>
    %cst_151 = arith.constant dense<0xFF800000> : vector<1xf32>
    %594 = vector.multi_reduction <maximumf>, %593, %cst_151 [1] : vector<1x128xf32> to vector<1xf32>
    %595 = vector.shape_cast %594 : vector<1xf32> to vector<1x1xf32>
    %596 = vector.broadcast %595 : vector<1x1xf32> to vector<1x128xf32>
    %597 = arith.subf %593, %596 : vector<1x128xf32>
    %598 = math.exp %597 : vector<1x128xf32>
    %cst_152 = arith.constant dense<0.000000e+00> : vector<1xf32>
    %599 = vector.multi_reduction <add>, %598, %cst_152 [1] : vector<1x128xf32> to vector<1xf32>
    %600 = vector.shape_cast %599 : vector<1xf32> to vector<1x1xf32>
    %601 = tpu.reciprocal %600 : vector<1x1xf32> -> vector<1x1xf32>
    %602 = vector.broadcast %601 : vector<1x1xf32> to vector<1x128xf32>
    %603 = arith.mulf %598, %602 : vector<1x128xf32>
    %604 = vector.extract_strided_slice %603 {offsets = [0, 96], sizes = [1, 16], strides = [1, 1]} : vector<1x128xf32> to vector<1x16xf32>
    %605 = arith.truncf %604 : vector<1x16xf32> to vector<1x16xbf16>
    %cst_153 = arith.constant dense<0.000000e+00> : vector<1x32xf32>
    %606 = tpu.matmul %605, %18, %cst_153 {dimension_numbers = #tpu.dot_dimension_numbers<[1], [0], [0], [1], [0, 0, 1, 1], [], []>} : vector<1x16xbf16>, vector<16x32xbf16>, vector<1x32xf32> -> vector<1x32xf32>
    %607 = vector.extract_strided_slice %590 {offsets = [0, 0], sizes = [1, 32], strides = [1, 1]} : vector<1x128xf32> to vector<1x32xf32>
    %608 = arith.addf %607, %606 : vector<1x32xf32>
    %609 = arith.addf %608, %9 : vector<1x32xf32>
    %cst_154 = arith.constant 0.000000e+00 : f32
    %610 = vector.broadcast %cst_154 : f32 to vector<1x32xf32>
    %611 = arith.maximumf %609, %610 : vector<1x32xf32>
    %612 = arith.truncf %611 : vector<1x32xf32> to vector<1x32xbf16>
    %cst_155 = arith.constant dense<0.000000e+00> : vector<1x96xf32>
    %613 = tpu.matmul %612, %5, %cst_155 {dimension_numbers = #tpu.dot_dimension_numbers<[1], [0], [0], [1], [0, 0, 1, 1], [], []>} : vector<1x32xbf16>, vector<32x96xbf16>, vector<1x96xf32> -> vector<1x96xf32>
    %614 = arith.addf %613, %10 : vector<1x96xf32>
    %615 = vector.extract_strided_slice %591 {offsets = [0, 0], sizes = [1, 96], strides = [1, 1]} : vector<1x128xf32> to vector<1x96xf32>
    %616 = arith.addf %615, %11 : vector<1x96xf32>
    %617 = vector.extract_strided_slice %614 {offsets = [0, 0], sizes = [1, 32], strides = [1, 1]} : vector<1x96xf32> to vector<1x32xf32>
    %618 = vector.extract_strided_slice %616 {offsets = [0, 0], sizes = [1, 32], strides = [1, 1]} : vector<1x96xf32> to vector<1x32xf32>
    %619 = arith.addf %617, %618 : vector<1x32xf32>
    %620 = arith.negf %619 : vector<1x32xf32>
    %621 = math.exp %620 : vector<1x32xf32>
    %cst_156 = arith.constant 1.000000e+00 : f32
    %622 = vector.broadcast %cst_156 : f32 to vector<1x32xf32>
    %623 = arith.addf %622, %621 : vector<1x32xf32>
    %624 = arith.divf %622, %623 : vector<1x32xf32>
    %625 = vector.extract_strided_slice %614 {offsets = [0, 32], sizes = [1, 32], strides = [1, 1]} : vector<1x96xf32> to vector<1x32xf32>
    %626 = vector.extract_strided_slice %616 {offsets = [0, 32], sizes = [1, 32], strides = [1, 1]} : vector<1x96xf32> to vector<1x32xf32>
    %627 = arith.addf %625, %626 : vector<1x32xf32>
    %628 = arith.negf %627 : vector<1x32xf32>
    %629 = math.exp %628 : vector<1x32xf32>
    %cst_157 = arith.constant 1.000000e+00 : f32
    %630 = vector.broadcast %cst_157 : f32 to vector<1x32xf32>
    %631 = arith.addf %630, %629 : vector<1x32xf32>
    %632 = arith.divf %630, %631 : vector<1x32xf32>
    %633 = vector.extract_strided_slice %614 {offsets = [0, 64], sizes = [1, 32], strides = [1, 1]} : vector<1x96xf32> to vector<1x32xf32>
    %634 = vector.extract_strided_slice %616 {offsets = [0, 64], sizes = [1, 32], strides = [1, 1]} : vector<1x96xf32> to vector<1x32xf32>
    %635 = arith.mulf %624, %634 : vector<1x32xf32>
    %636 = arith.addf %633, %635 : vector<1x32xf32>
    %637 = math.tanh %636 : vector<1x32xf32>
    %cst_158 = arith.constant 1.000000e+00 : f32
    %638 = vector.broadcast %cst_158 : f32 to vector<1x32xf32>
    %639 = arith.subf %638, %632 : vector<1x32xf32>
    %640 = arith.mulf %639, %637 : vector<1x32xf32>
    %641 = arith.mulf %632, %562 : vector<1x32xf32>
    %642 = arith.addf %640, %641 : vector<1x32xf32>
    %643 = arith.truncf %642 : vector<1x32xf32> to vector<1x32xbf16>
    %cst_159 = arith.constant dense<0.000000e+00> : vector<1x128xf32>
    %644 = tpu.matmul %643, %7, %cst_159 {dimension_numbers = #tpu.dot_dimension_numbers<[1], [0], [0], [1], [0, 0, 1, 1], [], []>} : vector<1x32xbf16>, vector<32x128xbf16>, vector<1x128xf32> -> vector<1x128xf32>
    %645 = arith.addf %644, %12 : vector<1x128xf32>
    %cst_160 = arith.constant dense<0xFF800000> : vector<1xf32>
    %646 = vector.multi_reduction <maximumf>, %645, %cst_160 [1] : vector<1x128xf32> to vector<1xf32>
    %647 = vector.shape_cast %646 : vector<1xf32> to vector<1x1xf32>
    %648 = vector.broadcast %647 : vector<1x1xf32> to vector<1x128xf32>
    %649 = arith.subf %645, %648 : vector<1x128xf32>
    %650 = math.exp %649 : vector<1x128xf32>
    %cst_161 = arith.constant dense<0.000000e+00> : vector<1xf32>
    %651 = vector.multi_reduction <add>, %650, %cst_161 [1] : vector<1x128xf32> to vector<1xf32>
    %652 = vector.shape_cast %651 : vector<1xf32> to vector<1x1xf32>
    %653 = math.log %652 : vector<1x1xf32>
    %654 = vector.broadcast %653 : vector<1x1xf32> to vector<1x128xf32>
    %655 = arith.subf %649, %654 : vector<1x128xf32>
    %656 = arith.index_cast %c7_i32 : i32 to index
    %c0_162 = arith.constant 0 : index
    %657 = vector.load %arg4[%656, %c0_162] : memref<8x128xf32, #tpu.memory_space<vmem>>, vector<1x128xf32>
    tpu.vector_store %arg4[%656, %c0_162], %655 {strides = array<i32>} : memref<8x128xf32, #tpu.memory_space<vmem>>, vector<1x128xf32>,
    %658 = arith.index_cast %c7_i32 : i32 to index
    %c0_163 = arith.constant 0 : index
    %659 = vector.load %arg5[%658, %c0_163] : memref<8x128xf32, #tpu.memory_space<vmem>>, vector<1x128xf32>
    tpu.vector_store %arg5[%658, %c0_163], %603 {strides = array<i32>} : memref<8x128xf32, #tpu.memory_space<vmem>>, vector<1x128xf32>,
    %c8_i32 = arith.constant 8 : i32
    %c0_164 = arith.constant 0 : index
    %c0_165 = arith.constant 0 : index
    %660 = vector.load %arg6[%c0_164, %c0_165] : memref<1x32xf32, #tpu.memory_space<vmem>>, vector<1x32xf32>
    tpu.vector_store %arg6[%c0_164, %c0_165], %642 {strides = array<i32>} : memref<1x32xf32, #tpu.memory_space<vmem>>, vector<1x32xf32>,
    return
  }
}

</mosaic_0001>

<llo_original>
// kernel: tpu_custom_call.1
$region0: #{tpu_custom_call.1}
  #allocation0 [shape = 'u32[]', space=smem, size = 0x4, offset = 0x4, fixed_abs, tag = 'smem constant byte address 0x4 - core index']
  #allocation1 [shape = 'u32[144,128]{1,0:T(1,128)}', space=vmem, size = 0x12000, scoped, tag = 'internal scratch']
  %s0 = inlined_call_operand.hbm [shape: s32[8], index: 0, kind: input, shape index: {}]
  %s1 = inlined_call_operand.vmem [shape: f32[1,32], index: 1, kind: input, shape index: {}]
  %s2 = inlined_call_operand.hbm [shape: f32[16,32], index: 2, kind: input, shape index: {}]
  %s3 = inlined_call_operand.hbm [shape: f32[232,128], index: 3, kind: input, shape index: {}]
  %s4 = inlined_call_operand.hbm [shape: f32[8,128], index: 4, kind: output, shape index: {0}]
  %s5 = inlined_call_operand.hbm [shape: f32[8,128], index: 5, kind: output, shape index: {1}]
  %s6 = inlined_call_operand.hbm [shape: f32[1,32], index: 6, kind: output, shape index: {2}]
  %7 = xla_tuple %s4, %s5, %s6
  %s8 = sld [smem:[#allocation0]]
  $region54: #{tpu_custom_call.1} parent=0
    _
  %s10 = ssub.s32 1, %s8
  %s11 = scalar_select 0, %s10, %s8
  $region1: #{tpu_custom_call.1} parent=0
    #allocation2 [shape = 'u8[512]{0}', space=smem, size = 0x200, scoped, tag = 'input window, operand 0, single buffered']
    #allocation3 [shape = 's32[1]{0}', space=sflag, size = 0x4, scoped, tag = 'scoped memory for tpu_custom_call.1']
    #allocation4 [shape = 's32[1]{0}', space=sflag, size = 0x4, scoped, tag = 'scoped memory for tpu_custom_call.1']
    #allocation5 [shape = 's32[1]{0}', space=sflag, size = 0x4, scoped, tag = 'scoped memory for tpu_custom_call.1']
    #allocation6 [shape = 'u8[8192]{0}', space=vmem, size = 0x2000, scoped, tag = 'input window, operand 2, single buffered']
    #allocation7 [shape = 'u8[118784]{0}', space=vmem, size = 0x1d000, scoped, tag = 'input window, operand 3, single buffered']
    #allocation8 [shape = 's32[1]{0}', space=sflag, size = 0x4, scoped, tag = 'scoped memory for tpu_custom_call.1']
    #allocation9 [shape = 'u8[4096]{0}', space=vmem, size = 0x1000, scoped, tag = 'output window, operand 0, single buffered']
    #allocation10 [shape = 'u8[4096]{0}', space=vmem, size = 0x1000, scoped, tag = 'output window, operand 1, single buffered']
    #allocation11 [shape = 's32[1]{0}', space=sflag, size = 0x4, scoped, tag = 'scoped memory for tpu_custom_call.1']
    #allocation12 [shape = 'u8[512]{0}', space=vmem, size = 0x400, scoped, tag = 'output window, operand 2, single buffered']
    %12 = vsyncpa [#allocation5], 0
    %13 = vsyncpa [#allocation3], 0
    %14 = vsyncpa [#allocation8], 0
    %15 = vsyncpa [#allocation4], 0
    %16 = vsyncpa [#allocation11], 0
    // Predicated region
    $region2: #{tpu_custom_call.1} parent=1 // pred_check
      _
    $region3: #{tpu_custom_call.1} parent=1 // pred_check_branch
      %18 = sbr.rel (0) target = $region5
    $region4: #{tpu_custom_call.1} parent=1 // pred_region
      %s20 = ssub.s32 16, 16
      %21 = vsyncadd [#allocation5], %s20
      %24 = dma.hbm_to_smem %s0, 16, [#allocation2], [#allocation5]
    $region5: #{tpu_custom_call.1} parent=1 // pred_fallthru
      _
    // Predicated region
    $region6: #{tpu_custom_call.1} parent=1 // pred_check
      _
    $region7: #{tpu_custom_call.1} parent=1 // pred_check_branch
      %26 = sbr.rel (0) target = $region9
    $region8: #{tpu_custom_call.1} parent=1 // pred_region
      _
    $region9: #{tpu_custom_call.1} parent=1 // pred_fallthru
      _
    // Predicated region
    $region10: #{tpu_custom_call.1} parent=1 // pred_check
      _
    $region11: #{tpu_custom_call.1} parent=1 // pred_check_branch
      %28 = sbr.rel (0) target = $region13
    $region12: #{tpu_custom_call.1} parent=1 // pred_region
      %s30 = ssub.s32 256, 256
      %31 = vsyncadd [#allocation3], %s30
      %s32 = sshll.u32 [#allocation6], 4
      %s33 = int_to_ptr.vmem [resolvable:$true] %s32
      %38 = dma.hbm_to_vmem [thread:$0]  %s2, 256, %s33, [#allocation3], 128, 128, 8
    $region13: #{tpu_custom_call.1} parent=1 // pred_fallthru
      _
    // Predicated region
    $region14: #{tpu_custom_call.1} parent=1 // pred_check
      _
    $region15: #{tpu_custom_call.1} parent=1 // pred_check_branch
      %40 = sbr.rel (0) target = $region17
    $region16: #{tpu_custom_call.1} parent=1 // pred_region
      %s42 = ssub.s32 3712, 3712
      %43 = vsyncadd [#allocation8], %s42
      %s44 = sshll.u32 [#allocation7], 4
      %s45 = int_to_ptr.vmem [resolvable:$true] %s44
      %50 = dma.hbm_to_vmem [thread:$0]  %s3, 3712, %s45, [#allocation8], 128, 128, 8
    $region17: #{tpu_custom_call.1} parent=1 // pred_fallthru
      _
    // Predicated region
    $region18: #{tpu_custom_call.1} parent=1 // pred_check
      _
    $region19: #{tpu_custom_call.1} parent=1 // pred_check_branch
      %52 = sbr.rel (0) target = $region21
    $region20: #{tpu_custom_call.1} parent=1 // pred_region
      %53 = dma.done [#allocation5], 16
    $region21: #{tpu_custom_call.1} parent=1 // pred_fallthru
      _
    // Predicated region
    $region22: #{tpu_custom_call.1} parent=1 // pred_check
      _
    $region23: #{tpu_custom_call.1} parent=1 // pred_check_branch
      %55 = sbr.rel (0) target = $region25
    $region24: #{tpu_custom_call.1} parent=1 // pred_region
      %56 = dma.done [#allocation3], 256
    $region25: #{tpu_custom_call.1} parent=1 // pred_fallthru
      _
    // Predicated region
    $region26: #{tpu_custom_call.1} parent=1 // pred_check
      _
    $region27: #{tpu_custom_call.1} parent=1 // pred_check_branch
      %58 = sbr.rel (0) target = $region29
    $region28: #{tpu_custom_call.1} parent=1 // pred_region
      %59 = dma.done [#allocation8], 3712
    $region29: #{tpu_custom_call.1} parent=1 // pred_fallthru
      _
    %60 = sfence
    %v62 = vld [vmem:[#allocation7 + $0x40] sm:$0xff]
    %v63 = vld [vmem:[#allocation7 + $0x48] sm:$0xff]
    %v64 = vld [vmem:[#allocation7 + $0x50] sm:$0xff]
    %v65 = vld [vmem:[#allocation7 + $0x58] sm:$0xff]
    %v66 = vpack.c.bf16 %v63, %v62
    %v67 = vpack.c.bf16 %v65, %v64
    %v68 = vld [vmem:[#allocation7 + $0x60] sm:$0xff]
    %v69 = vld [vmem:[#allocation7 + $0x68] sm:$0xff]
    %v70 = vld [vmem:[#allocation7 + $0x70] sm:$0xff]
    %v71 = vld [vmem:[#allocation7 + $0x78] sm:$0xff]
    %v72 = vpack.c.bf16 %v69, %v68
    %v73 = vpack.c.bf16 %v71, %v70
    %v74 = vld [vmem:[#allocation7 + $0xa0] sm:$0xff]
    %v75 = vld [vmem:[#allocation7 + $0xa8] sm:$0xff]
    %v76 = vld [vmem:[#allocation7 + $0xb0] sm:$0xff]
    %v77 = vld [vmem:[#allocation7 + $0xb8] sm:$0xff]
    %v78 = vpack.c.bf16 %v75, %v74
    %v79 = vpack.c.bf16 %v77, %v76
    %v80 = vld [vmem:[#allocation7 + $0xc0] sm:$0xff]
    %v81 = vld [vmem:[#allocation7 + $0xc8] sm:$0xff]
    %v82 = vld [vmem:[#allocation7 + $0xd0] sm:$0xff]
    %v83 = vld [vmem:[#allocation7 + $0xd8] sm:$0xff]
    %v84 = vpack.c.bf16 %v81, %v80
    %v85 = vpack.c.bf16 %v83, %v82
    %v86 = vld [vmem:[#allocation7 + $0xe0] sm:$0x1]
    %v87 = vld [vmem:[#allocation7 + $0xe1] sm:$0x1]
    %v88 = vld [vmem:[#allocation7 + $0xe2] sm:$0x1]
    %v89 = vld [vmem:[#allocation7 + $0xe3] sm:$0x1]
    %v90 = vld [vmem:[#allocation7 + $0xe4] sm:$0x1]
    %v91 = vld [vmem:[#allocation7 + $0x80] sm:$0xff]
    %v92 = vld [vmem:[#allocation7 + $0x88] sm:$0xff]
    %v93 = vld [vmem:[#allocation7 + $0x90] sm:$0xff]
    %v94 = vld [vmem:[#allocation7 + $0x98] sm:$0xff]
    %v95 = vpack.c.bf16 %v92, %v91
    %v96 = vpack.c.bf16 %v94, %v93
    %v97 = vld [vmem:[#allocation6] sm:$0xff]
    %v98 = vld [vmem:[#allocation6 + $0x8] sm:$0xff]
    %v99 = vpack.c.bf16 %v98, %v97
    %vm100 = vcmask 261120
    %v102 = vsel %vm100, %v99, 0
    %104 = vmatprep.subr.bf16.mxu0 0
    %105 = vmatpush1.bf16.msra.mxu0 %v95
    %106 = vmatprep.subr.bf16.mxu0 0
    %107 = vmatpush1.bf16.msra.mxu0 %v96
    %108 = vmatprep.subr.bf16.mxu0 0
    %109 = vmatpush1.bf16.msra.mxu0 0
    %110 = vmatprep.subr.bf16.mxu0 0
    %111 = vmatpush1.bf16.msra.mxu0 0
    %112 = vmatprep.subr.bf16.mxu0 0
    %113 = vmatpush1.bf16.msra.mxu0 0
    %114 = vmatprep.subr.bf16.mxu0 0
    %115 = vmatpush1.bf16.msra.mxu0 0
    %116 = vmatprep.subr.bf16.mxu0 0
    %117 = vmatpush1.bf16.msra.mxu0 0
    %118 = vmatprep.subr.bf16.mxu0 0
    %119 = vmatpush1.bf16.msra.mxu0 0
    %120 = vmatprep.subr.bf16.mxu0 0
    %121 = vmatpush1.bf16.msra.mxu0 0
    %122 = vmatprep.subr.bf16.mxu0 0
    %123 = vmatpush1.bf16.msra.mxu0 0
    %124 = vmatprep.subr.bf16.mxu0 0
    %125 = vmatpush1.bf16.msra.mxu0 0
    %126 = vmatprep.subr.bf16.mxu0 0
    %127 = vmatpush1.bf16.msra.mxu0 0
    %128 = vmatprep.subr.bf16.mxu0 0
    %129 = vmatpush1.bf16.msra.mxu0 0
    %130 = vmatprep.subr.bf16.mxu0 0
    %131 = vmatpush1.bf16.msra.mxu0 0
    %132 = vmatprep.subr.bf16.mxu0 0
    %133 = vmatpush1.bf16.msra.mxu0 0
    %134 = vmatprep.subr.bf16.mxu0 0
    %135 = vmatpush1.bf16.msra.mxu0 0
    %136 = vmatprep.mubr.bf16.mxu0 0
    %137 = vmatmul.mubr.bf16.gmra.mrb[0].mxu0 %v102
    %v138 = vpop.f32.mrb[0].mxu0
    %v139 = vadd.f32 0.0, %v138
    %v140 = vpop.f32.mrb[0].mxu0
    %v141 = vpop.f32.mrb[0].mxu0
    %v142 = vadd.f32 0.0, %v141
    %v143 = vpop.f32.mrb[0].mxu0
    %144 = vdwg.mxu0
    %v145 = vpack.c.bf16 %v142, %v139
    %v146 = vld [vmem:[%s1] sm:$0x1]
    %s147 = sld [smem:[#allocation2]]
    %p148 = scmp.gt.s32.totalorder %s147, 0
    %s149 = scalar_select %p148, %s147, 0
    %p150 = scmp.lt.s32.totalorder %s149, 63
    %s151 = scalar_select %p150, %s149, 63
    %s152 = scalar_lea.vmem [#allocation7], %s151
    %v153 = vld [vmem:[%s152] sm:$0x1]
    %v154 = vpack.c.bf16 %v153, %v153
    %v155 = vpack.c.bf16 %v146, %v146
    %v157 = vsel %vm100, %v154, 0
    %159 = vmatprep.subr.bf16.mxu0 0
    %160 = vmatpush1.bf16.msra.mxu0 %v66
    %161 = vmatprep.subr.bf16.mxu0 0
    %162 = vmatpush1.bf16.msra.mxu0 %v67
    %163 = vmatprep.subr.bf16.mxu0 0
    %164 = vmatpush1.bf16.msra.mxu0 0
    %165 = vmatprep.subr.bf16.mxu0 0
    %166 = vmatpush1.bf16.msra.mxu0 0
    %167 = vmatprep.subr.bf16.mxu0 0
    %168 = vmatpush1.bf16.msra.mxu0 0
    %169 = vmatprep.subr.bf16.mxu0 0
    %170 = vmatpush1.bf16.msra.mxu0 0
    %171 = vmatprep.subr.bf16.mxu0 0
    %172 = vmatpush1.bf16.msra.mxu0 0
    %173 = vmatprep.subr.bf16.mxu0 0
    %174 = vmatpush1.bf16.msra.mxu0 0
    %175 = vmatprep.subr.bf16.mxu0 0
    %176 = vmatpush1.bf16.msra.mxu0 0
    %177 = vmatprep.subr.bf16.mxu0 0
    %178 = vmatpush1.bf16.msra.mxu0 0
    %179 = vmatprep.subr.bf16.mxu0 0
    %180 = vmatpush1.bf16.msra.mxu0 0
    %181 = vmatprep.subr.bf16.mxu0 0
    %182 = vmatpush1.bf16.msra.mxu0 0
    %183 = vmatprep.subr.bf16.mxu0 0
    %184 = vmatpush1.bf16.msra.mxu0 0
    %185 = vmatprep.subr.bf16.mxu0 0
    %186 = vmatpush1.bf16.msra.mxu0 0
    %187 = vmatprep.subr.bf16.mxu0 0
    %188 = vmatpush1.bf16.msra.mxu0 0
    %189 = vmatprep.subr.bf16.mxu0 0
    %190 = vmatpush1.bf16.msra.mxu0 0
    %191 = vmatprep.mubr.bf16.mxu0 0
    %192 = vmatmul.mubr.bf16.gmra.mrb[0].mxu0 %v157
    %v193 = vpop.f32.mrb[0].mxu0
    %v194 = vadd.f32 0.0, %v193
    %v195 = vpop.f32.mrb[0].mxu0
    %v196 = vpop.f32.mrb[0].mxu0
    %v197 = vpop.f32.mrb[0].mxu0
    %198 = vdwg.mxu0
    %v200 = vsel %vm100, %v155, 0
    %202 = vmatprep.subr.bf16.mxu0 0
    %203 = vmatpush1.bf16.msra.mxu0 %v72
    %204 = vmatprep.subr.bf16.mxu0 0
    %205 = vmatpush1.bf16.msra.mxu0 %v73
    %206 = vmatprep.subr.bf16.mxu0 0
    %207 = vmatpush1.bf16.msra.mxu0 0
    %208 = vmatprep.subr.bf16.mxu0 0
    %209 = vmatpush1.bf16.msra.mxu0 0
    %210 = vmatprep.subr.bf16.mxu0 0
    %211 = vmatpush1.bf16.msra.mxu0 0
    %212 = vmatprep.subr.bf16.mxu0 0
    %213 = vmatpush1.bf16.msra.mxu0 0
    %214 = vmatprep.subr.bf16.mxu0 0
    %215 = vmatpush1.bf16.msra.mxu0 0
    %216 = vmatprep.subr.bf16.mxu0 0
    %217 = vmatpush1.bf16.msra.mxu0 0
    %218 = vmatprep.subr.bf16.mxu0 0
    %219 = vmatpush1.bf16.msra.mxu0 0
    %220 = vmatprep.subr.bf16.mxu0 0
    %221 = vmatpush1.bf16.msra.mxu0 0
    %222 = vmatprep.subr.bf16.mxu0 0
    %223 = vmatpush1.bf16.msra.mxu0 0
    %224 = vmatprep.subr.bf16.mxu0 0
    %225 = vmatpush1.bf16.msra.mxu0 0
    %226 = vmatprep.subr.bf16.mxu0 0
    %227 = vmatpush1.bf16.msra.mxu0 0
    %228 = vmatprep.subr.bf16.mxu0 0
    %229 = vmatpush1.bf16.msra.mxu0 0
    %230 = vmatprep.subr.bf16.mxu0 0
    %231 = vmatpush1.bf16.msra.mxu0 0
    %232 = vmatprep.subr.bf16.mxu0 0
    %233 = vmatpush1.bf16.msra.mxu0 0
    %234 = vmatprep.mubr.bf16.mxu0 0
    %235 = vmatmul.mubr.bf16.gmra.mrb[0].mxu0 %v200
    %v236 = vpop.f32.mrb[0].mxu0
    %v237 = vadd.f32 0.0, %v236
    %v238 = vpop.f32.mrb[0].mxu0
    %v239 = vpop.f32.mrb[0].mxu0
    %v240 = vpop.f32.mrb[0].mxu0
    %241 = vdwg.mxu0
    %v242 = vadd.f32 %v194, %v237
    %v243 = vadd.f32 %v242, %v86
    %vm244 = vcmask 1040384
    %v245 = vsel %vm244, %v243, -inf
    %246 = vmax.xlane.f32.xlu0 %v245
    %v247 = vpop.xlane.xlu0 %246
    %v248 = vsub.f32 %v243, %v247
    %v249 = vmul.f32 %v248, 1.442695
    %v250 = vpow.pop %v249
    %v251 = vsel %vm244, %v250, 0.0
    %252 = vadd.xlane.f32.xlu0 %v251
    %v253 = vpop.xlane.xlu0 %252
    %v254 = vrcp.pop %v253
    %v255 = vmul.f32 %v250, %v254
    %v256 = vpack.c.bf16 %v255, %v255
    %258 = vrot.lane.b32.xlu0 %v256, 32
    %v259 = vpop.permute.xlu0 %258
    %vm260 = vcmask 130048
    %v262 = vsel %vm260, %v259, 0
    %264 = vmatprep.subr.bf16.mxu0 0
    %265 = vmatpush1.bf16.msra.mxu0 %v145
    %266 = vmatprep.subr.bf16.mxu0 0
    %267 = vmatpush1.bf16.msra.mxu0 0
    %268 = vmatprep.subr.bf16.mxu0 0
    %269 = vmatpush1.bf16.msra.mxu0 0
    %270 = vmatprep.subr.bf16.mxu0 0
    %271 = vmatpush1.bf16.msra.mxu0 0
    %272 = vmatprep.subr.bf16.mxu0 0
    %273 = vmatpush1.bf16.msra.mxu0 0
    %274 = vmatprep.subr.bf16.mxu0 0
    %275 = vmatpush1.bf16.msra.mxu0 0
    %276 = vmatprep.subr.bf16.mxu0 0
    %277 = vmatpush1.bf16.msra.mxu0 0
    %278 = vmatprep.subr.bf16.mxu0 0
    %279 = vmatpush1.bf16.msra.mxu0 0
    %280 = vmatprep.subr.bf16.mxu0 0
    %281 = vmatpush1.bf16.msra.mxu0 0
    %282 = vmatprep.subr.bf16.mxu0 0
    %283 = vmatpush1.bf16.msra.mxu0 0
    %284 = vmatprep.subr.bf16.mxu0 0
    %285 = vmatpush1.bf16.msra.mxu0 0
    %286 = vmatprep.subr.bf16.mxu0 0
    %287 = vmatpush1.bf16.msra.mxu0 0
    %288 = vmatprep.subr.bf16.mxu0 0
    %289 = vmatpush1.bf16.msra.mxu0 0
    %290 = vmatprep.subr.bf16.mxu0 0
    %291 = vmatpush1.bf16.msra.mxu0 0
    %292 = vmatprep.subr.bf16.mxu0 0
    %293 = vmatpush1.bf16.msra.mxu0 0
    %294 = vmatprep.subr.bf16.mxu0 0
    %295 = vmatpush1.bf16.msra.mxu0 0
    %296 = vmatprep.mubr.bf16.mxu0 0
    %297 = vmatmul.mubr.bf16.gmra.mrb[0].mxu0 %v262
    %v298 = vpop.f32.mrb[0].mxu0
    %v299 = vadd.f32 0.0, %v298
    %v300 = vpop.f32.mrb[0].mxu0
    %v301 = vpop.f32.mrb[0].mxu0
    %v302 = vpop.f32.mrb[0].mxu0
    %303 = vdwg.mxu0
    %v304 = vadd.f32 %v194, %v299
    %v305 = vadd.f32 %v304, %v87
    %v306 = vmax.f32 %v305, 0.0
    %v307 = vpack.c.bf16 %v306, %v306
    %v309 = vsel %vm100, %v307, 0
    %311 = vmatprep.subr.bf16.mxu0 0
    %312 = vmatpush1.bf16.msra.mxu0 %v78
    %313 = vmatprep.subr.bf16.mxu0 0
    %314 = vmatpush1.bf16.msra.mxu0 %v79
    %315 = vmatprep.subr.bf16.mxu0 0
    %316 = vmatpush1.bf16.msra.mxu0 0
    %317 = vmatprep.subr.bf16.mxu0 0
    %318 = vmatpush1.bf16.msra.mxu0 0
    %319 = vmatprep.subr.bf16.mxu0 0
    %320 = vmatpush1.bf16.msra.mxu0 0
    %321 = vmatprep.subr.bf16.mxu0 0
    %322 = vmatpush1.bf16.msra.mxu0 0
    %323 = vmatprep.subr.bf16.mxu0 0
    %324 = vmatpush1.bf16.msra.mxu0 0
    %325 = vmatprep.subr.bf16.mxu0 0
    %326 = vmatpush1.bf16.msra.mxu0 0
    %327 = vmatprep.subr.bf16.mxu0 0
    %328 = vmatpush1.bf16.msra.mxu0 0
    %329 = vmatprep.subr.bf16.mxu0 0
    %330 = vmatpush1.bf16.msra.mxu0 0
    %331 = vmatprep.subr.bf16.mxu0 0
    %332 = vmatpush1.bf16.msra.mxu0 0
    %333 = vmatprep.subr.bf16.mxu0 0
    %334 = vmatpush1.bf16.msra.mxu0 0
    %335 = vmatprep.subr.bf16.mxu0 0
    %336 = vmatpush1.bf16.msra.mxu0 0
    %337 = vmatprep.subr.bf16.mxu0 0
    %338 = vmatpush1.bf16.msra.mxu0 0
    %339 = vmatprep.subr.bf16.mxu0 0
    %340 = vmatpush1.bf16.msra.mxu0 0
    %341 = vmatprep.subr.bf16.mxu0 0
    %342 = vmatpush1.bf16.msra.mxu0 0
    %343 = vmatprep.mubr.bf16.mxu0 0
    %344 = vmatmul.mubr.bf16.gmra.mrb[0].mxu0 %v309
    %v345 = vpop.f32.mrb[0].mxu0
    %v346 = vadd.f32 %v88, %v345
    %v347 = vpop.f32.mrb[0].mxu0
    %v348 = vpop.f32.mrb[0].mxu0
    %v349 = vpop.f32.mrb[0].mxu0
    %350 = vdwg.mxu0
    %v351 = vadd.f32 %v237, %v89
    %v352 = vadd.f32 %v346, %v351
    %v353 = vxor.u32 %v352, 2147483648
    %v354 = vmul.f32 %v353, 1.442695
    %v355 = vpow.pop %v354
    %v356 = vadd.f32 %v355, 1.0
    %v357 = vrcp.pop %v356
    %v358 = vmul.f32 1.0, %v357
    %360 = vrot.lane.b32.xlu0 %v351, 64
    %v361 = vpop.permute.xlu0 %360
    %v363 = vmul.f32 %v358, %v361
    %365 = vrot.lane.b32.xlu0 %v363, 64
    %v366 = vpop.permute.xlu0 %365
    %v368 = vadd.f32 %v346, %v366
    %v369 = vtanh.pop %v368
    %v370 = vsub.f32 1.0, %v358
    %372 = vrot.lane.b32.xlu0 %v369, 96
    %v373 = vpop.permute.xlu0 %372
    %v375 = vmul.f32 %v370, %v373
    %v377 = vlaneseq
    %v378 = vshrl.u32 %v377, 7
    %v379 = vsub.s32 0, %v378
    %v380 = vrot.slane %v146, %v379
    %381 = vrot.lane.b32.xlu0 %v380, 32
    %v382 = vpop.permute.xlu0 %381
    %v384 = vmul.f32 %v358, %v382
    %v385 = vadd.f32 %v375, %v384
    %v386 = vpack.c.bf16 %v385, %v385
    %388 = vrot.lane.b32.xlu0 %v386, 96
    %v389 = vpop.permute.xlu0 %388
    %v391 = vsel %vm100, %v389, 0
    %393 = vmatprep.subr.bf16.mxu0 0
    %394 = vmatpush1.bf16.msra.mxu0 %v84
    %395 = vmatprep.subr.bf16.mxu0 0
    %396 = vmatpush1.bf16.msra.mxu0 %v85
    %397 = vmatprep.subr.bf16.mxu0 0
    %398 = vmatpush1.bf16.msra.mxu0 0
    %399 = vmatprep.subr.bf16.mxu0 0
    %400 = vmatpush1.bf16.msra.mxu0 0
    %401 = vmatprep.subr.bf16.mxu0 0
    %402 = vmatpush1.bf16.msra.mxu0 0
    %403 = vmatprep.subr.bf16.mxu0 0
    %404 = vmatpush1.bf16.msra.mxu0 0
    %405 = vmatprep.subr.bf16.mxu0 0
    %406 = vmatpush1.bf16.msra.mxu0 0
    %407 = vmatprep.subr.bf16.mxu0 0
    %408 = vmatpush1.bf16.msra.mxu0 0
    %409 = vmatprep.subr.bf16.mxu0 0
    %410 = vmatpush1.bf16.msra.mxu0 0
    %411 = vmatprep.subr.bf16.mxu0 0
    %412 = vmatpush1.bf16.msra.mxu0 0
    %413 = vmatprep.subr.bf16.mxu0 0
    %414 = vmatpush1.bf16.msra.mxu0 0
    %415 = vmatprep.subr.bf16.mxu0 0
    %416 = vmatpush1.bf16.msra.mxu0 0
    %417 = vmatprep.subr.bf16.mxu0 0
    %418 = vmatpush1.bf16.msra.mxu0 0
    %419 = vmatprep.subr.bf16.mxu0 0
    %420 = vmatpush1.bf16.msra.mxu0 0
    %421 = vmatprep.subr.bf16.mxu0 0
    %422 = vmatpush1.bf16.msra.mxu0 0
    %423 = vmatprep.subr.bf16.mxu0 0
    %424 = vmatpush1.bf16.msra.mxu0 0
    %425 = vmatprep.mubr.bf16.mxu0 0
    %426 = vmatmul.mubr.bf16.gmra.mrb[0].mxu0 %v391
    %v427 = vpop.f32.mrb[0].mxu0
    %v428 = vadd.f32 %v90, %v427
    %v429 = vpop.f32.mrb[0].mxu0
    %v430 = vpop.f32.mrb[0].mxu0
    %v431 = vpop.f32.mrb[0].mxu0
    %432 = vdwg.mxu0
    %v433 = vsel %vm244, %v428, -inf
    %434 = vmax.xlane.f32.xlu0 %v433
    %v435 = vpop.xlane.xlu0 %434
    %v436 = vsub.f32 %v428, %v435
    %v437 = vmul.f32 %v436, 1.442695
    %v438 = vpow.pop %v437
    %v439 = vsel %vm244, %v438, 0.0
    %440 = vadd.xlane.f32.xlu0 %v439
    %v441 = vpop.xlane.xlu0 %440
    %v442 = vlog2.pop %v441
    %v443 = vmul.f32 %v442, 0.6931472
    %v444 = vsub.f32 %v436, %v443
    %445 = vst [vmem:[#allocation9] sm:$0x1] %v444
    %446 = vst [vmem:[#allocation10] sm:$0x1] %v255
    %s447 = sld [smem:[#allocation2 + $0x1]]
    %p448 = scmp.gt.s32.totalorder %s447, 0
    %s449 = scalar_select %p448, %s447, 0
    %p450 = scmp.lt.s32.totalorder %s449, 63
    %s451 = scalar_select %p450, %s449, 63
    %s452 = scalar_lea.vmem [#allocation7], %s451
    %v453 = vld [vmem:[%s452] sm:$0x1]
    %v454 = vpack.c.bf16 %v453, %v453
    %v456 = vsel %vm100, %v454, 0
    %458 = vmatprep.subr.bf16.mxu0 0
    %459 = vmatpush1.bf16.msra.mxu0 %v66
    %460 = vmatprep.subr.bf16.mxu0 0
    %461 = vmatpush1.bf16.msra.mxu0 %v67
    %462 = vmatprep.subr.bf16.mxu0 0
    %463 = vmatpush1.bf16.msra.mxu0 0
    %464 = vmatprep.subr.bf16.mxu0 0
    %465 = vmatpush1.bf16.msra.mxu0 0
    %466 = vmatprep.subr.bf16.mxu0 0
    %467 = vmatpush1.bf16.msra.mxu0 0
    %468 = vmatprep.subr.bf16.mxu0 0
    %469 = vmatpush1.bf16.msra.mxu0 0
    %470 = vmatprep.subr.bf16.mxu0 0
    %471 = vmatpush1.bf16.msra.mxu0 0
    %472 = vmatprep.subr.bf16.mxu0 0
    %473 = vmatpush1.bf16.msra.mxu0 0
    %474 = vmatprep.subr.bf16.mxu0 0
    %475 = vmatpush1.bf16.msra.mxu0 0
    %476 = vmatprep.subr.bf16.mxu0 0
    %477 = vmatpush1.bf16.msra.mxu0 0
    %478 = vmatprep.subr.bf16.mxu0 0
    %479 = vmatpush1.bf16.msra.mxu0 0
    %480 = vmatprep.subr.bf16.mxu0 0
    %481 = vmatpush1.bf16.msra.mxu0 0
    %482 = vmatprep.subr.bf16.mxu0 0
    %483 = vmatpush1.bf16.msra.mxu0 0
    %484 = vmatprep.subr.bf16.mxu0 0
    %485 = vmatpush1.bf16.msra.mxu0 0
    %486 = vmatprep.subr.bf16.mxu0 0
    %487 = vmatpush1.bf16.msra.mxu0 0
    %488 = vmatprep.subr.bf16.mxu0 0
    %489 = vmatpush1.bf16.msra.mxu0 0
    %490 = vmatprep.mubr.bf16.mxu0 0
    %491 = vmatmul.mubr.bf16.gmra.mrb[0].mxu0 %v456
    %v492 = vpop.f32.mrb[0].mxu0
    %v493 = vadd.f32 0.0, %v492
    %v494 = vpop.f32.mrb[0].mxu0
    %v495 = vpop.f32.mrb[0].mxu0
    %v496 = vpop.f32.mrb[0].mxu0
    %497 = vdwg.mxu0
    %498 = vmatprep.subr.bf16.mxu0 0
    %499 = vmatpush1.bf16.msra.mxu0 %v72
    %500 = vmatprep.subr.bf16.mxu0 0
    %501 = vmatpush1.bf16.msra.mxu0 %v73
    %502 = vmatprep.subr.bf16.mxu0 0
    %503 = vmatpush1.bf16.msra.mxu0 0
    %504 = vmatprep.subr.bf16.mxu0 0
    %505 = vmatpush1.bf16.msra.mxu0 0
    %506 = vmatprep.subr.bf16.mxu0 0
    %507 = vmatpush1.bf16.msra.mxu0 0
    %508 = vmatprep.subr.bf16.mxu0 0
    %509 = vmatpush1.bf16.msra.mxu0 0
    %510 = vmatprep.subr.bf16.mxu0 0
    %511 = vmatpush1.bf16.msra.mxu0 0
    %512 = vmatprep.subr.bf16.mxu0 0
    %513 = vmatpush1.bf16.msra.mxu0 0
    %514 = vmatprep.subr.bf16.mxu0 0
    %515 = vmatpush1.bf16.msra.mxu0 0
    %516 = vmatprep.subr.bf16.mxu0 0
    %517 = vmatpush1.bf16.msra.mxu0 0
    %518 = vmatprep.subr.bf16.mxu0 0
    %519 = vmatpush1.bf16.msra.mxu0 0
    %520 = vmatprep.subr.bf16.mxu0 0
    %521 = vmatpush1.bf16.msra.mxu0 0
    %522 = vmatprep.subr.bf16.mxu0 0
    %523 = vmatpush1.bf16.msra.mxu0 0
    %524 = vmatprep.subr.bf16.mxu0 0
    %525 = vmatpush1.bf16.msra.mxu0 0
    %526 = vmatprep.subr.bf16.mxu0 0
    %527 = vmatpush1.bf16.msra.mxu0 0
    %528 = vmatprep.subr.bf16.mxu0 0
    %529 = vmatpush1.bf16.msra.mxu0 0
    %530 = vmatprep.mubr.bf16.mxu0 0
    %531 = vmatmul.mubr.bf16.gmra.mrb[0].mxu0 %v391
    %v532 = vpop.f32.mrb[0].mxu0
    %v533 = vadd.f32 0.0, %v532
    %v534 = vpop.f32.mrb[0].mxu0
    %v535 = vpop.f32.mrb[0].mxu0
    %v536 = vpop.f32.mrb[0].mxu0
    %537 = vdwg.mxu0
    %v538 = vadd.f32 %v493, %v533
    %v539 = vadd.f32 %v538, %v86
    %v540 = vsel %vm244, %v539, -inf
    %541 = vmax.xlane.f32.xlu0 %v540
    %v542 = vpop.xlane.xlu0 %541
    %v543 = vsub.f32 %v539, %v542
    %v544 = vmul.f32 %v543, 1.442695
    %v545 = vpow.pop %v544
    %v546 = vsel %vm244, %v545, 0.0
    %547 = vadd.xlane.f32.xlu0 %v546
    %v548 = vpop.xlane.xlu0 %547
    %v549 = vrcp.pop %v548
    %v550 = vmul.f32 %v545, %v549
    %v551 = vpack.c.bf16 %v550, %v550
    %553 = vrot.lane.b32.xlu0 %v551, 32
    %v554 = vpop.permute.xlu0 %553
    %v556 = vsel %vm260, %v554, 0
    %558 = vmatprep.subr.bf16.mxu0 0
    %559 = vmatpush1.bf16.msra.mxu0 %v145
    %560 = vmatprep.subr.bf16.mxu0 0
    %561 = vmatpush1.bf16.msra.mxu0 0
    %562 = vmatprep.subr.bf16.mxu0 0
    %563 = vmatpush1.bf16.msra.mxu0 0
    %564 = vmatprep.subr.bf16.mxu0 0
    %565 = vmatpush1.bf16.msra.mxu0 0
    %566 = vmatprep.subr.bf16.mxu0 0
    %567 = vmatpush1.bf16.msra.mxu0 0
    %568 = vmatprep.subr.bf16.mxu0 0
    %569 = vmatpush1.bf16.msra.mxu0 0
    %570 = vmatprep.subr.bf16.mxu0 0
    %571 = vmatpush1.bf16.msra.mxu0 0
    %572 = vmatprep.subr.bf16.mxu0 0
    %573 = vmatpush1.bf16.msra.mxu0 0
    %574 = vmatprep.subr.bf16.mxu0 0
    %575 = vmatpush1.bf16.msra.mxu0 0
    %576 = vmatprep.subr.bf16.mxu0 0
    %577 = vmatpush1.bf16.msra.mxu0 0
    %578 = vmatprep.subr.bf16.mxu0 0
    %579 = vmatpush1.bf16.msra.mxu0 0
    %580 = vmatprep.subr.bf16.mxu0 0
    %581 = vmatpush1.bf16.msra.mxu0 0
    %582 = vmatprep.subr.bf16.mxu0 0
    %583 = vmatpush1.bf16.msra.mxu0 0
    %584 = vmatprep.subr.bf16.mxu0 0
    %585 = vmatpush1.bf16.msra.mxu0 0
    %586 = vmatprep.subr.bf16.mxu0 0
    %587 = vmatpush1.bf16.msra.mxu0 0
    %588 = vmatprep.subr.bf16.mxu0 0
    %589 = vmatpush1.bf16.msra.mxu0 0
    %590 = vmatprep.mubr.bf16.mxu0 0
    %591 = vmatmul.mubr.bf16.gmra.mrb[0].mxu0 %v556
    %v592 = vpop.f32.mrb[0].mxu0
    %v593 = vadd.f32 0.0, %v592
    %v594 = vpop.f32.mrb[0].mxu0
    %v595 = vpop.f32.mrb[0].mxu0
    %v596 = vpop.f32.mrb[0].mxu0
    %597 = vdwg.mxu0
    %v598 = vadd.f32 %v493, %v593
    %v599 = vadd.f32 %v598, %v87
    %v600 = vmax.f32 %v599, 0.0
    %v601 = vpack.c.bf16 %v600, %v600
    %v603 = vsel %vm100, %v601, 0
    %605 = vmatprep.subr.bf16.mxu0 0
    %606 = vmatpush1.bf16.msra.mxu0 %v78
    %607 = vmatprep.subr.bf16.mxu0 0
    %608 = vmatpush1.bf16.msra.mxu0 %v79
    %609 = vmatprep.subr.bf16.mxu0 0
    %610 = vmatpush1.bf16.msra.mxu0 0
    %611 = vmatprep.subr.bf16.mxu0 0
    %612 = vmatpush1.bf16.msra.mxu0 0
    %613 = vmatprep.subr.bf16.mxu0 0
    %614 = vmatpush1.bf16.msra.mxu0 0
    %615 = vmatprep.subr.bf16.mxu0 0
    %616 = vmatpush1.bf16.msra.mxu0 0
    %617 = vmatprep.subr.bf16.mxu0 0
    %618 = vmatpush1.bf16.msra.mxu0 0
    %619 = vmatprep.subr.bf16.mxu0 0
    %620 = vmatpush1.bf16.msra.mxu0 0
    %621 = vmatprep.subr.bf16.mxu0 0
    %622 = vmatpush1.bf16.msra.mxu0 0
    %623 = vmatprep.subr.bf16.mxu0 0
    %624 = vmatpush1.bf16.msra.mxu0 0
    %625 = vmatprep.subr.bf16.mxu0 0
    %626 = vmatpush1.bf16.msra.mxu0 0
    %627 = vmatprep.subr.bf16.mxu0 0
    %628 = vmatpush1.bf16.msra.mxu0 0
    %629 = vmatprep.subr.bf16.mxu0 0
    %630 = vmatpush1.bf16.msra.mxu0 0
    %631 = vmatprep.subr.bf16.mxu0 0
    %632 = vmatpush1.bf16.msra.mxu0 0
    %633 = vmatprep.subr.bf16.mxu0 0
    %634 = vmatpush1.bf16.msra.mxu0 0
    %635 = vmatprep.subr.bf16.mxu0 0
    %636 = vmatpush1.bf16.msra.mxu0 0
    %637 = vmatprep.mubr.bf16.mxu0 0
    %638 = vmatmul.mubr.bf16.gmra.mrb[0].mxu0 %v603
    %v639 = vpop.f32.mrb[0].mxu0
    %v640 = vadd.f32 %v88, %v639
    %v641 = vpop.f32.mrb[0].mxu0
    %v642 = vpop.f32.mrb[0].mxu0
    %v643 = vpop.f32.mrb[0].mxu0
    %644 = vdwg.mxu0
    %v645 = vadd.f32 %v533, %v89
    %v646 = vadd.f32 %v640, %v645
    %v647 = vxor.u32 %v646, 2147483648
    %v648 = vmul.f32 %v647, 1.442695
    %v649 = vpow.pop %v648
    %v650 = vadd.f32 %v649, 1.0
    %v651 = vrcp.pop %v650
    %v652 = vmul.f32 1.0, %v651
    %654 = vrot.lane.b32.xlu0 %v645, 64
    %v655 = vpop.permute.xlu0 %654
    %v657 = vmul.f32 %v652, %v655
    %659 = vrot.lane.b32.xlu0 %v657, 64
    %v660 = vpop.permute.xlu0 %659
    %v662 = vadd.f32 %v640, %v660
    %v663 = vtanh.pop %v662
    %v664 = vsub.f32 1.0, %v652
    %666 = vrot.lane.b32.xlu0 %v663, 96
    %v667 = vpop.permute.xlu0 %666
    %v669 = vmul.f32 %v664, %v667
    %v670 = vmul.f32 %v652, %v385
    %v671 = vadd.f32 %v669, %v670
    %v672 = vpack.c.bf16 %v671, %v671
    %674 = vrot.lane.b32.xlu0 %v672, 96
    %v675 = vpop.permute.xlu0 %674
    %v677 = vsel %vm100, %v675, 0
    %679 = vmatprep.subr.bf16.mxu0 0
    %680 = vmatpush1.bf16.msra.mxu0 %v84
    %681 = vmatprep.subr.bf16.mxu0 0
    %682 = vmatpush1.bf16.msra.mxu0 %v85
    %683 = vmatprep.subr.bf16.mxu0 0
    %684 = vmatpush1.bf16.msra.mxu0 0
    %685 = vmatprep.subr.bf16.mxu0 0
    %686 = vmatpush1.bf16.msra.mxu0 0
    %687 = vmatprep.subr.bf16.mxu0 0
    %688 = vmatpush1.bf16.msra.mxu0 0
    %689 = vmatprep.subr.bf16.mxu0 0
    %690 = vmatpush1.bf16.msra.mxu0 0
    %691 = vmatprep.subr.bf16.mxu0 0
    %692 = vmatpush1.bf16.msra.mxu0 0
    %693 = vmatprep.subr.bf16.mxu0 0
    %694 = vmatpush1.bf16.msra.mxu0 0
    %695 = vmatprep.subr.bf16.mxu0 0
    %696 = vmatpush1.bf16.msra.mxu0 0
    %697 = vmatprep.subr.bf16.mxu0 0
    %698 = vmatpush1.bf16.msra.mxu0 0
    %699 = vmatprep.subr.bf16.mxu0 0
    %700 = vmatpush1.bf16.msra.mxu0 0
    %701 = vmatprep.subr.bf16.mxu0 0
    %702 = vmatpush1.bf16.msra.mxu0 0
    %703 = vmatprep.subr.bf16.mxu0 0
    %704 = vmatpush1.bf16.msra.mxu0 0
    %705 = vmatprep.subr.bf16.mxu0 0
    %706 = vmatpush1.bf16.msra.mxu0 0
    %707 = vmatprep.subr.bf16.mxu0 0
    %708 = vmatpush1.bf16.msra.mxu0 0
    %709 = vmatprep.subr.bf16.mxu0 0
    %710 = vmatpush1.bf16.msra.mxu0 0
    %711 = vmatprep.mubr.bf16.mxu0 0
    %712 = vmatmul.mubr.bf16.gmra.mrb[0].mxu0 %v677
    %v713 = vpop.f32.mrb[0].mxu0
    %v714 = vadd.f32 %v90, %v713
    %v715 = vpop.f32.mrb[0].mxu0
    %v716 = vpop.f32.mrb[0].mxu0
    %v717 = vpop.f32.mrb[0].mxu0
    %718 = vdwg.mxu0
    %v719 = vsel %vm244, %v714, -inf
    %720 = vmax.xlane.f32.xlu0 %v719
    %v721 = vpop.xlane.xlu0 %720
    %v722 = vsub.f32 %v714, %v721
    %v723 = vmul.f32 %v722, 1.442695
    %v724 = vpow.pop %v723
    %v725 = vsel %vm244, %v724, 0.0
    %726 = vadd.xlane.f32.xlu0 %v725
    %v727 = vpop.xlane.xlu0 %726
    %v728 = vlog2.pop %v727
    %v729 = vmul.f32 %v728, 0.6931472
    %v730 = vsub.f32 %v722, %v729
    %731 = vst [vmem:[#allocation9 + $0x1] sm:$0x1] %v730
    %732 = vst [vmem:[#allocation10 + $0x1] sm:$0x1] %v550
    %s733 = sld [smem:[#allocation2 + $0x2]]
    %p734 = scmp.gt.s32.totalorder %s733, 0
    %s735 = scalar_select %p734, %s733, 0
    %p736 = scmp.lt.s32.totalorder %s735, 63
    %s737 = scalar_select %p736, %s735, 63
    %s738 = scalar_lea.vmem [#allocation7], %s737
    %v739 = vld [vmem:[%s738] sm:$0x1]
    %v740 = vpack.c.bf16 %v739, %v739
    %v742 = vsel %vm100, %v740, 0
    %744 = vmatprep.subr.bf16.mxu0 0
    %745 = vmatpush1.bf16.msra.mxu0 %v66
    %746 = vmatprep.subr.bf16.mxu0 0
    %747 = vmatpush1.bf16.msra.mxu0 %v67
    %748 = vmatprep.subr.bf16.mxu0 0
    %749 = vmatpush1.bf16.msra.mxu0 0
    %750 = vmatprep.subr.bf16.mxu0 0
    %751 = vmatpush1.bf16.msra.mxu0 0
    %752 = vmatprep.subr.bf16.mxu0 0
    %753 = vmatpush1.bf16.msra.mxu0 0
    %754 = vmatprep.subr.bf16.mxu0 0
    %755 = vmatpush1.bf16.msra.mxu0 0
    %756 = vmatprep.subr.bf16.mxu0 0
    %757 = vmatpush1.bf16.msra.mxu0 0
    %758 = vmatprep.subr.bf16.mxu0 0
    %759 = vmatpush1.bf16.msra.mxu0 0
    %760 = vmatprep.subr.bf16.mxu0 0
    %761 = vmatpush1.bf16.msra.mxu0 0
    %762 = vmatprep.subr.bf16.mxu0 0
    %763 = vmatpush1.bf16.msra.mxu0 0
    %764 = vmatprep.subr.bf16.mxu0 0
    %765 = vmatpush1.bf16.msra.mxu0 0
    %766 = vmatprep.subr.bf16.mxu0 0
    %767 = vmatpush1.bf16.msra.mxu0 0
    %768 = vmatprep.subr.bf16.mxu0 0
    %769 = vmatpush1.bf16.msra.mxu0 0
    %770 = vmatprep.subr.bf16.mxu0 0
    %771 = vmatpush1.bf16.msra.mxu0 0
    %772 = vmatprep.subr.bf16.mxu0 0
    %773 = vmatpush1.bf16.msra.mxu0 0
    %774 = vmatprep.subr.bf16.mxu0 0
    %775 = vmatpush1.bf16.msra.mxu0 0
    %776 = vmatprep.mubr.bf16.mxu0 0
    %777 = vmatmul.mubr.bf16.gmra.mrb[0].mxu0 %v742
    %v778 = vpop.f32.mrb[0].mxu0
    %v779 = vadd.f32 0.0, %v778
    %v780 = vpop.f32.mrb[0].mxu0
    %v781 = vpop.f32.mrb[0].mxu0
    %v782 = vpop.f32.mrb[0].mxu0
    %783 = vdwg.mxu0
    %784 = vmatprep.subr.bf16.mxu0 0
    %785 = vmatpush1.bf16.msra.mxu0 %v72
    %786 = vmatprep.subr.bf16.mxu0 0
    %787 = vmatpush1.bf16.msra.mxu0 %v73
    %788 = vmatprep.subr.bf16.mxu0 0
    %789 = vmatpush1.bf16.msra.mxu0 0
    %790 = vmatprep.subr.bf16.mxu0 0
    %791 = vmatpush1.bf16.msra.mxu0 0
    %792 = vmatprep.subr.bf16.mxu0 0
    %793 = vmatpush1.bf16.msra.mxu0 0
    %794 = vmatprep.subr.bf16.mxu0 0
    %795 = vmatpush1.bf16.msra.mxu0 0
    %796 = vmatprep.subr.bf16.mxu0 0
    %797 = vmatpush1.bf16.msra.mxu0 0
    %798 = vmatprep.subr.bf16.mxu0 0
    %799 = vmatpush1.bf16.msra.mxu0 0
    %800 = vmatprep.subr.bf16.mxu0 0
    %801 = vmatpush1.bf16.msra.mxu0 0
    %802 = vmatprep.subr.bf16.mxu0 0
    %803 = vmatpush1.bf16.msra.mxu0 0
    %804 = vmatprep.subr.bf16.mxu0 0
    %805 = vmatpush1.bf16.msra.mxu0 0
    %806 = vmatprep.subr.bf16.mxu0 0
    %807 = vmatpush1.bf16.msra.mxu0 0
    %808 = vmatprep.subr.bf16.mxu0 0
    %809 = vmatpush1.bf16.msra.mxu0 0
    %810 = vmatprep.subr.bf16.mxu0 0
    %811 = vmatpush1.bf16.msra.mxu0 0
    %812 = vmatprep.subr.bf16.mxu0 0
    %813 = vmatpush1.bf16.msra.mxu0 0
    %814 = vmatprep.subr.bf16.mxu0 0
    %815 = vmatpush1.bf16.msra.mxu0 0
    %816 = vmatprep.mubr.bf16.mxu0 0
    %817 = vmatmul.mubr.bf16.gmra.mrb[0].mxu0 %v677
    %v818 = vpop.f32.mrb[0].mxu0
    %v819 = vadd.f32 0.0, %v818
    %v820 = vpop.f32.mrb[0].mxu0
    %v821 = vpop.f32.mrb[0].mxu0
    %v822 = vpop.f32.mrb[0].mxu0
    %823 = vdwg.mxu0
    %v824 = vadd.f32 %v779, %v819
    %v825 = vadd.f32 %v824, %v86
    %v826 = vsel %vm244, %v825, -inf
    %827 = vmax.xlane.f32.xlu0 %v826
    %v828 = vpop.xlane.xlu0 %827
    %v829 = vsub.f32 %v825, %v828
    %v830 = vmul.f32 %v829, 1.442695
    %v831 = vpow.pop %v830
    %v832 = vsel %vm244, %v831, 0.0
    %833 = vadd.xlane.f32.xlu0 %v832
    %v834 = vpop.xlane.xlu0 %833
    %v835 = vrcp.pop %v834
    %v836 = vmul.f32 %v831, %v835
    %v837 = vpack.c.bf16 %v836, %v836
    %839 = vrot.lane.b32.xlu0 %v837, 32
    %v840 = vpop.permute.xlu0 %839
    %v842 = vsel %vm260, %v840, 0
    %844 = vmatprep.subr.bf16.mxu0 0
    %845 = vmatpush1.bf16.msra.mxu0 %v145
    %846 = vmatprep.subr.bf16.mxu0 0
    %847 = vmatpush1.bf16.msra.mxu0 0
    %848 = vmatprep.subr.bf16.mxu0 0
    %849 = vmatpush1.bf16.msra.mxu0 0
    %850 = vmatprep.subr.bf16.mxu0 0
    %851 = vmatpush1.bf16.msra.mxu0 0
    %852 = vmatprep.subr.bf16.mxu0 0
    %853 = vmatpush1.bf16.msra.mxu0 0
    %854 = vmatprep.subr.bf16.mxu0 0
    %855 = vmatpush1.bf16.msra.mxu0 0
    %856 = vmatprep.subr.bf16.mxu0 0
    %857 = vmatpush1.bf16.msra.mxu0 0
    %858 = vmatprep.subr.bf16.mxu0 0
    %859 = vmatpush1.bf16.msra.mxu0 0
    %860 = vmatprep.subr.bf16.mxu0 0
    %861 = vmatpush1.bf16.msra.mxu0 0
    %862 = vmatprep.subr.bf16.mxu0 0
    %863 = vmatpush1.bf16.msra.mxu0 0
    %864 = vmatprep.subr.bf16.mxu0 0
    %865 = vmatpush1.bf16.msra.mxu0 0
    %866 = vmatprep.subr.bf16.mxu0 0
    %867 = vmatpush1.bf16.msra.mxu0 0
    %868 = vmatprep.subr.bf16.mxu0 0
    %869 = vmatpush1.bf16.msra.mxu0 0
    %870 = vmatprep.subr.bf16.mxu0 0
    %871 = vmatpush1.bf16.msra.mxu0 0
    %872 = vmatprep.subr.bf16.mxu0 0
    %873 = vmatpush1.bf16.msra.mxu0 0
    %874 = vmatprep.subr.bf16.mxu0 0
    %875 = vmatpush1.bf16.msra.mxu0 0
    %876 = vmatprep.mubr.bf16.mxu0 0
    %877 = vmatmul.mubr.bf16.gmra.mrb[0].mxu0 %v842
    %v878 = vpop.f32.mrb[0].mxu0
    %v879 = vadd.f32 0.0, %v878
    %v880 = vpop.f32.mrb[0].mxu0
    %v881 = vpop.f32.mrb[0].mxu0
    %v882 = vpop.f32.mrb[0].mxu0
    %883 = vdwg.mxu0
    %v884 = vadd.f32 %v779, %v879
    %v885 = vadd.f32 %v884, %v87
    %v886 = vmax.f32 %v885, 0.0
    %v887 = vpack.c.bf16 %v886, %v886
    %v889 = vsel %vm100, %v887, 0
    %891 = vmatprep.subr.bf16.mxu0 0
    %892 = vmatpush1.bf16.msra.mxu0 %v78
    %893 = vmatprep.subr.bf16.mxu0 0
    %894 = vmatpush1.bf16.msra.mxu0 %v79
    %895 = vmatprep.subr.bf16.mxu0 0
    %896 = vmatpush1.bf16.msra.mxu0 0
    %897 = vmatprep.subr.bf16.mxu0 0
    %898 = vmatpush1.bf16.msra.mxu0 0
    %899 = vmatprep.subr.bf16.mxu0 0
    %900 = vmatpush1.bf16.msra.mxu0 0
    %901 = vmatprep.subr.bf16.mxu0 0
    %902 = vmatpush1.bf16.msra.mxu0 0
    %903 = vmatprep.subr.bf16.mxu0 0
    %904 = vmatpush1.bf16.msra.mxu0 0
    %905 = vmatprep.subr.bf16.mxu0 0
    %906 = vmatpush1.bf16.msra.mxu0 0
    %907 = vmatprep.subr.bf16.mxu0 0
    %908 = vmatpush1.bf16.msra.mxu0 0
    %909 = vmatprep.subr.bf16.mxu0 0
    %910 = vmatpush1.bf16.msra.mxu0 0
    %911 = vmatprep.subr.bf16.mxu0 0
    %912 = vmatpush1.bf16.msra.mxu0 0
    %913 = vmatprep.subr.bf16.mxu0 0
    %914 = vmatpush1.bf16.msra.mxu0 0
    %915 = vmatprep.subr.bf16.mxu0 0
    %916 = vmatpush1.bf16.msra.mxu0 0
    %917 = vmatprep.subr.bf16.mxu0 0
    %918 = vmatpush1.bf16.msra.mxu0 0
    %919 = vmatprep.subr.bf16.mxu0 0
    %920 = vmatpush1.bf16.msra.mxu0 0
    %921 = vmatprep.subr.bf16.mxu0 0
    %922 = vmatpush1.bf16.msra.mxu0 0
    %923 = vmatprep.mubr.bf16.mxu0 0
    %924 = vmatmul.mubr.bf16.gmra.mrb[0].mxu0 %v889
    %v925 = vpop.f32.mrb[0].mxu0
    %v926 = vadd.f32 %v88, %v925
    %v927 = vpop.f32.mrb[0].mxu0
    %v928 = vpop.f32.mrb[0].mxu0
    %v929 = vpop.f32.mrb[0].mxu0
    %930 = vdwg.mxu0
    %v931 = vadd.f32 %v819, %v89
    %v932 = vadd.f32 %v926, %v931
    %v933 = vxor.u32 %v932, 2147483648
    %v934 = vmul.f32 %v933, 1.442695
    %v935 = vpow.pop %v934
    %v936 = vadd.f32 %v935, 1.0
    %v937 = vrcp.pop %v936
    %v938 = vmul.f32 1.0, %v937
    %940 = vrot.lane.b32.xlu0 %v931, 64
    %v941 = vpop.permute.xlu0 %940
    %v943 = vmul.f32 %v938, %v941
    %945 = vrot.lane.b32.xlu0 %v943, 64
    %v946 = vpop.permute.xlu0 %945
    %v948 = vadd.f32 %v926, %v946
    %v949 = vtanh.pop %v948
    %v950 = vsub.f32 1.0, %v938
    %952 = vrot.lane.b32.xlu0 %v949, 96
    %v953 = vpop.permute.xlu0 %952
    %v955 = vmul.f32 %v950, %v953
    %v956 = vmul.f32 %v938, %v671
    %v957 = vadd.f32 %v955, %v956
    %v958 = vpack.c.bf16 %v957, %v957
    %960 = vrot.lane.b32.xlu0 %v958, 96
    %v961 = vpop.permute.xlu0 %960
    %v963 = vsel %vm100, %v961, 0
    %965 = vmatprep.subr.bf16.mxu0 0
    %966 = vmatpush1.bf16.msra.mxu0 %v84
    %967 = vmatprep.subr.bf16.mxu0 0
    %968 = vmatpush1.bf16.msra.mxu0 %v85
    %969 = vmatprep.subr.bf16.mxu0 0
    %970 = vmatpush1.bf16.msra.mxu0 0
    %971 = vmatprep.subr.bf16.mxu0 0
    %972 = vmatpush1.bf16.msra.mxu0 0
    %973 = vmatprep.subr.bf16.mxu0 0
    %974 = vmatpush1.bf16.msra.mxu0 0
    %975 = vmatprep.subr.bf16.mxu0 0
    %976 = vmatpush1.bf16.msra.mxu0 0
    %977 = vmatprep.subr.bf16.mxu0 0
    %978 = vmatpush1.bf16.msra.mxu0 0
    %979 = vmatprep.subr.bf16.mxu0 0
    %980 = vmatpush1.bf16.msra.mxu0 0
    %981 = vmatprep.subr.bf16.mxu0 0
    %982 = vmatpush1.bf16.msra.mxu0 0
    %983 = vmatprep.subr.bf16.mxu0 0
    %984 = vmatpush1.bf16.msra.mxu0 0
    %985 = vmatprep.subr.bf16.mxu0 0
    %986 = vmatpush1.bf16.msra.mxu0 0
    %987 = vmatprep.subr.bf16.mxu0 0
    %988 = vmatpush1.bf16.msra.mxu0 0
    %989 = vmatprep.subr.bf16.mxu0 0
    %990 = vmatpush1.bf16.msra.mxu0 0
    %991 = vmatprep.subr.bf16.mxu0 0
    %992 = vmatpush1.bf16.msra.mxu0 0
    %993 = vmatprep.subr.bf16.mxu0 0
    %994 = vmatpush1.bf16.msra.mxu0 0
    %995 = vmatprep.subr.bf16.mxu0 0
    %996 = vmatpush1.bf16.msra.mxu0 0
    %997 = vmatprep.mubr.bf16.mxu0 0
    %998 = vmatmul.mubr.bf16.gmra.mrb[0].mxu0 %v963
    %v999 = vpop.f32.mrb[0].mxu0
    %v1000 = vadd.f32 %v90, %v999
    %v1001 = vpop.f32.mrb[0].mxu0
    %v1002 = vpop.f32.mrb[0].mxu0
    %v1003 = vpop.f32.mrb[0].mxu0
    %1004 = vdwg.mxu0
    %v1005 = vsel %vm244, %v1000, -inf
    %1006 = vmax.xlane.f32.xlu0 %v1005
    %v1007 = vpop.xlane.xlu0 %1006
    %v1008 = vsub.f32 %v1000, %v1007
    %v1009 = vmul.f32 %v1008, 1.442695
    %v1010 = vpow.pop %v1009
    %v1011 = vsel %vm244, %v1010, 0.0
    %1012 = vadd.xlane.f32.xlu0 %v1011
    %v1013 = vpop.xlane.xlu0 %1012
    %v1014 = vlog2.pop %v1013
    %v1015 = vmul.f32 %v1014, 0.6931472
    %v1016 = vsub.f32 %v1008, %v1015
    %1017 = vst [vmem:[#allocation9 + $0x2] sm:$0x1] %v1016
    %1018 = vst [vmem:[#allocation10 + $0x2] sm:$0x1] %v836
    %s1019 = sld [smem:[#allocation2 + $0x3]]
    %p1020 = scmp.gt.s32.totalorder %s1019, 0
    %s1021 = scalar_select %p1020, %s1019, 0
    %p1022 = scmp.lt.s32.totalorder %s1021, 63
    %s1023 = scalar_select %p1022, %s1021, 63
    %s1024 = scalar_lea.vmem [#allocation7], %s1023
    %v1025 = vld [vmem:[%s1024] sm:$0x1]
    %v1026 = vpack.c.bf16 %v1025, %v1025
    %v1028 = vsel %vm100, %v1026, 0
    %1030 = vmatprep.subr.bf16.mxu0 0
    %1031 = vmatpush1.bf16.msra.mxu0 %v66
    %1032 = vmatprep.subr.bf16.mxu0 0
    %1033 = vmatpush1.bf16.msra.mxu0 %v67
    %1034 = vmatprep.subr.bf16.mxu0 0
    %1035 = vmatpush1.bf16.msra.mxu0 0
    %1036 = vmatprep.subr.bf16.mxu0 0
    %1037 = vmatpush1.bf16.msra.mxu0 0
    %1038 = vmatprep.subr.bf16.mxu0 0
    %1039 = vmatpush1.bf16.msra.mxu0 0
    %1040 = vmatprep.subr.bf16.mxu0 0
    %1041 = vmatpush1.bf16.msra.mxu0 0
    %1042 = vmatprep.subr.bf16.mxu0 0
    %1043 = vmatpush1.bf16.msra.mxu0 0
    %1044 = vmatprep.subr.bf16.mxu0 0
    %1045 = vmatpush1.bf16.msra.mxu0 0
    %1046 = vmatprep.subr.bf16.mxu0 0
    %1047 = vmatpush1.bf16.msra.mxu0 0
    %1048 = vmatprep.subr.bf16.mxu0 0
    %1049 = vmatpush1.bf16.msra.mxu0 0
    %1050 = vmatprep.subr.bf16.mxu0 0
    %1051 = vmatpush1.bf16.msra.mxu0 0
    %1052 = vmatprep.subr.bf16.mxu0 0
    %1053 = vmatpush1.bf16.msra.mxu0 0
    %1054 = vmatprep.subr.bf16.mxu0 0
    %1055 = vmatpush1.bf16.msra.mxu0 0
    %1056 = vmatprep.subr.bf16.mxu0 0
    %1057 = vmatpush1.bf16.msra.mxu0 0
    %1058 = vmatprep.subr.bf16.mxu0 0
    %1059 = vmatpush1.bf16.msra.mxu0 0
    %1060 = vmatprep.subr.bf16.mxu0 0
    %1061 = vmatpush1.bf16.msra.mxu0 0
    %1062 = vmatprep.mubr.bf16.mxu0 0
    %1063 = vmatmul.mubr.bf16.gmra.mrb[0].mxu0 %v1028
    %v1064 = vpop.f32.mrb[0].mxu0
    %v1065 = vadd.f32 0.0, %v1064
    %v1066 = vpop.f32.mrb[0].mxu0
    %v1067 = vpop.f32.mrb[0].mxu0
    %v1068 = vpop.f32.mrb[0].mxu0
    %1069 = vdwg.mxu0
    %1070 = vmatprep.subr.bf16.mxu0 0
    %1071 = vmatpush1.bf16.msra.mxu0 %v72
    %1072 = vmatprep.subr.bf16.mxu0 0
    %1073 = vmatpush1.bf16.msra.mxu0 %v73
    %1074 = vmatprep.subr.bf16.mxu0 0
    %1075 = vmatpush1.bf16.msra.mxu0 0
    %1076 = vmatprep.subr.bf16.mxu0 0
    %1077 = vmatpush1.bf16.msra.mxu0 0
    %1078 = vmatprep.subr.bf16.mxu0 0
    %1079 = vmatpush1.bf16.msra.mxu0 0
    %1080 = vmatprep.subr.bf16.mxu0 0
    %1081 = vmatpush1.bf16.msra.mxu0 0
    %1082 = vmatprep.subr.bf16.mxu0 0
    %1083 = vmatpush1.bf16.msra.mxu0 0
    %1084 = vmatprep.subr.bf16.mxu0 0
    %1085 = vmatpush1.bf16.msra.mxu0 0
    %1086 = vmatprep.subr.bf16.mxu0 0
    %1087 = vmatpush1.bf16.msra.mxu0 0
    %1088 = vmatprep.subr.bf16.mxu0 0
    %1089 = vmatpush1.bf16.msra.mxu0 0
    %1090 = vmatprep.subr.bf16.mxu0 0
    %1091 = vmatpush1.bf16.msra.mxu0 0
    %1092 = vmatprep.subr.bf16.mxu0 0
    %1093 = vmatpush1.bf16.msra.mxu0 0
    %1094 = vmatprep.subr.bf16.mxu0 0
    %1095 = vmatpush1.bf16.msra.mxu0 0
    %1096 = vmatprep.subr.bf16.mxu0 0
    %1097 = vmatpush1.bf16.msra.mxu0 0
    %1098 = vmatprep.subr.bf16.mxu0 0
    %1099 = vmatpush1.bf16.msra.mxu0 0
    %1100 = vmatprep.subr.bf16.mxu0 0
    %1101 = vmatpush1.bf16.msra.mxu0 0
    %1102 = vmatprep.mubr.bf16.mxu0 0
    %1103 = vmatmul.mubr.bf16.gmra.mrb[0].mxu0 %v963
    %v1104 = vpop.f32.mrb[0].mxu0
    %v1105 = vadd.f32 0.0, %v1104
    %v1106 = vpop.f32.mrb[0].mxu0
    %v1107 = vpop.f32.mrb[0].mxu0
    %v1108 = vpop.f32.mrb[0].mxu0
    %1109 = vdwg.mxu0
    %v1110 = vadd.f32 %v1065, %v1105
    %v1111 = vadd.f32 %v1110, %v86
    %v1112 = vsel %vm244, %v1111, -inf
    %1113 = vmax.xlane.f32.xlu0 %v1112
    %v1114 = vpop.xlane.xlu0 %1113
    %v1115 = vsub.f32 %v1111, %v1114
    %v1116 = vmul.f32 %v1115, 1.442695
    %v1117 = vpow.pop %v1116
    %v1118 = vsel %vm244, %v1117, 0.0
    %1119 = vadd.xlane.f32.xlu0 %v1118
    %v1120 = vpop.xlane.xlu0 %1119
    %v1121 = vrcp.pop %v1120
    %v1122 = vmul.f32 %v1117, %v1121
    %v1123 = vpack.c.bf16 %v1122, %v1122
    %1125 = vrot.lane.b32.xlu0 %v1123, 32
    %v1126 = vpop.permute.xlu0 %1125
    %v1128 = vsel %vm260, %v1126, 0
    %1130 = vmatprep.subr.bf16.mxu0 0
    %1131 = vmatpush1.bf16.msra.mxu0 %v145
    %1132 = vmatprep.subr.bf16.mxu0 0
    %1133 = vmatpush1.bf16.msra.mxu0 0
    %1134 = vmatprep.subr.bf16.mxu0 0
    %1135 = vmatpush1.bf16.msra.mxu0 0
    %1136 = vmatprep.subr.bf16.mxu0 0
    %1137 = vmatpush1.bf16.msra.mxu0 0
    %1138 = vmatprep.subr.bf16.mxu0 0
    %1139 = vmatpush1.bf16.msra.mxu0 0
    %1140 = vmatprep.subr.bf16.mxu0 0
    %1141 = vmatpush1.bf16.msra.mxu0 0
    %1142 = vmatprep.subr.bf16.mxu0 0
    %1143 = vmatpush1.bf16.msra.mxu0 0
    %1144 = vmatprep.subr.bf16.mxu0 0
    %1145 = vmatpush1.bf16.msra.mxu0 0
    %1146 = vmatprep.subr.bf16.mxu0 0
    %1147 = vmatpush1.bf16.msra.mxu0 0
    %1148 = vmatprep.subr.bf16.mxu0 0
    %1149 = vmatpush1.bf16.msra.mxu0 0
    %1150 = vmatprep.subr.bf16.mxu0 0
    %1151 = vmatpush1.bf16.msra.mxu0 0
    %1152 = vmatprep.subr.bf16.mxu0 0
    %1153 = vmatpush1.bf16.msra.mxu0 0
    %1154 = vmatprep.subr.bf16.mxu0 0
    %1155 = vmatpush1.bf16.msra.mxu0 0
    %1156 = vmatprep.subr.bf16.mxu0 0
    %1157 = vmatpush1.bf16.msra.mxu0 0
    %1158 = vmatprep.subr.bf16.mxu0 0
    %1159 = vmatpush1.bf16.msra.mxu0 0
    %1160 = vmatprep.subr.bf16.mxu0 0
    %1161 = vmatpush1.bf16.msra.mxu0 0
    %1162 = vmatprep.mubr.bf16.mxu0 0
    %1163 = vmatmul.mubr.bf16.gmra.mrb[0].mxu0 %v1128
    %v1164 = vpop.f32.mrb[0].mxu0
    %v1165 = vadd.f32 0.0, %v1164
    %v1166 = vpop.f32.mrb[0].mxu0
    %v1167 = vpop.f32.mrb[0].mxu0
    %v1168 = vpop.f32.mrb[0].mxu0
    %1169 = vdwg.mxu0
    %v1170 = vadd.f32 %v1065, %v1165
    %v1171 = vadd.f32 %v1170, %v87
    %v1172 = vmax.f32 %v1171, 0.0
    %v1173 = vpack.c.bf16 %v1172, %v1172
    %v1175 = vsel %vm100, %v1173, 0
    %1177 = vmatprep.subr.bf16.mxu0 0
    %1178 = vmatpush1.bf16.msra.mxu0 %v78
    %1179 = vmatprep.subr.bf16.mxu0 0
    %1180 = vmatpush1.bf16.msra.mxu0 %v79
    %1181 = vmatprep.subr.bf16.mxu0 0
    %1182 = vmatpush1.bf16.msra.mxu0 0
    %1183 = vmatprep.subr.bf16.mxu0 0
    %1184 = vmatpush1.bf16.msra.mxu0 0
    %1185 = vmatprep.subr.bf16.mxu0 0
    %1186 = vmatpush1.bf16.msra.mxu0 0
    %1187 = vmatprep.subr.bf16.mxu0 0
    %1188 = vmatpush1.bf16.msra.mxu0 0
    %1189 = vmatprep.subr.bf16.mxu0 0
    %1190 = vmatpush1.bf16.msra.mxu0 0
    %1191 = vmatprep.subr.bf16.mxu0 0
    %1192 = vmatpush1.bf16.msra.mxu0 0
    %1193 = vmatprep.subr.bf16.mxu0 0
    %1194 = vmatpush1.bf16.msra.mxu0 0
    %1195 = vmatprep.subr.bf16.mxu0 0
    %1196 = vmatpush1.bf16.msra.mxu0 0
    %1197 = vmatprep.subr.bf16.mxu0 0
    %1198 = vmatpush1.bf16.msra.mxu0 0
    %1199 = vmatprep.subr.bf16.mxu0 0
    %1200 = vmatpush1.bf16.msra.mxu0 0
    %1201 = vmatprep.subr.bf16.mxu0 0
    %1202 = vmatpush1.bf16.msra.mxu0 0
    %1203 = vmatprep.subr.bf16.mxu0 0
    %1204 = vmatpush1.bf16.msra.mxu0 0
    %1205 = vmatprep.subr.bf16.mxu0 0
    %1206 = vmatpush1.bf16.msra.mxu0 0
    %1207 = vmatprep.subr.bf16.mxu0 0
    %1208 = vmatpush1.bf16.msra.mxu0 0
    %1209 = vmatprep.mubr.bf16.mxu0 0
    %1210 = vmatmul.mubr.bf16.gmra.mrb[0].mxu0 %v1175
    %v1211 = vpop.f32.mrb[0].mxu0
    %v1212 = vadd.f32 %v88, %v1211
    %v1213 = vpop.f32.mrb[0].mxu0
    %v1214 = vpop.f32.mrb[0].mxu0
    %v1215 = vpop.f32.mrb[0].mxu0
    %1216 = vdwg.mxu0
    %v1217 = vadd.f32 %v1105, %v89
    %v1218 = vadd.f32 %v1212, %v1217
    %v1219 = vxor.u32 %v1218, 2147483648
    %v1220 = vmul.f32 %v1219, 1.442695
    %v1221 = vpow.pop %v1220
    %v1222 = vadd.f32 %v1221, 1.0
    %v1223 = vrcp.pop %v1222
    %v1224 = vmul.f32 1.0, %v1223
    %1226 = vrot.lane.b32.xlu0 %v1217, 64
    %v1227 = vpop.permute.xlu0 %1226
    %v1229 = vmul.f32 %v1224, %v1227
    %1231 = vrot.lane.b32.xlu0 %v1229, 64
    %v1232 = vpop.permute.xlu0 %1231
    %v1234 = vadd.f32 %v1212, %v1232
    %v1235 = vtanh.pop %v1234
    %v1236 = vsub.f32 1.0, %v1224
    %1238 = vrot.lane.b32.xlu0 %v1235, 96
    %v1239 = vpop.permute.xlu0 %1238
    %v1241 = vmul.f32 %v1236, %v1239
    %v1242 = vmul.f32 %v1224, %v957
    %v1243 = vadd.f32 %v1241, %v1242
    %v1244 = vpack.c.bf16 %v1243, %v1243
    %1246 = vrot.lane.b32.xlu0 %v1244, 96
    %v1247 = vpop.permute.xlu0 %1246
    %v1249 = vsel %vm100, %v1247, 0
    %1251 = vmatprep.subr.bf16.mxu0 0
    %1252 = vmatpush1.bf16.msra.mxu0 %v84
    %1253 = vmatprep.subr.bf16.mxu0 0
    %1254 = vmatpush1.bf16.msra.mxu0 %v85
    %1255 = vmatprep.subr.bf16.mxu0 0
    %1256 = vmatpush1.bf16.msra.mxu0 0
    %1257 = vmatprep.subr.bf16.mxu0 0
    %1258 = vmatpush1.bf16.msra.mxu0 0
    %1259 = vmatprep.subr.bf16.mxu0 0
    %1260 = vmatpush1.bf16.msra.mxu0 0
    %1261 = vmatprep.subr.bf16.mxu0 0
    %1262 = vmatpush1.bf16.msra.mxu0 0
    %1263 = vmatprep.subr.bf16.mxu0 0
    %1264 = vmatpush1.bf16.msra.mxu0 0
    %1265 = vmatprep.subr.bf16.mxu0 0
    %1266 = vmatpush1.bf16.msra.mxu0 0
    %1267 = vmatprep.subr.bf16.mxu0 0
    %1268 = vmatpush1.bf16.msra.mxu0 0
    %1269 = vmatprep.subr.bf16.mxu0 0
    %1270 = vmatpush1.bf16.msra.mxu0 0
    %1271 = vmatprep.subr.bf16.mxu0 0
    %1272 = vmatpush1.bf16.msra.mxu0 0
    %1273 = vmatprep.subr.bf16.mxu0 0
    %1274 = vmatpush1.bf16.msra.mxu0 0
    %1275 = vmatprep.subr.bf16.mxu0 0
    %1276 = vmatpush1.bf16.msra.mxu0 0
    %1277 = vmatprep.subr.bf16.mxu0 0
    %1278 = vmatpush1.bf16.msra.mxu0 0
    %1279 = vmatprep.subr.bf16.mxu0 0
    %1280 = vmatpush1.bf16.msra.mxu0 0
    %1281 = vmatprep.subr.bf16.mxu0 0
    %1282 = vmatpush1.bf16.msra.mxu0 0
    %1283 = vmatprep.mubr.bf16.mxu0 0
    %1284 = vmatmul.mubr.bf16.gmra.mrb[0].mxu0 %v1249
    %v1285 = vpop.f32.mrb[0].mxu0
    %v1286 = vadd.f32 %v90, %v1285
    %v1287 = vpop.f32.mrb[0].mxu0
    %v1288 = vpop.f32.mrb[0].mxu0
    %v1289 = vpop.f32.mrb[0].mxu0
    %1290 = vdwg.mxu0
    %v1291 = vsel %vm244, %v1286, -inf
    %1292 = vmax.xlane.f32.xlu0 %v1291
    %v1293 = vpop.xlane.xlu0 %1292
    %v1294 = vsub.f32 %v1286, %v1293
    %v1295 = vmul.f32 %v1294, 1.442695
    %v1296 = vpow.pop %v1295
    %v1297 = vsel %vm244, %v1296, 0.0
    %1298 = vadd.xlane.f32.xlu0 %v1297
    %v1299 = vpop.xlane.xlu0 %1298
    %v1300 = vlog2.pop %v1299
    %v1301 = vmul.f32 %v1300, 0.6931472
    %v1302 = vsub.f32 %v1294, %v1301
    %1303 = vst [vmem:[#allocation9 + $0x3] sm:$0x1] %v1302
    %1304 = vst [vmem:[#allocation10 + $0x3] sm:$0x1] %v1122
    %s1305 = sld [smem:[#allocation2 + $0x4]]
    %p1306 = scmp.gt.s32.totalorder %s1305, 0
    %s1307 = scalar_select %p1306, %s1305, 0
    %p1308 = scmp.lt.s32.totalorder %s1307, 63
    %s1309 = scalar_select %p1308, %s1307, 63
    %s1310 = scalar_lea.vmem [#allocation7], %s1309
    %v1311 = vld [vmem:[%s1310] sm:$0x1]
    %v1312 = vpack.c.bf16 %v1311, %v1311
    %v1314 = vsel %vm100, %v1312, 0
    %1316 = vmatprep.subr.bf16.mxu0 0
    %1317 = vmatpush1.bf16.msra.mxu0 %v66
    %1318 = vmatprep.subr.bf16.mxu0 0
    %1319 = vmatpush1.bf16.msra.mxu0 %v67
    %1320 = vmatprep.subr.bf16.mxu0 0
    %1321 = vmatpush1.bf16.msra.mxu0 0
    %1322 = vmatprep.subr.bf16.mxu0 0
    %1323 = vmatpush1.bf16.msra.mxu0 0
    %1324 = vmatprep.subr.bf16.mxu0 0
    %1325 = vmatpush1.bf16.msra.mxu0 0
    %1326 = vmatprep.subr.bf16.mxu0 0
    %1327 = vmatpush1.bf16.msra.mxu0 0
    %1328 = vmatprep.subr.bf16.mxu0 0
    %1329 = vmatpush1.bf16.msra.mxu0 0
    %1330 = vmatprep.subr.bf16.mxu0 0
    %1331 = vmatpush1.bf16.msra.mxu0 0
    %1332 = vmatprep.subr.bf16.mxu0 0
    %1333 = vmatpush1.bf16.msra.mxu0 0
    %1334 = vmatprep.subr.bf16.mxu0 0
    %1335 = vmatpush1.bf16.msra.mxu0 0
    %1336 = vmatprep.subr.bf16.mxu0 0
    %1337 = vmatpush1.bf16.msra.mxu0 0
    %1338 = vmatprep.subr.bf16.mxu0 0
    %1339 = vmatpush1.bf16.msra.mxu0 0
    %1340 = vmatprep.subr.bf16.mxu0 0
    %1341 = vmatpush1.bf16.msra.mxu0 0
    %1342 = vmatprep.subr.bf16.mxu0 0
    %1343 = vmatpush1.bf16.msra.mxu0 0
    %1344 = vmatprep.subr.bf16.mxu0 0
    %1345 = vmatpush1.bf16.msra.mxu0 0
    %1346 = vmatprep.subr.bf16.mxu0 0
    %1347 = vmatpush1.bf16.msra.mxu0 0
    %1348 = vmatprep.mubr.bf16.mxu0 0
    %1349 = vmatmul.mubr.bf16.gmra.mrb[0].mxu0 %v1314
    %v1350 = vpop.f32.mrb[0].mxu0
    %v1351 = vadd.f32 0.0, %v1350
    %v1352 = vpop.f32.mrb[0].mxu0
    %v1353 = vpop.f32.mrb[0].mxu0
    %v1354 = vpop.f32.mrb[0].mxu0
    %1355 = vdwg.mxu0
    %1356 = vmatprep.subr.bf16.mxu0 0
    %1357 = vmatpush1.bf16.msra.mxu0 %v72
    %1358 = vmatprep.subr.bf16.mxu0 0
    %1359 = vmatpush1.bf16.msra.mxu0 %v73
    %1360 = vmatprep.subr.bf16.mxu0 0
    %1361 = vmatpush1.bf16.msra.mxu0 0
    %1362 = vmatprep.subr.bf16.mxu0 0
    %1363 = vmatpush1.bf16.msra.mxu0 0
    %1364 = vmatprep.subr.bf16.mxu0 0
    %1365 = vmatpush1.bf16.msra.mxu0 0
    %1366 = vmatprep.subr.bf16.mxu0 0
    %1367 = vmatpush1.bf16.msra.mxu0 0
    %1368 = vmatprep.subr.bf16.mxu0 0
    %1369 = vmatpush1.bf16.msra.mxu0 0
    %1370 = vmatprep.subr.bf16.mxu0 0
    %1371 = vmatpush1.bf16.msra.mxu0 0
    %1372 = vmatprep.subr.bf16.mxu0 0
    %1373 = vmatpush1.bf16.msra.mxu0 0
    %1374 = vmatprep.subr.bf16.mxu0 0
    %1375 = vmatpush1.bf16.msra.mxu0 0
    %1376 = vmatprep.subr.bf16.mxu0 0
    %1377 = vmatpush1.bf16.msra.mxu0 0
    %1378 = vmatprep.subr.bf16.mxu0 0
    %1379 = vmatpush1.bf16.msra.mxu0 0
    %1380 = vmatprep.subr.bf16.mxu0 0
    %1381 = vmatpush1.bf16.msra.mxu0 0
    %1382 = vmatprep.subr.bf16.mxu0 0
    %1383 = vmatpush1.bf16.msra.mxu0 0
    %1384 = vmatprep.subr.bf16.mxu0 0
    %1385 = vmatpush1.bf16.msra.mxu0 0
    %1386 = vmatprep.subr.bf16.mxu0 0
    %1387 = vmatpush1.bf16.msra.mxu0 0
    %1388 = vmatprep.mubr.bf16.mxu0 0
    %1389 = vmatmul.mubr.bf16.gmra.mrb[0].mxu0 %v1249
    %v1390 = vpop.f32.mrb[0].mxu0
    %v1391 = vadd.f32 0.0, %v1390
    %v1392 = vpop.f32.mrb[0].mxu0
    %v1393 = vpop.f32.mrb[0].mxu0
    %v1394 = vpop.f32.mrb[0].mxu0
    %1395 = vdwg.mxu0
    %v1396 = vadd.f32 %v1351, %v1391
    %v1397 = vadd.f32 %v1396, %v86
    %v1398 = vsel %vm244, %v1397, -inf
    %1399 = vmax.xlane.f32.xlu0 %v1398
    %v1400 = vpop.xlane.xlu0 %1399
    %v1401 = vsub.f32 %v1397, %v1400
    %v1402 = vmul.f32 %v1401, 1.442695
    %v1403 = vpow.pop %v1402
    %v1404 = vsel %vm244, %v1403, 0.0
    %1405 = vadd.xlane.f32.xlu0 %v1404
    %v1406 = vpop.xlane.xlu0 %1405
    %v1407 = vrcp.pop %v1406
    %v1408 = vmul.f32 %v1403, %v1407
    %v1409 = vpack.c.bf16 %v1408, %v1408
    %1411 = vrot.lane.b32.xlu0 %v1409, 32
    %v1412 = vpop.permute.xlu0 %1411
    %v1414 = vsel %vm260, %v1412, 0
    %1416 = vmatprep.subr.bf16.mxu0 0
    %1417 = vmatpush1.bf16.msra.mxu0 %v145
    %1418 = vmatprep.subr.bf16.mxu0 0
    %1419 = vmatpush1.bf16.msra.mxu0 0
    %1420 = vmatprep.subr.bf16.mxu0 0
    %1421 = vmatpush1.bf16.msra.mxu0 0
    %1422 = vmatprep.subr.bf16.mxu0 0
    %1423 = vmatpush1.bf16.msra.mxu0 0
    %1424 = vmatprep.subr.bf16.mxu0 0
    %1425 = vmatpush1.bf16.msra.mxu0 0
    %1426 = vmatprep.subr.bf16.mxu0 0
    %1427 = vmatpush1.bf16.msra.mxu0 0
    %1428 = vmatprep.subr.bf16.mxu0 0
    %1429 = vmatpush1.bf16.msra.mxu0 0
    %1430 = vmatprep.subr.bf16.mxu0 0
    %1431 = vmatpush1.bf16.msra.mxu0 0
    %1432 = vmatprep.subr.bf16.mxu0 0
    %1433 = vmatpush1.bf16.msra.mxu0 0
    %1434 = vmatprep.subr.bf16.mxu0 0
    %1435 = vmatpush1.bf16.msra.mxu0 0
    %1436 = vmatprep.subr.bf16.mxu0 0
    %1437 = vmatpush1.bf16.msra.mxu0 0
    %1438 = vmatprep.subr.bf16.mxu0 0
    %1439 = vmatpush1.bf16.msra.mxu0 0
    %1440 = vmatprep.subr.bf16.mxu0 0
    %1441 = vmatpush1.bf16.msra.mxu0 0
    %1442 = vmatprep.subr.bf16.mxu0 0
    %1443 = vmatpush1.bf16.msra.mxu0 0
    %1444 = vmatprep.subr.bf16.mxu0 0
    %1445 = vmatpush1.bf16.msra.mxu0 0
    %1446 = vmatprep.subr.bf16.mxu0 0
    %1447 = vmatpush1.bf16.msra.mxu0 0
    %1448 = vmatprep.mubr.bf16.mxu0 0
    %1449 = vmatmul.mubr.bf16.gmra.mrb[0].mxu0 %v1414
    %v1450 = vpop.f32.mrb[0].mxu0
    %v1451 = vadd.f32 0.0, %v1450
    %v1452 = vpop.f32.mrb[0].mxu0
    %v1453 = vpop.f32.mrb[0].mxu0
    %v1454 = vpop.f32.mrb[0].mxu0
    %1455 = vdwg.mxu0
    %v1456 = vadd.f32 %v1351, %v1451
    %v1457 = vadd.f32 %v1456, %v87
    %v1458 = vmax.f32 %v1457, 0.0
    %v1459 = vpack.c.bf16 %v1458, %v1458
    %v1461 = vsel %vm100, %v1459, 0
    %1463 = vmatprep.subr.bf16.mxu0 0
    %1464 = vmatpush1.bf16.msra.mxu0 %v78
    %1465 = vmatprep.subr.bf16.mxu0 0
    %1466 = vmatpush1.bf16.msra.mxu0 %v79
    %1467 = vmatprep.subr.bf16.mxu0 0
    %1468 = vmatpush1.bf16.msra.mxu0 0
    %1469 = vmatprep.subr.bf16.mxu0 0
    %1470 = vmatpush1.bf16.msra.mxu0 0
    %1471 = vmatprep.subr.bf16.mxu0 0
    %1472 = vmatpush1.bf16.msra.mxu0 0
    %1473 = vmatprep.subr.bf16.mxu0 0
    %1474 = vmatpush1.bf16.msra.mxu0 0
    %1475 = vmatprep.subr.bf16.mxu0 0
    %1476 = vmatpush1.bf16.msra.mxu0 0
    %1477 = vmatprep.subr.bf16.mxu0 0
    %1478 = vmatpush1.bf16.msra.mxu0 0
    %1479 = vmatprep.subr.bf16.mxu0 0
    %1480 = vmatpush1.bf16.msra.mxu0 0
    %1481 = vmatprep.subr.bf16.mxu0 0
    %1482 = vmatpush1.bf16.msra.mxu0 0
    %1483 = vmatprep.subr.bf16.mxu0 0
    %1484 = vmatpush1.bf16.msra.mxu0 0
    %1485 = vmatprep.subr.bf16.mxu0 0
    %1486 = vmatpush1.bf16.msra.mxu0 0
    %1487 = vmatprep.subr.bf16.mxu0 0
    %1488 = vmatpush1.bf16.msra.mxu0 0
    %1489 = vmatprep.subr.bf16.mxu0 0
    %1490 = vmatpush1.bf16.msra.mxu0 0
    %1491 = vmatprep.subr.bf16.mxu0 0
    %1492 = vmatpush1.bf16.msra.mxu0 0
    %1493 = vmatprep.subr.bf16.mxu0 0
    %1494 = vmatpush1.bf16.msra.mxu0 0
    %1495 = vmatprep.mubr.bf16.mxu0 0
    %1496 = vmatmul.mubr.bf16.gmra.mrb[0].mxu0 %v1461
    %v1497 = vpop.f32.mrb[0].mxu0
    %v1498 = vadd.f32 %v88, %v1497
    %v1499 = vpop.f32.mrb[0].mxu0
    %v1500 = vpop.f32.mrb[0].mxu0
    %v1501 = vpop.f32.mrb[0].mxu0
    %1502 = vdwg.mxu0
    %v1503 = vadd.f32 %v1391, %v89
    %v1504 = vadd.f32 %v1498, %v1503
    %v1505 = vxor.u32 %v1504, 2147483648
    %v1506 = vmul.f32 %v1505, 1.442695
    %v1507 = vpow.pop %v1506
    %v1508 = vadd.f32 %v1507, 1.0
    %v1509 = vrcp.pop %v1508
    %v1510 = vmul.f32 1.0, %v1509
    %1512 = vrot.lane.b32.xlu0 %v1503, 64
    %v1513 = vpop.permute.xlu0 %1512
    %v1515 = vmul.f32 %v1510, %v1513
    %1517 = vrot.lane.b32.xlu0 %v1515, 64
    %v1518 = vpop.permute.xlu0 %1517
    %v1520 = vadd.f32 %v1498, %v1518
    %v1521 = vtanh.pop %v1520
    %v1522 = vsub.f32 1.0, %v1510
    %1524 = vrot.lane.b32.xlu0 %v1521, 96
    %v1525 = vpop.permute.xlu0 %1524
    %v1527 = vmul.f32 %v1522, %v1525
    %v1528 = vmul.f32 %v1510, %v1243
    %v1529 = vadd.f32 %v1527, %v1528
    %v1530 = vpack.c.bf16 %v1529, %v1529
    %1532 = vrot.lane.b32.xlu0 %v1530, 96
    %v1533 = vpop.permute.xlu0 %1532
    %v1535 = vsel %vm100, %v1533, 0
    %1537 = vmatprep.subr.bf16.mxu0 0
    %1538 = vmatpush1.bf16.msra.mxu0 %v84
    %1539 = vmatprep.subr.bf16.mxu0 0
    %1540 = vmatpush1.bf16.msra.mxu0 %v85
    %1541 = vmatprep.subr.bf16.mxu0 0
    %1542 = vmatpush1.bf16.msra.mxu0 0
    %1543 = vmatprep.subr.bf16.mxu0 0
    %1544 = vmatpush1.bf16.msra.mxu0 0
    %1545 = vmatprep.subr.bf16.mxu0 0
    %1546 = vmatpush1.bf16.msra.mxu0 0
    %1547 = vmatprep.subr.bf16.mxu0 0
    %1548 = vmatpush1.bf16.msra.mxu0 0
    %1549 = vmatprep.subr.bf16.mxu0 0
    %1550 = vmatpush1.bf16.msra.mxu0 0
    %1551 = vmatprep.subr.bf16.mxu0 0
    %1552 = vmatpush1.bf16.msra.mxu0 0
    %1553 = vmatprep.subr.bf16.mxu0 0
    %1554 = vmatpush1.bf16.msra.mxu0 0
    %1555 = vmatprep.subr.bf16.mxu0 0
    %1556 = vmatpush1.bf16.msra.mxu0 0
    %1557 = vmatprep.subr.bf16.mxu0 0
    %1558 = vmatpush1.bf16.msra.mxu0 0
    %1559 = vmatprep.subr.bf16.mxu0 0
    %1560 = vmatpush1.bf16.msra.mxu0 0
    %1561 = vmatprep.subr.bf16.mxu0 0
    %1562 = vmatpush1.bf16.msra.mxu0 0
    %1563 = vmatprep.subr.bf16.mxu0 0
    %1564 = vmatpush1.bf16.msra.mxu0 0
    %1565 = vmatprep.subr.bf16.mxu0 0
    %1566 = vmatpush1.bf16.msra.mxu0 0
    %1567 = vmatprep.subr.bf16.mxu0 0
    %1568 = vmatpush1.bf16.msra.mxu0 0
    %1569 = vmatprep.mubr.bf16.mxu0 0
    %1570 = vmatmul.mubr.bf16.gmra.mrb[0].mxu0 %v1535
    %v1571 = vpop.f32.mrb[0].mxu0
    %v1572 = vadd.f32 %v90, %v1571
    %v1573 = vpop.f32.mrb[0].mxu0
    %v1574 = vpop.f32.mrb[0].mxu0
    %v1575 = vpop.f32.mrb[0].mxu0
    %1576 = vdwg.mxu0
    %v1577 = vsel %vm244, %v1572, -inf
    %1578 = vmax.xlane.f32.xlu0 %v1577
    %v1579 = vpop.xlane.xlu0 %1578
    %v1580 = vsub.f32 %v1572, %v1579
    %v1581 = vmul.f32 %v1580, 1.442695
    %v1582 = vpow.pop %v1581
    %v1583 = vsel %vm244, %v1582, 0.0
    %1584 = vadd.xlane.f32.xlu0 %v1583
    %v1585 = vpop.xlane.xlu0 %1584
    %v1586 = vlog2.pop %v1585
    %v1587 = vmul.f32 %v1586, 0.6931472
    %v1588 = vsub.f32 %v1580, %v1587
    %1589 = vst [vmem:[#allocation9 + $0x4] sm:$0x1] %v1588
    %1590 = vst [vmem:[#allocation10 + $0x4] sm:$0x1] %v1408
    %s1591 = sld [smem:[#allocation2 + $0x5]]
    %p1592 = scmp.gt.s32.totalorder %s1591, 0
    %s1593 = scalar_select %p1592, %s1591, 0
    %p1594 = scmp.lt.s32.totalorder %s1593, 63
    %s1595 = scalar_select %p1594, %s1593, 63
    %s1596 = scalar_lea.vmem [#allocation7], %s1595
    %v1597 = vld [vmem:[%s1596] sm:$0x1]
    %v1598 = vpack.c.bf16 %v1597, %v1597
    %v1600 = vsel %vm100, %v1598, 0
    %1602 = vmatprep.subr.bf16.mxu0 0
    %1603 = vmatpush1.bf16.msra.mxu0 %v66
    %1604 = vmatprep.subr.bf16.mxu0 0
    %1605 = vmatpush1.bf16.msra.mxu0 %v67
    %1606 = vmatprep.subr.bf16.mxu0 0
    %1607 = vmatpush1.bf16.msra.mxu0 0
    %1608 = vmatprep.subr.bf16.mxu0 0
    %1609 = vmatpush1.bf16.msra.mxu0 0
    %1610 = vmatprep.subr.bf16.mxu0 0
    %1611 = vmatpush1.bf16.msra.mxu0 0
    %1612 = vmatprep.subr.bf16.mxu0 0
    %1613 = vmatpush1.bf16.msra.mxu0 0
    %1614 = vmatprep.subr.bf16.mxu0 0
    %1615 = vmatpush1.bf16.msra.mxu0 0
    %1616 = vmatprep.subr.bf16.mxu0 0
    %1617 = vmatpush1.bf16.msra.mxu0 0
    %1618 = vmatprep.subr.bf16.mxu0 0
    %1619 = vmatpush1.bf16.msra.mxu0 0
    %1620 = vmatprep.subr.bf16.mxu0 0
    %1621 = vmatpush1.bf16.msra.mxu0 0
    %1622 = vmatprep.subr.bf16.mxu0 0
    %1623 = vmatpush1.bf16.msra.mxu0 0
    %1624 = vmatprep.subr.bf16.mxu0 0
    %1625 = vmatpush1.bf16.msra.mxu0 0
    %1626 = vmatprep.subr.bf16.mxu0 0
    %1627 = vmatpush1.bf16.msra.mxu0 0
    %1628 = vmatprep.subr.bf16.mxu0 0
    %1629 = vmatpush1.bf16.msra.mxu0 0
    %1630 = vmatprep.subr.bf16.mxu0 0
    %1631 = vmatpush1.bf16.msra.mxu0 0
    %1632 = vmatprep.subr.bf16.mxu0 0
    %1633 = vmatpush1.bf16.msra.mxu0 0
    %1634 = vmatprep.mubr.bf16.mxu0 0
    %1635 = vmatmul.mubr.bf16.gmra.mrb[0].mxu0 %v1600
    %v1636 = vpop.f32.mrb[0].mxu0
    %v1637 = vadd.f32 0.0, %v1636
    %v1638 = vpop.f32.mrb[0].mxu0
    %v1639 = vpop.f32.mrb[0].mxu0
    %v1640 = vpop.f32.mrb[0].mxu0
    %1641 = vdwg.mxu0
    %1642 = vmatprep.subr.bf16.mxu0 0
    %1643 = vmatpush1.bf16.msra.mxu0 %v72
    %1644 = vmatprep.subr.bf16.mxu0 0
    %1645 = vmatpush1.bf16.msra.mxu0 %v73
    %1646 = vmatprep.subr.bf16.mxu0 0
    %1647 = vmatpush1.bf16.msra.mxu0 0
    %1648 = vmatprep.subr.bf16.mxu0 0
    %1649 = vmatpush1.bf16.msra.mxu0 0
    %1650 = vmatprep.subr.bf16.mxu0 0
    %1651 = vmatpush1.bf16.msra.mxu0 0
    %1652 = vmatprep.subr.bf16.mxu0 0
    %1653 = vmatpush1.bf16.msra.mxu0 0
    %1654 = vmatprep.subr.bf16.mxu0 0
    %1655 = vmatpush1.bf16.msra.mxu0 0
    %1656 = vmatprep.subr.bf16.mxu0 0
    %1657 = vmatpush1.bf16.msra.mxu0 0
    %1658 = vmatprep.subr.bf16.mxu0 0
    %1659 = vmatpush1.bf16.msra.mxu0 0
    %1660 = vmatprep.subr.bf16.mxu0 0
    %1661 = vmatpush1.bf16.msra.mxu0 0
    %1662 = vmatprep.subr.bf16.mxu0 0
    %1663 = vmatpush1.bf16.msra.mxu0 0
    %1664 = vmatprep.subr.bf16.mxu0 0
    %1665 = vmatpush1.bf16.msra.mxu0 0
    %1666 = vmatprep.subr.bf16.mxu0 0
    %1667 = vmatpush1.bf16.msra.mxu0 0
    %1668 = vmatprep.subr.bf16.mxu0 0
    %1669 = vmatpush1.bf16.msra.mxu0 0
    %1670 = vmatprep.subr.bf16.mxu0 0
    %1671 = vmatpush1.bf16.msra.mxu0 0
    %1672 = vmatprep.subr.bf16.mxu0 0
    %1673 = vmatpush1.bf16.msra.mxu0 0
    %1674 = vmatprep.mubr.bf16.mxu0 0
    %1675 = vmatmul.mubr.bf16.gmra.mrb[0].mxu0 %v1535
    %v1676 = vpop.f32.mrb[0].mxu0
    %v1677 = vadd.f32 0.0, %v1676
    %v1678 = vpop.f32.mrb[0].mxu0
    %v1679 = vpop.f32.mrb[0].mxu0
    %v1680 = vpop.f32.mrb[0].mxu0
    %1681 = vdwg.mxu0
    %v1682 = vadd.f32 %v1637, %v1677
    %v1683 = vadd.f32 %v1682, %v86
    %v1684 = vsel %vm244, %v1683, -inf
    %1685 = vmax.xlane.f32.xlu0 %v1684
    %v1686 = vpop.xlane.xlu0 %1685
    %v1687 = vsub.f32 %v1683, %v1686
    %v1688 = vmul.f32 %v1687, 1.442695
    %v1689 = vpow.pop %v1688
    %v1690 = vsel %vm244, %v1689, 0.0
    %1691 = vadd.xlane.f32.xlu0 %v1690
    %v1692 = vpop.xlane.xlu0 %1691
    %v1693 = vrcp.pop %v1692
    %v1694 = vmul.f32 %v1689, %v1693
    %v1695 = vpack.c.bf16 %v1694, %v1694
    %1697 = vrot.lane.b32.xlu0 %v1695, 32
    %v1698 = vpop.permute.xlu0 %1697
    %v1700 = vsel %vm260, %v1698, 0
    %1702 = vmatprep.subr.bf16.mxu0 0
    %1703 = vmatpush1.bf16.msra.mxu0 %v145
    %1704 = vmatprep.subr.bf16.mxu0 0
    %1705 = vmatpush1.bf16.msra.mxu0 0
    %1706 = vmatprep.subr.bf16.mxu0 0
    %1707 = vmatpush1.bf16.msra.mxu0 0
    %1708 = vmatprep.subr.bf16.mxu0 0
    %1709 = vmatpush1.bf16.msra.mxu0 0
    %1710 = vmatprep.subr.bf16.mxu0 0
    %1711 = vmatpush1.bf16.msra.mxu0 0
    %1712 = vmatprep.subr.bf16.mxu0 0
    %1713 = vmatpush1.bf16.msra.mxu0 0
    %1714 = vmatprep.subr.bf16.mxu0 0
    %1715 = vmatpush1.bf16.msra.mxu0 0
    %1716 = vmatprep.subr.bf16.mxu0 0
    %1717 = vmatpush1.bf16.msra.mxu0 0
    %1718 = vmatprep.subr.bf16.mxu0 0
    %1719 = vmatpush1.bf16.msra.mxu0 0
    %1720 = vmatprep.subr.bf16.mxu0 0
    %1721 = vmatpush1.bf16.msra.mxu0 0
    %1722 = vmatprep.subr.bf16.mxu0 0
    %1723 = vmatpush1.bf16.msra.mxu0 0
    %1724 = vmatprep.subr.bf16.mxu0 0
    %1725 = vmatpush1.bf16.msra.mxu0 0
    %1726 = vmatprep.subr.bf16.mxu0 0
    %1727 = vmatpush1.bf16.msra.mxu0 0
    %1728 = vmatprep.subr.bf16.mxu0 0
    %1729 = vmatpush1.bf16.msra.mxu0 0
    %1730 = vmatprep.subr.bf16.mxu0 0
    %1731 = vmatpush1.bf16.msra.mxu0 0
    %1732 = vmatprep.subr.bf16.mxu0 0
    %1733 = vmatpush1.bf16.msra.mxu0 0
    %1734 = vmatprep.mubr.bf16.mxu0 0
    %1735 = vmatmul.mubr.bf16.gmra.mrb[0].mxu0 %v1700
    %v1736 = vpop.f32.mrb[0].mxu0
    %v1737 = vadd.f32 0.0, %v1736
    %v1738 = vpop.f32.mrb[0].mxu0
    %v1739 = vpop.f32.mrb[0].mxu0
    %v1740 = vpop.f32.mrb[0].mxu0
    %1741 = vdwg.mxu0
    %v1742 = vadd.f32 %v1637, %v1737
    %v1743 = vadd.f32 %v1742, %v87
    %v1744 = vmax.f32 %v1743, 0.0
    %v1745 = vpack.c.bf16 %v1744, %v1744
    %v1747 = vsel %vm100, %v1745, 0
    %1749 = vmatprep.subr.bf16.mxu0 0
    %1750 = vmatpush1.bf16.msra.mxu0 %v78
    %1751 = vmatprep.subr.bf16.mxu0 0
    %1752 = vmatpush1.bf16.msra.mxu0 %v79
    %1753 = vmatprep.subr.bf16.mxu0 0
    %1754 = vmatpush1.bf16.msra.mxu0 0
    %1755 = vmatprep.subr.bf16.mxu0 0
    %1756 = vmatpush1.bf16.msra.mxu0 0
    %1757 = vmatprep.subr.bf16.mxu0 0
    %1758 = vmatpush1.bf16.msra.mxu0 0
    %1759 = vmatprep.subr.bf16.mxu0 0
    %1760 = vmatpush1.bf16.msra.mxu0 0
    %1761 = vmatprep.subr.bf16.mxu0 0
    %1762 = vmatpush1.bf16.msra.mxu0 0
    %1763 = vmatprep.subr.bf16.mxu0 0
    %1764 = vmatpush1.bf16.msra.mxu0 0
    %1765 = vmatprep.subr.bf16.mxu0 0
    %1766 = vmatpush1.bf16.msra.mxu0 0
    %1767 = vmatprep.subr.bf16.mxu0 0
    %1768 = vmatpush1.bf16.msra.mxu0 0
    %1769 = vmatprep.subr.bf16.mxu0 0
    %1770 = vmatpush1.bf16.msra.mxu0 0
    %1771 = vmatprep.subr.bf16.mxu0 0
    %1772 = vmatpush1.bf16.msra.mxu0 0
    %1773 = vmatprep.subr.bf16.mxu0 0
    %1774 = vmatpush1.bf16.msra.mxu0 0
    %1775 = vmatprep.subr.bf16.mxu0 0
    %1776 = vmatpush1.bf16.msra.mxu0 0
    %1777 = vmatprep.subr.bf16.mxu0 0
    %1778 = vmatpush1.bf16.msra.mxu0 0
    %1779 = vmatprep.subr.bf16.mxu0 0
    %1780 = vmatpush1.bf16.msra.mxu0 0
    %1781 = vmatprep.mubr.bf16.mxu0 0
    %1782 = vmatmul.mubr.bf16.gmra.mrb[0].mxu0 %v1747
    %v1783 = vpop.f32.mrb[0].mxu0
    %v1784 = vadd.f32 %v88, %v1783
    %v1785 = vpop.f32.mrb[0].mxu0
    %v1786 = vpop.f32.mrb[0].mxu0
    %v1787 = vpop.f32.mrb[0].mxu0
    %1788 = vdwg.mxu0
    %v1789 = vadd.f32 %v1677, %v89
    %v1790 = vadd.f32 %v1784, %v1789
    %v1791 = vxor.u32 %v1790, 2147483648
    %v1792 = vmul.f32 %v1791, 1.442695
    %v1793 = vpow.pop %v1792
    %v1794 = vadd.f32 %v1793, 1.0
    %v1795 = vrcp.pop %v1794
    %v1796 = vmul.f32 1.0, %v1795
    %1798 = vrot.lane.b32.xlu0 %v1789, 64
    %v1799 = vpop.permute.xlu0 %1798
    %v1801 = vmul.f32 %v1796, %v1799
    %1803 = vrot.lane.b32.xlu0 %v1801, 64
    %v1804 = vpop.permute.xlu0 %1803
    %v1806 = vadd.f32 %v1784, %v1804
    %v1807 = vtanh.pop %v1806
    %v1808 = vsub.f32 1.0, %v1796
    %1810 = vrot.lane.b32.xlu0 %v1807, 96
    %v1811 = vpop.permute.xlu0 %1810
    %v1813 = vmul.f32 %v1808, %v1811
    %v1814 = vmul.f32 %v1796, %v1529
    %v1815 = vadd.f32 %v1813, %v1814
    %v1816 = vpack.c.bf16 %v1815, %v1815
    %1818 = vrot.lane.b32.xlu0 %v1816, 96
    %v1819 = vpop.permute.xlu0 %1818
    %v1821 = vsel %vm100, %v1819, 0
    %1823 = vmatprep.subr.bf16.mxu0 0
    %1824 = vmatpush1.bf16.msra.mxu0 %v84
    %1825 = vmatprep.subr.bf16.mxu0 0
    %1826 = vmatpush1.bf16.msra.mxu0 %v85
    %1827 = vmatprep.subr.bf16.mxu0 0
    %1828 = vmatpush1.bf16.msra.mxu0 0
    %1829 = vmatprep.subr.bf16.mxu0 0
    %1830 = vmatpush1.bf16.msra.mxu0 0
    %1831 = vmatprep.subr.bf16.mxu0 0
    %1832 = vmatpush1.bf16.msra.mxu0 0
    %1833 = vmatprep.subr.bf16.mxu0 0
    %1834 = vmatpush1.bf16.msra.mxu0 0
    %1835 = vmatprep.subr.bf16.mxu0 0
    %1836 = vmatpush1.bf16.msra.mxu0 0
    %1837 = vmatprep.subr.bf16.mxu0 0
    %1838 = vmatpush1.bf16.msra.mxu0 0
    %1839 = vmatprep.subr.bf16.mxu0 0
    %1840 = vmatpush1.bf16.msra.mxu0 0
    %1841 = vmatprep.subr.bf16.mxu0 0
    %1842 = vmatpush1.bf16.msra.mxu0 0
    %1843 = vmatprep.subr.bf16.mxu0 0
    %1844 = vmatpush1.bf16.msra.mxu0 0
    %1845 = vmatprep.subr.bf16.mxu0 0
    %1846 = vmatpush1.bf16.msra.mxu0 0
    %1847 = vmatprep.subr.bf16.mxu0 0
    %1848 = vmatpush1.bf16.msra.mxu0 0
    %1849 = vmatprep.subr.bf16.mxu0 0
    %1850 = vmatpush1.bf16.msra.mxu0 0
    %1851 = vmatprep.subr.bf16.mxu0 0
    %1852 = vmatpush1.bf16.msra.mxu0 0
    %1853 = vmatprep.subr.bf16.mxu0 0
    %1854 = vmatpush1.bf16.msra.mxu0 0
    %1855 = vmatprep.mubr.bf16.mxu0 0
    %1856 = vmatmul.mubr.bf16.gmra.mrb[0].mxu0 %v1821
    %v1857 = vpop.f32.mrb[0].mxu0
    %v1858 = vadd.f32 %v90, %v1857
    %v1859 = vpop.f32.mrb[0].mxu0
    %v1860 = vpop.f32.mrb[0].mxu0
    %v1861 = vpop.f32.mrb[0].mxu0
    %1862 = vdwg.mxu0
    %v1863 = vsel %vm244, %v1858, -inf
    %1864 = vmax.xlane.f32.xlu0 %v1863
    %v1865 = vpop.xlane.xlu0 %1864
    %v1866 = vsub.f32 %v1858, %v1865
    %v1867 = vmul.f32 %v1866, 1.442695
    %v1868 = vpow.pop %v1867
    %v1869 = vsel %vm244, %v1868, 0.0
    %1870 = vadd.xlane.f32.xlu0 %v1869
    %v1871 = vpop.xlane.xlu0 %1870
    %v1872 = vlog2.pop %v1871
    %v1873 = vmul.f32 %v1872, 0.6931472
    %v1874 = vsub.f32 %v1866, %v1873
    %1875 = vst [vmem:[#allocation9 + $0x5] sm:$0x1] %v1874
    %1876 = vst [vmem:[#allocation10 + $0x5] sm:$0x1] %v1694
    %s1877 = sld [smem:[#allocation2 + $0x6]]
    %p1878 = scmp.gt.s32.totalorder %s1877, 0
    %s1879 = scalar_select %p1878, %s1877, 0
    %p1880 = scmp.lt.s32.totalorder %s1879, 63
    %s1881 = scalar_select %p1880, %s1879, 63
    %s1882 = scalar_lea.vmem [#allocation7], %s1881
    %v1883 = vld [vmem:[%s1882] sm:$0x1]
    %v1884 = vpack.c.bf16 %v1883, %v1883
    %v1886 = vsel %vm100, %v1884, 0
    %1888 = vmatprep.subr.bf16.mxu0 0
    %1889 = vmatpush1.bf16.msra.mxu0 %v66
    %1890 = vmatprep.subr.bf16.mxu0 0
    %1891 = vmatpush1.bf16.msra.mxu0 %v67
    %1892 = vmatprep.subr.bf16.mxu0 0
    %1893 = vmatpush1.bf16.msra.mxu0 0
    %1894 = vmatprep.subr.bf16.mxu0 0
    %1895 = vmatpush1.bf16.msra.mxu0 0
    %1896 = vmatprep.subr.bf16.mxu0 0
    %1897 = vmatpush1.bf16.msra.mxu0 0
    %1898 = vmatprep.subr.bf16.mxu0 0
    %1899 = vmatpush1.bf16.msra.mxu0 0
    %1900 = vmatprep.subr.bf16.mxu0 0
    %1901 = vmatpush1.bf16.msra.mxu0 0
    %1902 = vmatprep.subr.bf16.mxu0 0
    %1903 = vmatpush1.bf16.msra.mxu0 0
    %1904 = vmatprep.subr.bf16.mxu0 0
    %1905 = vmatpush1.bf16.msra.mxu0 0
    %1906 = vmatprep.subr.bf16.mxu0 0
    %1907 = vmatpush1.bf16.msra.mxu0 0
    %1908 = vmatprep.subr.bf16.mxu0 0
    %1909 = vmatpush1.bf16.msra.mxu0 0
    %1910 = vmatprep.subr.bf16.mxu0 0
    %1911 = vmatpush1.bf16.msra.mxu0 0
    %1912 = vmatprep.subr.bf16.mxu0 0
    %1913 = vmatpush1.bf16.msra.mxu0 0
    %1914 = vmatprep.subr.bf16.mxu0 0
    %1915 = vmatpush1.bf16.msra.mxu0 0
    %1916 = vmatprep.subr.bf16.mxu0 0
    %1917 = vmatpush1.bf16.msra.mxu0 0
    %1918 = vmatprep.subr.bf16.mxu0 0
    %1919 = vmatpush1.bf16.msra.mxu0 0
    %1920 = vmatprep.mubr.bf16.mxu0 0
    %1921 = vmatmul.mubr.bf16.gmra.mrb[0].mxu0 %v1886
    %v1922 = vpop.f32.mrb[0].mxu0
    %v1923 = vadd.f32 0.0, %v1922
    %v1924 = vpop.f32.mrb[0].mxu0
    %v1925 = vpop.f32.mrb[0].mxu0
    %v1926 = vpop.f32.mrb[0].mxu0
    %1927 = vdwg.mxu0
    %1928 = vmatprep.subr.bf16.mxu0 0
    %1929 = vmatpush1.bf16.msra.mxu0 %v72
    %1930 = vmatprep.subr.bf16.mxu0 0
    %1931 = vmatpush1.bf16.msra.mxu0 %v73
    %1932 = vmatprep.subr.bf16.mxu0 0
    %1933 = vmatpush1.bf16.msra.mxu0 0
    %1934 = vmatprep.subr.bf16.mxu0 0
    %1935 = vmatpush1.bf16.msra.mxu0 0
    %1936 = vmatprep.subr.bf16.mxu0 0
    %1937 = vmatpush1.bf16.msra.mxu0 0
    %1938 = vmatprep.subr.bf16.mxu0 0
    %1939 = vmatpush1.bf16.msra.mxu0 0
    %1940 = vmatprep.subr.bf16.mxu0 0
    %1941 = vmatpush1.bf16.msra.mxu0 0
    %1942 = vmatprep.subr.bf16.mxu0 0
    %1943 = vmatpush1.bf16.msra.mxu0 0
    %1944 = vmatprep.subr.bf16.mxu0 0
    %1945 = vmatpush1.bf16.msra.mxu0 0
    %1946 = vmatprep.subr.bf16.mxu0 0
    %1947 = vmatpush1.bf16.msra.mxu0 0
    %1948 = vmatprep.subr.bf16.mxu0 0
    %1949 = vmatpush1.bf16.msra.mxu0 0
    %1950 = vmatprep.subr.bf16.mxu0 0
    %1951 = vmatpush1.bf16.msra.mxu0 0
    %1952 = vmatprep.subr.bf16.mxu0 0
    %1953 = vmatpush1.bf16.msra.mxu0 0
    %1954 = vmatprep.subr.bf16.mxu0 0
    %1955 = vmatpush1.bf16.msra.mxu0 0
    %1956 = vmatprep.subr.bf16.mxu0 0
    %1957 = vmatpush1.bf16.msra.mxu0 0
    %1958 = vmatprep.subr.bf16.mxu0 0
    %1959 = vmatpush1.bf16.msra.mxu0 0
    %1960 = vmatprep.mubr.bf16.mxu0 0
    %1961 = vmatmul.mubr.bf16.gmra.mrb[0].mxu0 %v1821
    %v1962 = vpop.f32.mrb[0].mxu0
    %v1963 = vadd.f32 0.0, %v1962
    %v1964 = vpop.f32.mrb[0].mxu0
    %v1965 = vpop.f32.mrb[0].mxu0
    %v1966 = vpop.f32.mrb[0].mxu0
    %1967 = vdwg.mxu0
    %v1968 = vadd.f32 %v1923, %v1963
    %v1969 = vadd.f32 %v1968, %v86
    %v1970 = vsel %vm244, %v1969, -inf
    %1971 = vmax.xlane.f32.xlu0 %v1970
    %v1972 = vpop.xlane.xlu0 %1971
    %v1973 = vsub.f32 %v1969, %v1972
    %v1974 = vmul.f32 %v1973, 1.442695
    %v1975 = vpow.pop %v1974
    %v1976 = vsel %vm244, %v1975, 0.0
    %1977 = vadd.xlane.f32.xlu0 %v1976
    %v1978 = vpop.xlane.xlu0 %1977
    %v1979 = vrcp.pop %v1978
    %v1980 = vmul.f32 %v1975, %v1979
    %v1981 = vpack.c.bf16 %v1980, %v1980
    %1983 = vrot.lane.b32.xlu0 %v1981, 32
    %v1984 = vpop.permute.xlu0 %1983
    %v1986 = vsel %vm260, %v1984, 0
    %1988 = vmatprep.subr.bf16.mxu0 0
    %1989 = vmatpush1.bf16.msra.mxu0 %v145
    %1990 = vmatprep.subr.bf16.mxu0 0
    %1991 = vmatpush1.bf16.msra.mxu0 0
    %1992 = vmatprep.subr.bf16.mxu0 0
    %1993 = vmatpush1.bf16.msra.mxu0 0
    %1994 = vmatprep.subr.bf16.mxu0 0
    %1995 = vmatpush1.bf16.msra.mxu0 0
    %1996 = vmatprep.subr.bf16.mxu0 0
    %1997 = vmatpush1.bf16.msra.mxu0 0
    %1998 = vmatprep.subr.bf16.mxu0 0
    %1999 = vmatpush1.bf16.msra.mxu0 0
    %2000 = vmatprep.subr.bf16.mxu0 0
    %2001 = vmatpush1.bf16.msra.mxu0 0
    %2002 = vmatprep.subr.bf16.mxu0 0
    %2003 = vmatpush1.bf16.msra.mxu0 0
    %2004 = vmatprep.subr.bf16.mxu0 0
    %2005 = vmatpush1.bf16.msra.mxu0 0
    %2006 = vmatprep.subr.bf16.mxu0 0
    %2007 = vmatpush1.bf16.msra.mxu0 0
    %2008 = vmatprep.subr.bf16.mxu0 0
    %2009 = vmatpush1.bf16.msra.mxu0 0
    %2010 = vmatprep.subr.bf16.mxu0 0
    %2011 = vmatpush1.bf16.msra.mxu0 0
    %2012 = vmatprep.subr.bf16.mxu0 0
    %2013 = vmatpush1.bf16.msra.mxu0 0
    %2014 = vmatprep.subr.bf16.mxu0 0
    %2015 = vmatpush1.bf16.msra.mxu0 0
    %2016 = vmatprep.subr.bf16.mxu0 0
    %2017 = vmatpush1.bf16.msra.mxu0 0
    %2018 = vmatprep.subr.bf16.mxu0 0
    %2019 = vmatpush1.bf16.msra.mxu0 0
    %2020 = vmatprep.mubr.bf16.mxu0 0
    %2021 = vmatmul.mubr.bf16.gmra.mrb[0].mxu0 %v1986
    %v2022 = vpop.f32.mrb[0].mxu0
    %v2023 = vadd.f32 0.0, %v2022
    %v2024 = vpop.f32.mrb[0].mxu0
    %v2025 = vpop.f32.mrb[0].mxu0
    %v2026 = vpop.f32.mrb[0].mxu0
    %2027 = vdwg.mxu0
    %v2028 = vadd.f32 %v1923, %v2023
    %v2029 = vadd.f32 %v2028, %v87
    %v2030 = vmax.f32 %v2029, 0.0
    %v2031 = vpack.c.bf16 %v2030, %v2030
    %v2033 = vsel %vm100, %v2031, 0
    %2035 = vmatprep.subr.bf16.mxu0 0
    %2036 = vmatpush1.bf16.msra.mxu0 %v78
    %2037 = vmatprep.subr.bf16.mxu0 0
    %2038 = vmatpush1.bf16.msra.mxu0 %v79
    %2039 = vmatprep.subr.bf16.mxu0 0
    %2040 = vmatpush1.bf16.msra.mxu0 0
    %2041 = vmatprep.subr.bf16.mxu0 0
    %2042 = vmatpush1.bf16.msra.mxu0 0
    %2043 = vmatprep.subr.bf16.mxu0 0
    %2044 = vmatpush1.bf16.msra.mxu0 0
    %2045 = vmatprep.subr.bf16.mxu0 0
    %2046 = vmatpush1.bf16.msra.mxu0 0
    %2047 = vmatprep.subr.bf16.mxu0 0
    %2048 = vmatpush1.bf16.msra.mxu0 0
    %2049 = vmatprep.subr.bf16.mxu0 0
    %2050 = vmatpush1.bf16.msra.mxu0 0
    %2051 = vmatprep.subr.bf16.mxu0 0
    %2052 = vmatpush1.bf16.msra.mxu0 0
    %2053 = vmatprep.subr.bf16.mxu0 0
    %2054 = vmatpush1.bf16.msra.mxu0 0
    %2055 = vmatprep.subr.bf16.mxu0 0
    %2056 = vmatpush1.bf16.msra.mxu0 0
    %2057 = vmatprep.subr.bf16.mxu0 0
    %2058 = vmatpush1.bf16.msra.mxu0 0
    %2059 = vmatprep.subr.bf16.mxu0 0
    %2060 = vmatpush1.bf16.msra.mxu0 0
    %2061 = vmatprep.subr.bf16.mxu0 0
    %2062 = vmatpush1.bf16.msra.mxu0 0
    %2063 = vmatprep.subr.bf16.mxu0 0
    %2064 = vmatpush1.bf16.msra.mxu0 0
    %2065 = vmatprep.subr.bf16.mxu0 0
    %2066 = vmatpush1.bf16.msra.mxu0 0
    %2067 = vmatprep.mubr.bf16.mxu0 0
    %2068 = vmatmul.mubr.bf16.gmra.mrb[0].mxu0 %v2033
    %v2069 = vpop.f32.mrb[0].mxu0
    %v2070 = vadd.f32 %v88, %v2069
    %v2071 = vpop.f32.mrb[0].mxu0
    %v2072 = vpop.f32.mrb[0].mxu0
    %v2073 = vpop.f32.mrb[0].mxu0
    %2074 = vdwg.mxu0
    %v2075 = vadd.f32 %v1963, %v89
    %v2076 = vadd.f32 %v2070, %v2075
    %v2077 = vxor.u32 %v2076, 2147483648
    %v2078 = vmul.f32 %v2077, 1.442695
    %v2079 = vpow.pop %v2078
    %v2080 = vadd.f32 %v2079, 1.0
    %v2081 = vrcp.pop %v2080
    %v2082 = vmul.f32 1.0, %v2081
    %2084 = vrot.lane.b32.xlu0 %v2075, 64
    %v2085 = vpop.permute.xlu0 %2084
    %v2087 = vmul.f32 %v2082, %v2085
    %2089 = vrot.lane.b32.xlu0 %v2087, 64
    %v2090 = vpop.permute.xlu0 %2089
    %v2092 = vadd.f32 %v2070, %v2090
    %v2093 = vtanh.pop %v2092
    %v2094 = vsub.f32 1.0, %v2082
    %2096 = vrot.lane.b32.xlu0 %v2093, 96
    %v2097 = vpop.permute.xlu0 %2096
    %v2099 = vmul.f32 %v2094, %v2097
    %v2100 = vmul.f32 %v2082, %v1815
    %v2101 = vadd.f32 %v2099, %v2100
    %v2102 = vpack.c.bf16 %v2101, %v2101
    %2104 = vrot.lane.b32.xlu0 %v2102, 96
    %v2105 = vpop.permute.xlu0 %2104
    %v2107 = vsel %vm100, %v2105, 0
    %2109 = vmatprep.subr.bf16.mxu0 0
    %2110 = vmatpush1.bf16.msra.mxu0 %v84
    %2111 = vmatprep.subr.bf16.mxu0 0
    %2112 = vmatpush1.bf16.msra.mxu0 %v85
    %2113 = vmatprep.subr.bf16.mxu0 0
    %2114 = vmatpush1.bf16.msra.mxu0 0
    %2115 = vmatprep.subr.bf16.mxu0 0
    %2116 = vmatpush1.bf16.msra.mxu0 0
    %2117 = vmatprep.subr.bf16.mxu0 0
    %2118 = vmatpush1.bf16.msra.mxu0 0
    %2119 = vmatprep.subr.bf16.mxu0 0
    %2120 = vmatpush1.bf16.msra.mxu0 0
    %2121 = vmatprep.subr.bf16.mxu0 0
    %2122 = vmatpush1.bf16.msra.mxu0 0
    %2123 = vmatprep.subr.bf16.mxu0 0
    %2124 = vmatpush1.bf16.msra.mxu0 0
    %2125 = vmatprep.subr.bf16.mxu0 0
    %2126 = vmatpush1.bf16.msra.mxu0 0
    %2127 = vmatprep.subr.bf16.mxu0 0
    %2128 = vmatpush1.bf16.msra.mxu0 0
    %2129 = vmatprep.subr.bf16.mxu0 0
    %2130 = vmatpush1.bf16.msra.mxu0 0
    %2131 = vmatprep.subr.bf16.mxu0 0
    %2132 = vmatpush1.bf16.msra.mxu0 0
    %2133 = vmatprep.subr.bf16.mxu0 0
    %2134 = vmatpush1.bf16.msra.mxu0 0
    %2135 = vmatprep.subr.bf16.mxu0 0
    %2136 = vmatpush1.bf16.msra.mxu0 0
    %2137 = vmatprep.subr.bf16.mxu0 0
    %2138 = vmatpush1.bf16.msra.mxu0 0
    %2139 = vmatprep.subr.bf16.mxu0 0
    %2140 = vmatpush1.bf16.msra.mxu0 0
    %2141 = vmatprep.mubr.bf16.mxu0 0
    %2142 = vmatmul.mubr.bf16.gmra.mrb[0].mxu0 %v2107
    %v2143 = vpop.f32.mrb[0].mxu0
    %v2144 = vadd.f32 %v90, %v2143
    %v2145 = vpop.f32.mrb[0].mxu0
    %v2146 = vpop.f32.mrb[0].mxu0
    %v2147 = vpop.f32.mrb[0].mxu0
    %2148 = vdwg.mxu0
    %v2149 = vsel %vm244, %v2144, -inf
    %2150 = vmax.xlane.f32.xlu0 %v2149
    %v2151 = vpop.xlane.xlu0 %2150
    %v2152 = vsub.f32 %v2144, %v2151
    %v2153 = vmul.f32 %v2152, 1.442695
    %v2154 = vpow.pop %v2153
    %v2155 = vsel %vm244, %v2154, 0.0
    %2156 = vadd.xlane.f32.xlu0 %v2155
    %v2157 = vpop.xlane.xlu0 %2156
    %v2158 = vlog2.pop %v2157
    %v2159 = vmul.f32 %v2158, 0.6931472
    %v2160 = vsub.f32 %v2152, %v2159
    %2161 = vst [vmem:[#allocation9 + $0x6] sm:$0x1] %v2160
    %2162 = vst [vmem:[#allocation10 + $0x6] sm:$0x1] %v1980
    %s2163 = sld [smem:[#allocation2 + $0x7]]
    %p2164 = scmp.gt.s32.totalorder %s2163, 0
    %s2165 = scalar_select %p2164, %s2163, 0
    %p2166 = scmp.lt.s32.totalorder %s2165, 63
    %s2167 = scalar_select %p2166, %s2165, 63
    %s2168 = scalar_lea.vmem [#allocation7], %s2167
    %v2169 = vld [vmem:[%s2168] sm:$0x1]
    %v2170 = vpack.c.bf16 %v2169, %v2169
    %v2172 = vsel %vm100, %v2170, 0
    %2174 = vmatprep.subr.bf16.mxu0 0
    %2175 = vmatpush1.bf16.msra.mxu0 %v66
    %2176 = vmatprep.subr.bf16.mxu0 0
    %2177 = vmatpush1.bf16.msra.mxu0 %v67
    %2178 = vmatprep.subr.bf16.mxu0 0
    %2179 = vmatpush1.bf16.msra.mxu0 0
    %2180 = vmatprep.subr.bf16.mxu0 0
    %2181 = vmatpush1.bf16.msra.mxu0 0
    %2182 = vmatprep.subr.bf16.mxu0 0
    %2183 = vmatpush1.bf16.msra.mxu0 0
    %2184 = vmatprep.subr.bf16.mxu0 0
    %2185 = vmatpush1.bf16.msra.mxu0 0
    %2186 = vmatprep.subr.bf16.mxu0 0
    %2187 = vmatpush1.bf16.msra.mxu0 0
    %2188 = vmatprep.subr.bf16.mxu0 0
    %2189 = vmatpush1.bf16.msra.mxu0 0
    %2190 = vmatprep.subr.bf16.mxu0 0
    %2191 = vmatpush1.bf16.msra.mxu0 0
    %2192 = vmatprep.subr.bf16.mxu0 0
    %2193 = vmatpush1.bf16.msra.mxu0 0
    %2194 = vmatprep.subr.bf16.mxu0 0
    %2195 = vmatpush1.bf16.msra.mxu0 0
    %2196 = vmatprep.subr.bf16.mxu0 0
    %2197 = vmatpush1.bf16.msra.mxu0 0
    %2198 = vmatprep.subr.bf16.mxu0 0
    %2199 = vmatpush1.bf16.msra.mxu0 0
    %2200 = vmatprep.subr.bf16.mxu0 0
    %2201 = vmatpush1.bf16.msra.mxu0 0
    %2202 = vmatprep.subr.bf16.mxu0 0
    %2203 = vmatpush1.bf16.msra.mxu0 0
    %2204 = vmatprep.subr.bf16.mxu0 0
    %2205 = vmatpush1.bf16.msra.mxu0 0
    %2206 = vmatprep.mubr.bf16.mxu0 0
    %2207 = vmatmul.mubr.bf16.gmra.mrb[0].mxu0 %v2172
    %v2208 = vpop.f32.mrb[0].mxu0
    %v2209 = vadd.f32 0.0, %v2208
    %v2210 = vpop.f32.mrb[0].mxu0
    %v2211 = vpop.f32.mrb[0].mxu0
    %v2212 = vpop.f32.mrb[0].mxu0
    %2213 = vdwg.mxu0
    %2214 = vmatprep.subr.bf16.mxu0 0
    %2215 = vmatpush1.bf16.msra.mxu0 %v72
    %2216 = vmatprep.subr.bf16.mxu0 0
    %2217 = vmatpush1.bf16.msra.mxu0 %v73
    %2218 = vmatprep.subr.bf16.mxu0 0
    %2219 = vmatpush1.bf16.msra.mxu0 0
    %2220 = vmatprep.subr.bf16.mxu0 0
    %2221 = vmatpush1.bf16.msra.mxu0 0
    %2222 = vmatprep.subr.bf16.mxu0 0
    %2223 = vmatpush1.bf16.msra.mxu0 0
    %2224 = vmatprep.subr.bf16.mxu0 0
    %2225 = vmatpush1.bf16.msra.mxu0 0
    %2226 = vmatprep.subr.bf16.mxu0 0
    %2227 = vmatpush1.bf16.msra.mxu0 0
    %2228 = vmatprep.subr.bf16.mxu0 0
    %2229 = vmatpush1.bf16.msra.mxu0 0
    %2230 = vmatprep.subr.bf16.mxu0 0
    %2231 = vmatpush1.bf16.msra.mxu0 0
    %2232 = vmatprep.subr.bf16.mxu0 0
    %2233 = vmatpush1.bf16.msra.mxu0 0
    %2234 = vmatprep.subr.bf16.mxu0 0
    %2235 = vmatpush1.bf16.msra.mxu0 0
    %2236 = vmatprep.subr.bf16.mxu0 0
    %2237 = vmatpush1.bf16.msra.mxu0 0
    %2238 = vmatprep.subr.bf16.mxu0 0
    %2239 = vmatpush1.bf16.msra.mxu0 0
    %2240 = vmatprep.subr.bf16.mxu0 0
    %2241 = vmatpush1.bf16.msra.mxu0 0
    %2242 = vmatprep.subr.bf16.mxu0 0
    %2243 = vmatpush1.bf16.msra.mxu0 0
    %2244 = vmatprep.subr.bf16.mxu0 0
    %2245 = vmatpush1.bf16.msra.mxu0 0
    %2246 = vmatprep.mubr.bf16.mxu0 0
    %2247 = vmatmul.mubr.bf16.gmra.mrb[0].mxu0 %v2107
    %v2248 = vpop.f32.mrb[0].mxu0
    %v2249 = vadd.f32 0.0, %v2248
    %v2250 = vpop.f32.mrb[0].mxu0
    %v2251 = vpop.f32.mrb[0].mxu0
    %v2252 = vpop.f32.mrb[0].mxu0
    %2253 = vdwg.mxu0
    %v2254 = vadd.f32 %v2209, %v2249
    %v2255 = vadd.f32 %v2254, %v86
    %v2256 = vsel %vm244, %v2255, -inf
    %2257 = vmax.xlane.f32.xlu0 %v2256
    %v2258 = vpop.xlane.xlu0 %2257
    %v2259 = vsub.f32 %v2255, %v2258
    %v2260 = vmul.f32 %v2259, 1.442695
    %v2261 = vpow.pop %v2260
    %v2262 = vsel %vm244, %v2261, 0.0
    %2263 = vadd.xlane.f32.xlu0 %v2262
    %v2264 = vpop.xlane.xlu0 %2263
    %v2265 = vrcp.pop %v2264
    %v2266 = vmul.f32 %v2261, %v2265
    %v2267 = vpack.c.bf16 %v2266, %v2266
    %2269 = vrot.lane.b32.xlu0 %v2267, 32
    %v2270 = vpop.permute.xlu0 %2269
    %v2272 = vsel %vm260, %v2270, 0
    %2274 = vmatprep.subr.bf16.mxu0 0
    %2275 = vmatpush1.bf16.msra.mxu0 %v145
    %2276 = vmatprep.subr.bf16.mxu0 0
    %2277 = vmatpush1.bf16.msra.mxu0 0
    %2278 = vmatprep.subr.bf16.mxu0 0
    %2279 = vmatpush1.bf16.msra.mxu0 0
    %2280 = vmatprep.subr.bf16.mxu0 0
    %2281 = vmatpush1.bf16.msra.mxu0 0
    %2282 = vmatprep.subr.bf16.mxu0 0
    %2283 = vmatpush1.bf16.msra.mxu0 0
    %2284 = vmatprep.subr.bf16.mxu0 0
    %2285 = vmatpush1.bf16.msra.mxu0 0
    %2286 = vmatprep.subr.bf16.mxu0 0
    %2287 = vmatpush1.bf16.msra.mxu0 0
    %2288 = vmatprep.subr.bf16.mxu0 0
    %2289 = vmatpush1.bf16.msra.mxu0 0
    %2290 = vmatprep.subr.bf16.mxu0 0
    %2291 = vmatpush1.bf16.msra.mxu0 0
    %2292 = vmatprep.subr.bf16.mxu0 0
    %2293 = vmatpush1.bf16.msra.mxu0 0
    %2294 = vmatprep.subr.bf16.mxu0 0
    %2295 = vmatpush1.bf16.msra.mxu0 0
    %2296 = vmatprep.subr.bf16.mxu0 0
    %2297 = vmatpush1.bf16.msra.mxu0 0
    %2298 = vmatprep.subr.bf16.mxu0 0
    %2299 = vmatpush1.bf16.msra.mxu0 0
    %2300 = vmatprep.subr.bf16.mxu0 0
    %2301 = vmatpush1.bf16.msra.mxu0 0
    %2302 = vmatprep.subr.bf16.mxu0 0
    %2303 = vmatpush1.bf16.msra.mxu0 0
    %2304 = vmatprep.subr.bf16.mxu0 0
    %2305 = vmatpush1.bf16.msra.mxu0 0
    %2306 = vmatprep.mubr.bf16.mxu0 0
    %2307 = vmatmul.mubr.bf16.gmra.mrb[0].mxu0 %v2272
    %v2308 = vpop.f32.mrb[0].mxu0
    %v2309 = vadd.f32 0.0, %v2308
    %v2310 = vpop.f32.mrb[0].mxu0
    %v2311 = vpop.f32.mrb[0].mxu0
    %v2312 = vpop.f32.mrb[0].mxu0
    %2313 = vdwg.mxu0
    %v2314 = vadd.f32 %v2209, %v2309
    %v2315 = vadd.f32 %v2314, %v87
    %v2316 = vmax.f32 %v2315, 0.0
    %v2317 = vpack.c.bf16 %v2316, %v2316
    %v2319 = vsel %vm100, %v2317, 0
    %2321 = vmatprep.subr.bf16.mxu0 0
    %2322 = vmatpush1.bf16.msra.mxu0 %v78
    %2323 = vmatprep.subr.bf16.mxu0 0
    %2324 = vmatpush1.bf16.msra.mxu0 %v79
    %2325 = vmatprep.subr.bf16.mxu0 0
    %2326 = vmatpush1.bf16.msra.mxu0 0
    %2327 = vmatprep.subr.bf16.mxu0 0
    %2328 = vmatpush1.bf16.msra.mxu0 0
    %2329 = vmatprep.subr.bf16.mxu0 0
    %2330 = vmatpush1.bf16.msra.mxu0 0
    %2331 = vmatprep.subr.bf16.mxu0 0
    %2332 = vmatpush1.bf16.msra.mxu0 0
    %2333 = vmatprep.subr.bf16.mxu0 0
    %2334 = vmatpush1.bf16.msra.mxu0 0
    %2335 = vmatprep.subr.bf16.mxu0 0
    %2336 = vmatpush1.bf16.msra.mxu0 0
    %2337 = vmatprep.subr.bf16.mxu0 0
    %2338 = vmatpush1.bf16.msra.mxu0 0
    %2339 = vmatprep.subr.bf16.mxu0 0
    %2340 = vmatpush1.bf16.msra.mxu0 0
    %2341 = vmatprep.subr.bf16.mxu0 0
    %2342 = vmatpush1.bf16.msra.mxu0 0
    %2343 = vmatprep.subr.bf16.mxu0 0
    %2344 = vmatpush1.bf16.msra.mxu0 0
    %2345 = vmatprep.subr.bf16.mxu0 0
    %2346 = vmatpush1.bf16.msra.mxu0 0
    %2347 = vmatprep.subr.bf16.mxu0 0
    %2348 = vmatpush1.bf16.msra.mxu0 0
    %2349 = vmatprep.subr.bf16.mxu0 0
    %2350 = vmatpush1.bf16.msra.mxu0 0
    %2351 = vmatprep.subr.bf16.mxu0 0
    %2352 = vmatpush1.bf16.msra.mxu0 0
    %2353 = vmatprep.mubr.bf16.mxu0 0
    %2354 = vmatmul.mubr.bf16.gmra.mrb[0].mxu0 %v2319
    %v2355 = vpop.f32.mrb[0].mxu0
    %v2356 = vadd.f32 %v88, %v2355
    %v2357 = vpop.f32.mrb[0].mxu0
    %v2358 = vpop.f32.mrb[0].mxu0
    %v2359 = vpop.f32.mrb[0].mxu0
    %2360 = vdwg.mxu0
    %v2361 = vadd.f32 %v2249, %v89
    %v2362 = vadd.f32 %v2356, %v2361
    %v2363 = vxor.u32 %v2362, 2147483648
    %v2364 = vmul.f32 %v2363, 1.442695
    %v2365 = vpow.pop %v2364
    %v2366 = vadd.f32 %v2365, 1.0
    %v2367 = vrcp.pop %v2366
    %v2368 = vmul.f32 1.0, %v2367
    %2370 = vrot.lane.b32.xlu0 %v2361, 64
    %v2371 = vpop.permute.xlu0 %2370
    %v2373 = vmul.f32 %v2368, %v2371
    %2375 = vrot.lane.b32.xlu0 %v2373, 64
    %v2376 = vpop.permute.xlu0 %2375
    %v2378 = vadd.f32 %v2356, %v2376
    %v2379 = vtanh.pop %v2378
    %v2380 = vsub.f32 1.0, %v2368
    %2382 = vrot.lane.b32.xlu0 %v2379, 96
    %v2383 = vpop.permute.xlu0 %2382
    %v2385 = vmul.f32 %v2380, %v2383
    %v2386 = vmul.f32 %v2368, %v2101
    %v2387 = vadd.f32 %v2385, %v2386
    %v2388 = vpack.c.bf16 %v2387, %v2387
    %2390 = vrot.lane.b32.xlu0 %v2388, 96
    %v2391 = vpop.permute.xlu0 %2390
    %v2393 = vsel %vm100, %v2391, 0
    %2395 = vmatprep.subr.bf16.mxu0 0
    %2396 = vmatpush1.bf16.msra.mxu0 %v84
    %2397 = vmatprep.subr.bf16.mxu0 0
    %2398 = vmatpush1.bf16.msra.mxu0 %v85
    %2399 = vmatprep.subr.bf16.mxu0 0
    %2400 = vmatpush1.bf16.msra.mxu0 0
    %2401 = vmatprep.subr.bf16.mxu0 0
    %2402 = vmatpush1.bf16.msra.mxu0 0
    %2403 = vmatprep.subr.bf16.mxu0 0
    %2404 = vmatpush1.bf16.msra.mxu0 0
    %2405 = vmatprep.subr.bf16.mxu0 0
    %2406 = vmatpush1.bf16.msra.mxu0 0
    %2407 = vmatprep.subr.bf16.mxu0 0
    %2408 = vmatpush1.bf16.msra.mxu0 0
    %2409 = vmatprep.subr.bf16.mxu0 0
    %2410 = vmatpush1.bf16.msra.mxu0 0
    %2411 = vmatprep.subr.bf16.mxu0 0
    %2412 = vmatpush1.bf16.msra.mxu0 0
    %2413 = vmatprep.subr.bf16.mxu0 0
    %2414 = vmatpush1.bf16.msra.mxu0 0
    %2415 = vmatprep.subr.bf16.mxu0 0
    %2416 = vmatpush1.bf16.msra.mxu0 0
    %2417 = vmatprep.subr.bf16.mxu0 0
    %2418 = vmatpush1.bf16.msra.mxu0 0
    %2419 = vmatprep.subr.bf16.mxu0 0
    %2420 = vmatpush1.bf16.msra.mxu0 0
    %2421 = vmatprep.subr.bf16.mxu0 0
    %2422 = vmatpush1.bf16.msra.mxu0 0
    %2423 = vmatprep.subr.bf16.mxu0 0
    %2424 = vmatpush1.bf16.msra.mxu0 0
    %2425 = vmatprep.subr.bf16.mxu0 0
    %2426 = vmatpush1.bf16.msra.mxu0 0
    %2427 = vmatprep.mubr.bf16.mxu0 0
    %2428 = vmatmul.mubr.bf16.gmra.mrb[0].mxu0 %v2393
    %v2429 = vpop.f32.mrb[0].mxu0
    %v2430 = vadd.f32 %v90, %v2429
    %v2431 = vpop.f32.mrb[0].mxu0
    %v2432 = vpop.f32.mrb[0].mxu0
    %v2433 = vpop.f32.mrb[0].mxu0
    %2434 = vdwg.mxu0
    %v2435 = vsel %vm244, %v2430, -inf
    %2436 = vmax.xlane.f32.xlu0 %v2435
    %v2437 = vpop.xlane.xlu0 %2436
    %v2438 = vsub.f32 %v2430, %v2437
    %v2439 = vmul.f32 %v2438, 1.442695
    %v2440 = vpow.pop %v2439
    %v2441 = vsel %vm244, %v2440, 0.0
    %2442 = vadd.xlane.f32.xlu0 %v2441
    %v2443 = vpop.xlane.xlu0 %2442
    %v2444 = vlog2.pop %v2443
    %v2445 = vmul.f32 %v2444, 0.6931472
    %v2446 = vsub.f32 %v2438, %v2445
    %2447 = vst [vmem:[#allocation9 + $0x7] sm:$0x1] %v2446
    %2448 = vst [vmem:[#allocation10 + $0x7] sm:$0x1] %v2266
    %2450 = vrot.lane.b32.xlu0 %v2387, 96
    %v2451 = vpop.permute.xlu0 %2450
    %vm2453 = vcmask 253952
    %2454 = vst.msk [vmem:[#allocation12] sm:$0x1] %vm2453, %v2451
    // Predicated region
    $region30: #{tpu_custom_call.1} parent=1 // pred_check
      _
    $region31: #{tpu_custom_call.1} parent=1 // pred_check_branch
      %2456 = sbr.rel (0) target = $region33
    $region32: #{tpu_custom_call.1} parent=1 // pred_region
      %s2458 = ssub.s32 128, 128
      %2459 = vsyncadd [#allocation4], %s2458
      %s2461 = sshll.u32 [#allocation9], 4
      %s2462 = int_to_ptr.vmem [resolvable:$true] %s2461
      %2464 = dma.vmem_to_hbm [thread:$0]  %s2462, 128, %s4, [#allocation4]
    $region33: #{tpu_custom_call.1} parent=1 // pred_fallthru
      _
    // Predicated region
    $region34: #{tpu_custom_call.1} parent=1 // pred_check
      _
    $region35: #{tpu_custom_call.1} parent=1 // pred_check_branch
      %2466 = sbr.rel (0) target = $region37
    $region36: #{tpu_custom_call.1} parent=1 // pred_region
      %s2468 = ssub.s32 128, 128
      %2469 = vsyncadd [#allocation11], %s2468
      %s2471 = sshll.u32 [#allocation10], 4
      %s2472 = int_to_ptr.vmem [resolvable:$true] %s2471
      %2474 = dma.vmem_to_hbm [thread:$0]  %s2472, 128, %s5, [#allocation11]
    $region37: #{tpu_custom_call.1} parent=1 // pred_fallthru
      _
    // Predicated region
    $region38: #{tpu_custom_call.1} parent=1 // pred_check
      _
    $region39: #{tpu_custom_call.1} parent=1 // pred_check_branch
      %2476 = sbr.rel (0) target = $region41
    $region40: #{tpu_custom_call.1} parent=1 // pred_region
      %s2478 = ssub.s32 16, 16
      %2479 = vsyncadd [#allocation11], %s2478
      %s2481 = sshll.u32 [#allocation12], 4
      %s2482 = int_to_ptr.vmem [resolvable:$true] %s2481
      %2484 = dma.vmem_to_hbm [thread:$0]  %s2482, 16, %s6, [#allocation11]
    $region41: #{tpu_custom_call.1} parent=1 // pred_fallthru
      _
    // Predicated region
    $region42: #{tpu_custom_call.1} parent=1 // pred_check
      _
    $region43: #{tpu_custom_call.1} parent=1 // pred_check_branch
      %2486 = sbr.rel (0) target = $region45
    $region44: #{tpu_custom_call.1} parent=1 // pred_region
      %2487 = dma.done [#allocation4], 128
    $region45: #{tpu_custom_call.1} parent=1 // pred_fallthru
      _
    // Predicated region
    $region46: #{tpu_custom_call.1} parent=1 // pred_check
      _
    $region47: #{tpu_custom_call.1} parent=1 // pred_check_branch
      %2489 = sbr.rel (0) target = $region49
    $region48: #{tpu_custom_call.1} parent=1 // pred_region
      %2490 = dma.done [#allocation11], 128
    $region49: #{tpu_custom_call.1} parent=1 // pred_fallthru
      _
    // Predicated region
    $region50: #{tpu_custom_call.1} parent=1 // pred_check
      _
    $region51: #{tpu_custom_call.1} parent=1 // pred_check_branch
      %2492 = sbr.rel (0) target = $region53
    $region52: #{tpu_custom_call.1} parent=1 // pred_region
      %2493 = dma.done [#allocation11], 16
    $region53: #{tpu_custom_call.1} parent=1 // pred_fallthru
      _
    %2494 = vsyncpa [#allocation3], 1
    %2495 = vsyncpa [#allocation8], 1
    %2496 = vsyncpa [#allocation4], 1
    %2497 = vsyncpa [#allocation11], 1
    %2498 = vsyncpa [#allocation5], 1

</llo_original>
